<compile_context>
chip_gen: v7x
topology: tpu7x:2x2x1
jax: 0.10.0
libtpu: 0.0.40
codegen_flags: <defaults>
</compile_context>

<pallas_src>
import jax
import jax.numpy as jnp
from jax.experimental import pallas as pl
from jax.experimental.pallas import tpu as pltpu


def _round_up(n, m):
    return (n + m - 1) // m * m


def _tpu_generation_defaults():
    """Pick vmem_limit / M-tile target from the physical VMEM size.

    v5e / v6e: 128 MiB VMEM -> big M tiles amortize per-step overhead.
    v7x (64 MiB) or unknown: stay conservative.
    """
    vmem_phys = None
    try:
        info = pltpu.get_tpu_info()
        for name in ("vmem_capacity_bytes", "vmem_bytes", "vmem_size_bytes"):
            v = getattr(info, name, None)
            if v:
                vmem_phys = int(v)
                break
    except Exception:
        pass
    if vmem_phys is None or vmem_phys <= 64 * 2**20:
        return 40 * 2**20, 1024
    return 80 * 2**20, 2048


_VMEM_LIMIT, _TM_TARGET = _tpu_generation_defaults()


def _mm_params():
    return pltpu.CompilerParams(dimension_semantics=("parallel",),
                                vmem_limit_bytes=_VMEM_LIMIT)


def _tiling(m, target):
    """Choose (tm, padded_m, n_steps).

    Prefers >= 2 grid steps (v7x 2-TC sharding), 16-row alignment (bf16 sublane
    pack) and tm dividing m (avoids the pad + out[:m] copies).
    """
    if m < 32:
        tm = _round_up(m, 16)
        return tm, tm, 1
    nt = max(2, pl.cdiv(m, target))
    tm = _round_up(pl.cdiv(m, nt), 16)
    nt = pl.cdiv(m, tm)
    return tm, nt * tm, nt


# --------------------------------------------------------------------------
# Pallas kernels
# --------------------------------------------------------------------------
def _conv_bn_relu_kernel(p_ref, w_ref, shift_ref, o_ref):
    # p_ref: (TM, K) bf16 patches; w_ref: (K, Cp) bf16 (BN scale folded);
    # shift_ref: (1, Cp) f32; o_ref: (TM, Cp) bf16.
    acc = jnp.dot(p_ref[...], w_ref[...], preferred_element_type=jnp.float32)
    o_ref[...] = jnp.maximum(acc + shift_ref[...], 0.0).astype(o_ref.dtype)


def _conv_bn_relu_fc_kernel(p_ref, w_ref, shift_ref, wfc_ref, bfc_ref,
                            o_ref, z_ref):
    # Fused conv3x3+BN+ReLU followed by a 1x1 conv (fc) on the resident tile.
    acc = jnp.dot(p_ref[...], w_ref[...], preferred_element_type=jnp.float32)
    y = jnp.maximum(acc + shift_ref[...], 0.0)
    o_ref[...] = y.astype(o_ref.dtype)
    z = jnp.dot(y.astype(jnp.bfloat16), wfc_ref[...],
                preferred_element_type=jnp.float32)
    z_ref[...] = (z + bfc_ref[...]).astype(z_ref.dtype)


def _conv_bn_relu_fc_only_kernel(p_ref, w_ref, shift_ref, wfc_ref, bfc_ref,
                                 z_ref):
    # conv4 variant: the conv activation is dead downstream, so it is never
    # written back to HBM -- only the fused fc output is stored.
    acc = jnp.dot(p_ref[...], w_ref[...], preferred_element_type=jnp.float32)
    y = jnp.maximum(acc + shift_ref[...], 0.0)
    z = jnp.dot(y.astype(jnp.bfloat16), wfc_ref[...],
                preferred_element_type=jnp.float32)
    z_ref[...] = (z + bfc_ref[...]).astype(z_ref.dtype)


def _maxpool_fc_kernel(p00_ref, p01_ref, p10_ref, p11_ref, wfc_ref, bfc_ref,
                       c1_ref, z_ref):
    # MaxPool2d(3, 2, 1) via even/odd phase arrays, separable form, with fc1
    # fused on the resident pooled tile.
    #   pXY[b, i, j, c] = padded_input[b, 2i+X, 2j+Y, c]
    # NOTE: zero spatial padding is only a valid -inf substitute because the
    # inputs are post-ReLU (>= 0); keep that invariant.
    _, Ho, Wo, Cp = c1_ref.shape
    # column max of 3 (even rows / odd rows separately)
    ce = jnp.maximum(jnp.maximum(p00_ref[:, :, :Wo, :], p01_ref[:, :, :Wo, :]),
                     p00_ref[:, :, 1:Wo + 1, :])
    co = jnp.maximum(jnp.maximum(p10_ref[:, :, :Wo, :], p11_ref[:, :, :Wo, :]),
                     p10_ref[:, :, 1:Wo + 1, :])
    # row max of 3
    m = jnp.maximum(jnp.maximum(ce[:, :Ho, :, :], co[:, :Ho, :, :]),
                    ce[:, 1:Ho + 1, :, :])
    c1_ref[...] = m
    # fused fc1: (Ho*Wo, Cp) @ (Cp, Ep) + bias on the resident pooled tile.
    y = m.reshape(Ho * Wo, Cp)
    z = jnp.dot(y, wfc_ref[...], preferred_element_type=jnp.float32)
    z = (z + bfc_ref[...]).astype(z_ref.dtype)
    z_ref[...] = z.reshape(1, Ho * Wo, z_ref.shape[-1])


# --------------------------------------------------------------------------
# Tiled pallas_call wrappers
# --------------------------------------------------------------------------
def _conv_pallas(patches, w_mat, shift, fc_w=None, fc_b=None, *, emit_conv=True):
    m, k = patches.shape
    cp = w_mat.shape[1]
    tm, mp, nsteps = _tiling(m, _TM_TARGET)
    if mp != m:
        patches = jnp.pad(patches, ((0, mp - m), (0, 0)))
    grid = (nsteps,)
    row_in = pl.BlockSpec((tm, k), lambda i: (i, 0))
    w_spec = pl.BlockSpec(w_mat.shape, lambda i: (0, 0))
    s_spec = pl.BlockSpec(shift.shape, lambda i: (0, 0))

    if fc_w is None:
        out = pl.pallas_call(
            _conv_bn_relu_kernel,
            out_shape=jax.ShapeDtypeStruct((mp, cp), jnp.bfloat16),
            grid=grid,
            in_specs=[row_in, w_spec, s_spec],
            out_specs=pl.BlockSpec((tm, cp), lambda i: (i, 0)),
            compiler_params=_mm_params(),
        )(patches, w_mat, shift)
        return out[:m]

    ep = fc_w.shape[1]
    fcw_spec = pl.BlockSpec(fc_w.shape, lambda i: (0, 0))
    fcb_spec = pl.BlockSpec(fc_b.shape, lambda i: (0, 0))

    if emit_conv:
        y, z = pl.pallas_call(
            _conv_bn_relu_fc_kernel,
            out_shape=(jax.ShapeDtypeStruct((mp, cp), jnp.bfloat16),
                       jax.ShapeDtypeStruct((mp, ep), jnp.bfloat16)),
            grid=grid,
            in_specs=[row_in, w_spec, s_spec, fcw_spec, fcb_spec],
            out_specs=(pl.BlockSpec((tm, cp), lambda i: (i, 0)),
                       pl.BlockSpec((tm, ep), lambda i: (i, 0))),
            compiler_params=_mm_params(),
        )(patches, w_mat, shift, fc_w, fc_b)
        return y[:m], z[:m]

    z = pl.pallas_call(
        _conv_bn_relu_fc_only_kernel,
        out_shape=jax.ShapeDtypeStruct((mp, ep), jnp.bfloat16),
        grid=grid,
        in_specs=[row_in, w_spec, s_spec, fcw_spec, fcb_spec],
        out_specs=pl.BlockSpec((tm, ep), lambda i: (i, 0)),
        compiler_params=_mm_params(),
    )(patches, w_mat, shift, fc_w, fc_b)
    return z[:m]


# --------------------------------------------------------------------------
# Layer wrappers (glue: im2col / reshape / pad; compute happens in kernels)
# --------------------------------------------------------------------------
def _im2col(x, stride, cin_pad):
    # x: (B, H, W, C) bf16; 3x3 kernel, padding=1.  Channels are sliced /
    # padded to cin_pad = round_up(Cin, 16) (stored 128-wide pads are zeros,
    # so slicing to cin_pad >= Cin is exact).
    B, H, W, C = x.shape
    if C > cin_pad:
        x = x[..., :cin_pad]
    elif C < cin_pad:
        x = jnp.pad(x, ((0, 0), (0, 0), (0, 0), (0, cin_pad - C)))
    Ho = (H + 2 - 3) // stride + 1
    Wo = (W + 2 - 3) // stride + 1
    xp = jnp.pad(x, ((0, 0), (1, 1), (1, 1), (0, 0)))
    cols = []
    for dy in range(3):
        for dx in range(3):
            cols.append(xp[:, dy:dy + stride * (Ho - 1) + 1:stride,
                           dx:dx + stride * (Wo - 1) + 1:stride, :])
    patches = jnp.concatenate(cols, axis=-1).reshape(B * Ho * Wo, 9 * cin_pad)
    return patches, (B, Ho, Wo)


def conv3x3_bn_relu(x, w_mat, shift, stride):
    cin_pad = w_mat.shape[0] // 9
    patches, (B, Ho, Wo) = _im2col(x, stride, cin_pad)
    out = _conv_pallas(patches, w_mat, shift)
    return out.reshape(B, Ho, Wo, w_mat.shape[1])


def conv3x3_bn_relu_fc(x, w_mat, shift, fc_w, fc_b, stride):
    cin_pad = w_mat.shape[0] // 9
    patches, (B, Ho, Wo) = _im2col(x, stride, cin_pad)
    y, z = _conv_pallas(patches, w_mat, shift, fc_w, fc_b, emit_conv=True)
    return (y.reshape(B, Ho, Wo, w_mat.shape[1]),
            z.reshape(B, Ho, Wo, fc_w.shape[1]))


def conv3x3_bn_relu_fc_only(x, w_mat, shift, fc_w, fc_b, stride):
    cin_pad = w_mat.shape[0] // 9
    patches, (B, Ho, Wo) = _im2col(x, stride, cin_pad)
    z = _conv_pallas(patches, w_mat, shift, fc_w, fc_b, emit_conv=False)
    return z.reshape(B, Ho, Wo, fc_w.shape[1])


def maxpool3x3_s2_fc1(x, fc_w, fc_b):
    """MaxPool2d(3, 2, 1) on lane-dense (B, H, W, Cpad) with fused fc1.

    Returns (c1 pooled bf16 (B, Ho, Wo, Cpad), c1fc bf16 (B, Ho*Wo, Ep)).
    """
    B, H, W, Cp = x.shape
    Ho = (H - 1) // 2 + 1
    Wo = (W - 1) // 2 + 1
    Hp = 2 * (Ho + 1)
    Wp = 2 * (Wo + 1)
    # Inputs are post-ReLU (>= 0), so zero spatial padding is equivalent to -inf.
    xp = jnp.pad(x, ((0, 0), (1, Hp - 1 - H), (1, Wp - 1 - W), (0, 0)))
    xr = xp.reshape(B, Ho + 1, 2, Wo + 1, 2, Cp)
    p00 = xr[:, :, 0, :, 0, :]
    p01 = xr[:, :, 0, :, 1, :]
    p10 = xr[:, :, 1, :, 0, :]
    p11 = xr[:, :, 1, :, 1, :]
    ep = fc_w.shape[1]
    in_spec = pl.BlockSpec((1, Ho + 1, Wo + 1, Cp), lambda b: (b, 0, 0, 0))
    c1, c1fc = pl.pallas_call(
        _maxpool_fc_kernel,
        out_shape=(jax.ShapeDtypeStruct((B, Ho, Wo, Cp), x.dtype),
                   jax.ShapeDtypeStruct((B, Ho * Wo, ep), jnp.bfloat16)),
        grid=(B,),
        in_specs=[in_spec, in_spec, in_spec, in_spec,
                  pl.BlockSpec(fc_w.shape, lambda b: (0, 0)),
                  pl.BlockSpec(fc_b.shape, lambda b: (0, 0))],
        out_specs=(pl.BlockSpec((1, Ho, Wo, Cp), lambda b: (b, 0, 0, 0)),
                   pl.BlockSpec((1, Ho * Wo, ep), lambda b: (b, 0, 0))),
        compiler_params=_mm_params(),
    )(p00, p01, p10, p11, fc_w, fc_b)
    return c1, c1fc


# --------------------------------------------------------------------------
# Parameter construction (deterministic, matches PyTorch __init__ shapes)
# --------------------------------------------------------------------------
def _bn_fold(c, eps=1e-5):
    # SyncBatchNorm in inference mode folds to y = x*scale + shift.
    # (Cross-device stat sync has no single-device equivalent; folded affine used.)
    gamma = jnp.linspace(0.9, 1.1, c, dtype=jnp.float32)
    beta = jnp.linspace(-0.05, 0.05, c, dtype=jnp.float32)
    mean = jnp.linspace(-0.1, 0.1, c, dtype=jnp.float32)
    var = jnp.linspace(0.9, 1.1, c, dtype=jnp.float32)
    scale = gamma * jax.lax.rsqrt(var + eps)
    shift = beta - mean * scale
    return scale, shift


def make_params(inplanes, embed_dim, key):
    ks = jax.random.split(key, 10)
    p = {}
    p['stem1_w'] = 0.1 * jax.random.normal(ks[0], (inplanes, 3, 3, 3), jnp.float32)
    p['stem2_w'] = 0.1 * jax.random.normal(ks[1], (inplanes, inplanes, 3, 3), jnp.float32)
    p['stem3_w'] = 0.1 * jax.random.normal(ks[2], (inplanes, inplanes, 3, 3), jnp.float32)
    p['stem1_scale'], p['stem1_shift'] = _bn_fold(inplanes)
    p['stem2_scale'], p['stem2_shift'] = _bn_fold(inplanes)
    p['stem3_scale'], p['stem3_shift'] = _bn_fold(inplanes)
    p['conv2_w'] = 0.1 * jax.random.normal(ks[3], (2 * inplanes, inplanes, 3, 3), jnp.float32)
    p['conv2_scale'], p['conv2_shift'] = _bn_fold(2 * inplanes)
    p['conv3_w'] = 0.1 * jax.random.normal(ks[4], (4 * inplanes, 2 * inplanes, 3, 3), jnp.float32)
    p['conv3_scale'], p['conv3_shift'] = _bn_fold(4 * inplanes)
    p['conv4_w'] = 0.1 * jax.random.normal(ks[5], (4 * inplanes, 4 * inplanes, 3, 3), jnp.float32)
    p['conv4_scale'], p['conv4_shift'] = _bn_fold(4 * inplanes)
    p['fc1_w'] = 0.1 * jax.random.normal(ks[6], (embed_dim, inplanes, 1, 1), jnp.float32)
    p['fc2_w'] = 0.1 * jax.random.normal(ks[7], (embed_dim, 2 * inplanes, 1, 1), jnp.float32)
    p['fc3_w'] = 0.1 * jax.random.normal(ks[8], (embed_dim, 4 * inplanes, 1, 1), jnp.float32)
    p['fc4_w'] = 0.1 * jax.random.normal(ks[9], (embed_dim, 4 * inplanes, 1, 1), jnp.float32)
    p['fc1_b'] = jnp.linspace(-0.1, 0.1, embed_dim, dtype=jnp.float32)
    p['fc2_b'] = jnp.linspace(-0.2, 0.2, embed_dim, dtype=jnp.float32)
    p['fc3_b'] = jnp.linspace(-0.3, 0.3, embed_dim, dtype=jnp.float32)
    p['fc4_b'] = jnp.linspace(-0.4, 0.4, embed_dim, dtype=jnp.float32)
    return p


def _prep_conv(w_oihw, scale, shift, cin_pad, cout_pad):
    # PyTorch (Cout,Cin,kh,kw) -> (kh,kw,Cin,Cout), fold BN scale,
    # zero-pad Cin to cin_pad (16-aligned K side) and Cout to cout_pad
    # (128-lane-dense N side), flatten to (9*cin_pad, cout_pad) bf16.
    cout, cin, kh, kw = w_oihw.shape
    w = jnp.transpose(w_oihw, (2, 3, 1, 0)) * scale.reshape(1, 1, 1, cout)
    w = jnp.pad(w, ((0, 0), (0, 0), (0, cin_pad - cin), (0, cout_pad - cout)))
    w_mat = w.reshape(kh * kw * cin_pad, cout_pad).astype(jnp.bfloat16)
    shift_p = jnp.pad(shift, (0, cout_pad - cout)).reshape(1, cout_pad).astype(jnp.float32)
    return w_mat, shift_p


def _prep_fc(w_oihw, b, cin_pad, eout_pad):
    # fc inputs are the resident (128-padded) conv/pool tiles, so cin_pad here
    # is the stored channel pad (zero rows multiply exact-zero pad channels).
    cout, cin = w_oihw.shape[0], w_oihw.shape[1]
    w = jnp.transpose(w_oihw.reshape(cout, cin), (1, 0))
    w = jnp.pad(w, ((0, cin_pad - cin), (0, eout_pad - cout))).astype(jnp.bfloat16)
    b_p = jnp.pad(b, (0, eout_pad - cout)).reshape(1, eout_pad).astype(jnp.float32)
    return w, b_p


def prepare_params(p, inplanes, embed_dim):
    """One-time prep of kernel-ready (folded / padded / bf16) weights."""
    # Output (lane) pads: 128 for lane-dense stores.
    cp1 = _round_up(inplanes, 128)
    cp2 = _round_up(2 * inplanes, 128)
    cp4 = _round_up(4 * inplanes, 128)
    ep = _round_up(embed_dim, 128)
    # K-side (im2col) pads: 16-aligned only (bf16 sublane pack), NOT 128.
    k3 = _round_up(3, 16)
    k1 = _round_up(inplanes, 16)
    k2 = _round_up(2 * inplanes, 16)
    k4 = _round_up(4 * inplanes, 16)
    q = {}
    q['stem1_w'], q['stem1_shift'] = _prep_conv(p['stem1_w'], p['stem1_scale'], p['stem1_shift'], k3, cp1)
    q['stem2_w'], q['stem2_shift'] = _prep_conv(p['stem2_w'], p['stem2_scale'], p['stem2_shift'], k1, cp1)
    q['stem3_w'], q['stem3_shift'] = _prep_conv(p['stem3_w'], p['stem3_scale'], p['stem3_shift'], k1, cp1)
    q['conv2_w'], q['conv2_shift'] = _prep_conv(p['conv2_w'], p['conv2_scale'], p['conv2_shift'], k1, cp2)
    q['conv3_w'], q['conv3_shift'] = _prep_conv(p['conv3_w'], p['conv3_scale'], p['conv3_shift'], k2, cp4)
    q['conv4_w'], q['conv4_shift'] = _prep_conv(p['conv4_w'], p['conv4_scale'], p['conv4_shift'], k4, cp4)
    q['fc1_w'], q['fc1_b'] = _prep_fc(p['fc1_w'], p['fc1_b'], cp1, ep)
    q['fc2_w'], q['fc2_b'] = _prep_fc(p['fc2_w'], p['fc2_b'], cp2, ep)
    q['fc3_w'], q['fc3_b'] = _prep_fc(p['fc3_w'], p['fc3_b'], cp4, ep)
    q['fc4_w'], q['fc4_b'] = _prep_fc(p['fc4_w'], p['fc4_b'], cp4, ep)
    return q


# --------------------------------------------------------------------------
# Forward pass (mirrors SpatialPriorModule.forward)
# --------------------------------------------------------------------------
def spatial_prior_module(x_nchw, pp, *, embed_dim):
    bs = x_nchw.shape[0]
    # bf16 cast BEFORE the layout transpose (half the transpose bytes).
    x = jnp.transpose(x_nchw.astype(jnp.bfloat16), (0, 2, 3, 1))   # NCHW -> NHWC

    h = conv3x3_bn_relu(x, pp['stem1_w'], pp['stem1_shift'], stride=2)
    h = conv3x3_bn_relu(h, pp['stem2_w'], pp['stem2_shift'], stride=1)
    h = conv3x3_bn_relu(h, pp['stem3_w'], pp['stem3_shift'], stride=1)
    c1, c1fc = maxpool3x3_s2_fc1(h, pp['fc1_w'], pp['fc1_b'])       # fc1 fused

    c2, c2fc = conv3x3_bn_relu_fc(c1, pp['conv2_w'], pp['conv2_shift'],
                                  pp['fc2_w'], pp['fc2_b'], stride=2)
    c3, c3fc = conv3x3_bn_relu_fc(c2, pp['conv3_w'], pp['conv3_shift'],
                                  pp['fc3_w'], pp['fc3_b'], stride=2)
    c4fc = conv3x3_bn_relu_fc_only(c3, pp['conv4_w'], pp['conv4_shift'],
                                   pp['fc4_w'], pp['fc4_b'], stride=2)

    hc1, wc1 = c1.shape[1], c1.shape[2]
    c1_out = jnp.transpose(
        c1fc[..., :embed_dim].reshape(bs, hc1, wc1, embed_dim), (0, 3, 1, 2))
    c2_out = c2fc[..., :embed_dim].reshape(bs, -1, embed_dim)
    c3_out = c3fc[..., :embed_dim].reshape(bs, -1, embed_dim)
    c4_out = c4fc[..., :embed_dim].reshape(bs, -1, embed_dim)
    return c1_out, c2_out, c3_out, c4_out


# --------------------------------------------------------------------------
if __name__ == "__main__":
    INPLANES = 8
    EMBED_DIM = 32
    B, H, W = 2, 32, 32

    key = jax.random.PRNGKey(0)
    kx, kp = jax.random.split(key)
    x = jax.random.normal(kx, (B, 3, H, W), dtype=jnp.float32)
    params = make_params(INPLANES, EMBED_DIM, kp)
    prepped = prepare_params(params, INPLANES, EMBED_DIM)

    fwd = jax.jit(spatial_prior_module, static_argnames=("embed_dim",))
    c1, c2, c3, c4 = fwd(x, prepped, embed_dim=EMBED_DIM)
    jax.block_until_ready((c1, c2, c3, c4))

    assert c1.shape == (B, EMBED_DIM, H // 4, W // 4)
    assert c2.shape == (B, (H // 8) * (W // 8), EMBED_DIM)
    assert c3.shape == (B, (H // 16) * (W // 16), EMBED_DIM)
    assert c4.shape == (B, (H // 32) * (W // 32), EMBED_DIM)
    assert bool(jnp.all(jnp.isfinite(c1.astype(jnp.float32))))
    assert bool(jnp.all(jnp.isfinite(c4.astype(jnp.float32))))
    print("KERNEL_OK")
</pallas_src>

<mosaic_0001>
module attributes {stable_mosaic.version = 11 : i64} {
  func.func @_conv_bn_relu_kernel(%arg0: i32, %arg1: memref<256x144xbf16, #tpu.memory_space<vmem>>, %arg2: memref<144x128xbf16, #tpu.memory_space<vmem>>, %arg3: memref<1x128xf32, #tpu.memory_space<vmem>>, %arg4: memref<256x128xbf16, #tpu.memory_space<vmem>>) attributes {dimension_semantics = [#tpu.dimension_semantics<parallel>], iteration_bounds = array<i64: 2>, scalar_prefetch = 0 : i64, scratch_operands = 0 : i64, tpu.core_type = #tpu.core_type<tc>, window_params = [{transform_indices = @transform_0, window_bounds = array<i64: 256, 144>}, {pipeline_mode = #tpu.pipeline_mode<synchronous>, transform_indices = @transform_1, window_bounds = array<i64: 144, 128>}, {pipeline_mode = #tpu.pipeline_mode<synchronous>, transform_indices = @transform_2, window_bounds = array<i64: 1, 128>}, {transform_indices = @transform_3, window_bounds = array<i64: 256, 128>}]} {
    %c0 = arith.constant 0 : index
    %c0_0 = arith.constant 0 : index
    %0 = vector.load %arg1[%c0, %c0_0] : memref<256x144xbf16, #tpu.memory_space<vmem>>, vector<256x144xbf16>
    %c0_1 = arith.constant 0 : index
    %c0_2 = arith.constant 0 : index
    %1 = vector.load %arg2[%c0_1, %c0_2] : memref<144x128xbf16, #tpu.memory_space<vmem>>, vector<144x128xbf16>
    %cst = arith.constant dense<0.000000e+00> : vector<256x128xf32>
    %2 = tpu.matmul %0, %1, %cst {dimension_numbers = #tpu.dot_dimension_numbers<[1], [0], [0], [1], [0, 0, 1, 1], [], []>} : vector<256x144xbf16>, vector<144x128xbf16>, vector<256x128xf32> -> vector<256x128xf32>
    %c0_3 = arith.constant 0 : index
    %c0_4 = arith.constant 0 : index
    %3 = vector.load %arg3[%c0_3, %c0_4] : memref<1x128xf32, #tpu.memory_space<vmem>>, vector<1x128xf32>
    %4 = vector.broadcast %3 : vector<1x128xf32> to vector<256x128xf32>
    %5 = arith.addf %2, %4 : vector<256x128xf32>
    %cst_5 = arith.constant 0.000000e+00 : f32
    %6 = vector.broadcast %cst_5 : f32 to vector<256x128xf32>
    %7 = arith.maximumf %5, %6 : vector<256x128xf32>
    %8 = arith.truncf %7 : vector<256x128xf32> to vector<256x128xbf16>
    %c0_6 = arith.constant 0 : index
    %c0_7 = arith.constant 0 : index
    %9 = vector.load %arg4[%c0_6, %c0_7] : memref<256x128xbf16, #tpu.memory_space<vmem>>, vector<256x128xbf16>
    tpu.vector_store %arg4[%c0_6, %c0_7], %8 {strides = array<i32>} : memref<256x128xbf16, #tpu.memory_space<vmem>>, vector<256x128xbf16>,
    return
  }
  func.func @transform_0(%arg0: i32) -> (i32, i32) {
    %c0_i32 = arith.constant 0 : i32
    %c0_i32_0 = arith.constant 0 : i32
    return %arg0, %c0_i32 : i32, i32
  }
  func.func @transform_1(%arg0: i32) -> (i32, i32) {
    %c0_i32 = arith.constant 0 : i32
    %c0_i32_0 = arith.constant 0 : i32
    %c0_i32_1 = arith.constant 0 : i32
    return %c0_i32, %c0_i32_0 : i32, i32
  }
  func.func @transform_2(%arg0: i32) -> (i32, i32) {
    %c0_i32 = arith.constant 0 : i32
    %c0_i32_0 = arith.constant 0 : i32
    %c0_i32_1 = arith.constant 0 : i32
    return %c0_i32, %c0_i32_0 : i32, i32
  }
  func.func @transform_3(%arg0: i32) -> (i32, i32) {
    %c0_i32 = arith.constant 0 : i32
    %c0_i32_0 = arith.constant 0 : i32
    return %arg0, %c0_i32 : i32, i32
  }
}

module attributes {stable_mosaic.version = 11 : i64} {
  func.func @_maxpool_fc_kernel(%arg0: i32, %arg1: memref<1x9x9x128xbf16, #tpu.memory_space<vmem>>, %arg2: memref<1x9x9x128xbf16, #tpu.memory_space<vmem>>, %arg3: memref<1x9x9x128xbf16, #tpu.memory_space<vmem>>, %arg4: memref<1x9x9x128xbf16, #tpu.memory_space<vmem>>, %arg5: memref<128x128xbf16, #tpu.memory_space<vmem>>, %arg6: memref<1x128xf32, #tpu.memory_space<vmem>>, %arg7: memref<1x8x8x128xbf16, #tpu.memory_space<vmem>>, %arg8: memref<1x64x128xbf16, #tpu.memory_space<vmem>>) attributes {dimension_semantics = [#tpu.dimension_semantics<parallel>], iteration_bounds = array<i64: 2>, scalar_prefetch = 0 : i64, scratch_operands = 0 : i64, tpu.core_type = #tpu.core_type<tc>, window_params = [{transform_indices = @transform_0, window_bounds = array<i64: 1, 9, 9, 128>}, {transform_indices = @transform_1, window_bounds = array<i64: 1, 9, 9, 128>}, {transform_indices = @transform_2, window_bounds = array<i64: 1, 9, 9, 128>}, {transform_indices = @transform_3, window_bounds = array<i64: 1, 9, 9, 128>}, {pipeline_mode = #tpu.pipeline_mode<synchronous>, transform_indices = @transform_4, window_bounds = array<i64: 128, 128>}, {pipeline_mode = #tpu.pipeline_mode<synchronous>, transform_indices = @transform_5, window_bounds = array<i64: 1, 128>}, {transform_indices = @transform_6, window_bounds = array<i64: 1, 8, 8, 128>}, {transform_indices = @transform_7, window_bounds = array<i64: 1, 64, 128>}]} {
    %c0 = arith.constant 0 : index
    %c0_0 = arith.constant 0 : index
    %c0_1 = arith.constant 0 : index
    %c0_2 = arith.constant 0 : index
    %0 = vector.load %arg1[%c0, %c0_0, %c0_1, %c0_2] : memref<1x9x9x128xbf16, #tpu.memory_space<vmem>>, vector<1x9x8x128xbf16>
    %c0_3 = arith.constant 0 : index
    %c0_4 = arith.constant 0 : index
    %c0_5 = arith.constant 0 : index
    %c0_6 = arith.constant 0 : index
    %1 = vector.load %arg2[%c0_3, %c0_4, %c0_5, %c0_6] : memref<1x9x9x128xbf16, #tpu.memory_space<vmem>>, vector<1x9x8x128xbf16>
    %2 = arith.maximumf %0, %1 : vector<1x9x8x128xbf16>
    %c0_7 = arith.constant 0 : index
    %c0_8 = arith.constant 0 : index
    %c1 = arith.constant 1 : index
    %c0_9 = arith.constant 0 : index
    %3 = vector.load %arg1[%c0_7, %c0_8, %c1, %c0_9] : memref<1x9x9x128xbf16, #tpu.memory_space<vmem>>, vector<1x9x8x128xbf16>
    %4 = arith.maximumf %2, %3 : vector<1x9x8x128xbf16>
    %c0_10 = arith.constant 0 : index
    %c0_11 = arith.constant 0 : index
    %c0_12 = arith.constant 0 : index
    %c0_13 = arith.constant 0 : index
    %5 = vector.load %arg3[%c0_10, %c0_11, %c0_12, %c0_13] : memref<1x9x9x128xbf16, #tpu.memory_space<vmem>>, vector<1x9x8x128xbf16>
    %c0_14 = arith.constant 0 : index
    %c0_15 = arith.constant 0 : index
    %c0_16 = arith.constant 0 : index
    %c0_17 = arith.constant 0 : index
    %6 = vector.load %arg4[%c0_14, %c0_15, %c0_16, %c0_17] : memref<1x9x9x128xbf16, #tpu.memory_space<vmem>>, vector<1x9x8x128xbf16>
    %7 = arith.maximumf %5, %6 : vector<1x9x8x128xbf16>
    %c0_18 = arith.constant 0 : index
    %c0_19 = arith.constant 0 : index
    %c1_20 = arith.constant 1 : index
    %c0_21 = arith.constant 0 : index
    %8 = vector.load %arg3[%c0_18, %c0_19, %c1_20, %c0_21] : memref<1x9x9x128xbf16, #tpu.memory_space<vmem>>, vector<1x9x8x128xbf16>
    %9 = arith.maximumf %7, %8 : vector<1x9x8x128xbf16>
    %10 = vector.extract_strided_slice %4 {offsets = [0, 0, 0, 0], sizes = [1, 8, 8, 128], strides = [1, 1, 1, 1]} : vector<1x9x8x128xbf16> to vector<1x8x8x128xbf16>
    %11 = vector.extract_strided_slice %9 {offsets = [0, 0, 0, 0], sizes = [1, 8, 8, 128], strides = [1, 1, 1, 1]} : vector<1x9x8x128xbf16> to vector<1x8x8x128xbf16>
    %12 = arith.maximumf %10, %11 : vector<1x8x8x128xbf16>
    %13 = vector.extract_strided_slice %4 {offsets = [0, 1, 0, 0], sizes = [1, 8, 8, 128], strides = [1, 1, 1, 1]} : vector<1x9x8x128xbf16> to vector<1x8x8x128xbf16>
    %14 = arith.maximumf %12, %13 : vector<1x8x8x128xbf16>
    %c0_22 = arith.constant 0 : index
    %c0_23 = arith.constant 0 : index
    %c0_24 = arith.constant 0 : index
    %c0_25 = arith.constant 0 : index
    %15 = vector.load %arg7[%c0_22, %c0_23, %c0_24, %c0_25] : memref<1x8x8x128xbf16, #tpu.memory_space<vmem>>, vector<1x8x8x128xbf16>
    tpu.vector_store %arg7[%c0_22, %c0_23, %c0_24, %c0_25], %14 {strides = array<i32>} : memref<1x8x8x128xbf16, #tpu.memory_space<vmem>>, vector<1x8x8x128xbf16>,
    %16 = vector.shape_cast %14 : vector<1x8x8x128xbf16> to vector<64x128xbf16>
    %c0_26 = arith.constant 0 : index
    %c0_27 = arith.constant 0 : index
    %17 = vector.load %arg5[%c0_26, %c0_27] : memref<128x128xbf16, #tpu.memory_space<vmem>>, vector<128x128xbf16>
    %cst = arith.constant dense<0.000000e+00> : vector<64x128xf32>
    %18 = tpu.matmul %16, %17, %cst {dimension_numbers = #tpu.dot_dimension_numbers<[1], [0], [0], [1], [0, 0, 1, 1], [], []>} : vector<64x128xbf16>, vector<128x128xbf16>, vector<64x128xf32> -> vector<64x128xf32>
    %c0_28 = arith.constant 0 : index
    %c0_29 = arith.constant 0 : index
    %19 = vector.load %arg6[%c0_28, %c0_29] : memref<1x128xf32, #tpu.memory_space<vmem>>, vector<1x128xf32>
    %20 = vector.broadcast %19 : vector<1x128xf32> to vector<64x128xf32>
    %21 = arith.addf %18, %20 : vector<64x128xf32>
    %22 = arith.truncf %21 : vector<64x128xf32> to vector<64x128xbf16>
    %23 = vector.shape_cast %22 : vector<64x128xbf16> to vector<1x64x128xbf16>
    %c0_30 = arith.constant 0 : index
    %c0_31 = arith.constant 0 : index
    %c0_32 = arith.constant 0 : index
    %24 = vector.load %arg8[%c0_30, %c0_31, %c0_32] : memref<1x64x128xbf16, #tpu.memory_space<vmem>>, vector<1x64x128xbf16>
    tpu.vector_store %arg8[%c0_30, %c0_31, %c0_32], %23 {strides = array<i32>} : memref<1x64x128xbf16, #tpu.memory_space<vmem>>, vector<1x64x128xbf16>,
    return
  }
  func.func @transform_0(%arg0: i32) -> (i32, i32, i32, i32) {
    %c0_i32 = arith.constant 0 : i32
    %c0_i32_0 = arith.constant 0 : i32
    %c0_i32_1 = arith.constant 0 : i32
    %c0_i32_2 = arith.constant 0 : i32
    return %arg0, %c0_i32, %c0_i32_0, %c0_i32_1 : i32, i32, i32, i32
  }
  func.func @transform_1(%arg0: i32) -> (i32, i32, i32, i32) {
    %c0_i32 = arith.constant 0 : i32
    %c0_i32_0 = arith.constant 0 : i32
    %c0_i32_1 = arith.constant 0 : i32
    %c0_i32_2 = arith.constant 0 : i32
    return %arg0, %c0_i32, %c0_i32_0, %c0_i32_1 : i32, i32, i32, i32
  }
  func.func @transform_2(%arg0: i32) -> (i32, i32, i32, i32) {
    %c0_i32 = arith.constant 0 : i32
    %c0_i32_0 = arith.constant 0 : i32
    %c0_i32_1 = arith.constant 0 : i32
    %c0_i32_2 = arith.constant 0 : i32
    return %arg0, %c0_i32, %c0_i32_0, %c0_i32_1 : i32, i32, i32, i32
  }
  func.func @transform_3(%arg0: i32) -> (i32, i32, i32, i32) {
    %c0_i32 = arith.constant 0 : i32
    %c0_i32_0 = arith.constant 0 : i32
    %c0_i32_1 = arith.constant 0 : i32
    %c0_i32_2 = arith.constant 0 : i32
    return %arg0, %c0_i32, %c0_i32_0, %c0_i32_1 : i32, i32, i32, i32
  }
  func.func @transform_4(%arg0: i32) -> (i32, i32) {
    %c0_i32 = arith.constant 0 : i32
    %c0_i32_0 = arith.constant 0 : i32
    %c0_i32_1 = arith.constant 0 : i32
    return %c0_i32, %c0_i32_0 : i32, i32
  }
  func.func @transform_5(%arg0: i32) -> (i32, i32) {
    %c0_i32 = arith.constant 0 : i32
    %c0_i32_0 = arith.constant 0 : i32
    %c0_i32_1 = arith.constant 0 : i32
    return %c0_i32, %c0_i32_0 : i32, i32
  }
  func.func @transform_6(%arg0: i32) -> (i32, i32, i32, i32) {
    %c0_i32 = arith.constant 0 : i32
    %c0_i32_0 = arith.constant 0 : i32
    %c0_i32_1 = arith.constant 0 : i32
    %c0_i32_2 = arith.constant 0 : i32
    return %arg0, %c0_i32, %c0_i32_0, %c0_i32_1 : i32, i32, i32, i32
  }
  func.func @transform_7(%arg0: i32) -> (i32, i32, i32) {
    %c0_i32 = arith.constant 0 : i32
    %c0_i32_0 = arith.constant 0 : i32
    %c0_i32_1 = arith.constant 0 : i32
    return %arg0, %c0_i32, %c0_i32_0 : i32, i32, i32
  }
}

module attributes {stable_mosaic.version = 11 : i64} {
  func.func @_conv_bn_relu_fc_kernel(%arg0: i32, %arg1: memref<16x144xbf16, #tpu.memory_space<vmem>>, %arg2: memref<144x128xbf16, #tpu.memory_space<vmem>>, %arg3: memref<1x128xf32, #tpu.memory_space<vmem>>, %arg4: memref<128x128xbf16, #tpu.memory_space<vmem>>, %arg5: memref<1x128xf32, #tpu.memory_space<vmem>>, %arg6: memref<16x128xbf16, #tpu.memory_space<vmem>>, %arg7: memref<16x128xbf16, #tpu.memory_space<vmem>>) attributes {dimension_semantics = [#tpu.dimension_semantics<parallel>], iteration_bounds = array<i64: 2>, scalar_prefetch = 0 : i64, scratch_operands = 0 : i64, tpu.core_type = #tpu.core_type<tc>, window_params = [{transform_indices = @transform_0, window_bounds = array<i64: 16, 144>}, {pipeline_mode = #tpu.pipeline_mode<synchronous>, transform_indices = @transform_1, window_bounds = array<i64: 144, 128>}, {pipeline_mode = #tpu.pipeline_mode<synchronous>, transform_indices = @transform_2, window_bounds = array<i64: 1, 128>}, {pipeline_mode = #tpu.pipeline_mode<synchronous>, transform_indices = @transform_3, window_bounds = array<i64: 128, 128>}, {pipeline_mode = #tpu.pipeline_mode<synchronous>, transform_indices = @transform_4, window_bounds = array<i64: 1, 128>}, {transform_indices = @transform_5, window_bounds = array<i64: 16, 128>}, {transform_indices = @transform_6, window_bounds = array<i64: 16, 128>}]} {
    %c0 = arith.constant 0 : index
    %c0_0 = arith.constant 0 : index
    %0 = vector.load %arg1[%c0, %c0_0] : memref<16x144xbf16, #tpu.memory_space<vmem>>, vector<16x144xbf16>
    %c0_1 = arith.constant 0 : index
    %c0_2 = arith.constant 0 : index
    %1 = vector.load %arg2[%c0_1, %c0_2] : memref<144x128xbf16, #tpu.memory_space<vmem>>, vector<144x128xbf16>
    %cst = arith.constant dense<0.000000e+00> : vector<16x128xf32>
    %2 = tpu.matmul %0, %1, %cst {dimension_numbers = #tpu.dot_dimension_numbers<[1], [0], [0], [1], [0, 0, 1, 1], [], []>} : vector<16x144xbf16>, vector<144x128xbf16>, vector<16x128xf32> -> vector<16x128xf32>
    %c0_3 = arith.constant 0 : index
    %c0_4 = arith.constant 0 : index
    %3 = vector.load %arg3[%c0_3, %c0_4] : memref<1x128xf32, #tpu.memory_space<vmem>>, vector<1x128xf32>
    %4 = vector.broadcast %3 : vector<1x128xf32> to vector<16x128xf32>
    %5 = arith.addf %2, %4 : vector<16x128xf32>
    %cst_5 = arith.constant 0.000000e+00 : f32
    %6 = vector.broadcast %cst_5 : f32 to vector<16x128xf32>
    %7 = arith.maximumf %5, %6 : vector<16x128xf32>
    %8 = arith.truncf %7 : vector<16x128xf32> to vector<16x128xbf16>
    %c0_6 = arith.constant 0 : index
    %c0_7 = arith.constant 0 : index
    %9 = vector.load %arg6[%c0_6, %c0_7] : memref<16x128xbf16, #tpu.memory_space<vmem>>, vector<16x128xbf16>
    tpu.vector_store %arg6[%c0_6, %c0_7], %8 {strides = array<i32>} : memref<16x128xbf16, #tpu.memory_space<vmem>>, vector<16x128xbf16>,
    %10 = arith.truncf %7 : vector<16x128xf32> to vector<16x128xbf16>
    %c0_8 = arith.constant 0 : index
    %c0_9 = arith.constant 0 : index
    %11 = vector.load %arg4[%c0_8, %c0_9] : memref<128x128xbf16, #tpu.memory_space<vmem>>, vector<128x128xbf16>
    %cst_10 = arith.constant dense<0.000000e+00> : vector<16x128xf32>
    %12 = tpu.matmul %10, %11, %cst_10 {dimension_numbers = #tpu.dot_dimension_numbers<[1], [0], [0], [1], [0, 0, 1, 1], [], []>} : vector<16x128xbf16>, vector<128x128xbf16>, vector<16x128xf32> -> vector<16x128xf32>
    %c0_11 = arith.constant 0 : index
    %c0_12 = arith.constant 0 : index
    %13 = vector.load %arg5[%c0_11, %c0_12] : memref<1x128xf32, #tpu.memory_space<vmem>>, vector<1x128xf32>
    %14 = vector.broadcast %13 : vector<1x128xf32> to vector<16x128xf32>
    %15 = arith.addf %12, %14 : vector<16x128xf32>
    %16 = arith.truncf %15 : vector<16x128xf32> to vector<16x128xbf16>
    %c0_13 = arith.constant 0 : index
    %c0_14 = arith.constant 0 : index
    %17 = vector.load %arg7[%c0_13, %c0_14] : memref<16x128xbf16, #tpu.memory_space<vmem>>, vector<16x128xbf16>
    tpu.vector_store %arg7[%c0_13, %c0_14], %16 {strides = array<i32>} : memref<16x128xbf16, #tpu.memory_space<vmem>>, vector<16x128xbf16>,
    return
  }
  func.func @transform_0(%arg0: i32) -> (i32, i32) {
    %c0_i32 = arith.constant 0 : i32
    %c0_i32_0 = arith.constant 0 : i32
    return %arg0, %c0_i32 : i32, i32
  }
  func.func @transform_1(%arg0: i32) -> (i32, i32) {
    %c0_i32 = arith.constant 0 : i32
    %c0_i32_0 = arith.constant 0 : i32
    %c0_i32_1 = arith.constant 0 : i32
    return %c0_i32, %c0_i32_0 : i32, i32
  }
  func.func @transform_2(%arg0: i32) -> (i32, i32) {
    %c0_i32 = arith.constant 0 : i32
    %c0_i32_0 = arith.constant 0 : i32
    %c0_i32_1 = arith.constant 0 : i32
    return %c0_i32, %c0_i32_0 : i32, i32
  }
  func.func @transform_3(%arg0: i32) -> (i32, i32) {
    %c0_i32 = arith.constant 0 : i32
    %c0_i32_0 = arith.constant 0 : i32
    %c0_i32_1 = arith.constant 0 : i32
    return %c0_i32, %c0_i32_0 : i32, i32
  }
  func.func @transform_4(%arg0: i32) -> (i32, i32) {
    %c0_i32 = arith.constant 0 : i32
    %c0_i32_0 = arith.constant 0 : i32
    %c0_i32_1 = arith.constant 0 : i32
    return %c0_i32, %c0_i32_0 : i32, i32
  }
  func.func @transform_5(%arg0: i32) -> (i32, i32) {
    %c0_i32 = arith.constant 0 : i32
    %c0_i32_0 = arith.constant 0 : i32
    return %arg0, %c0_i32 : i32, i32
  }
  func.func @transform_6(%arg0: i32) -> (i32, i32) {
    %c0_i32 = arith.constant 0 : i32
    %c0_i32_0 = arith.constant 0 : i32
    return %arg0, %c0_i32 : i32, i32
  }
}

module attributes {stable_mosaic.version = 11 : i64} {
  func.func @_conv_bn_relu_fc_kernel(%arg0: i32, %arg1: memref<16x144xbf16, #tpu.memory_space<vmem>>, %arg2: memref<144x128xbf16, #tpu.memory_space<vmem>>, %arg3: memref<1x128xf32, #tpu.memory_space<vmem>>, %arg4: memref<128x128xbf16, #tpu.memory_space<vmem>>, %arg5: memref<1x128xf32, #tpu.memory_space<vmem>>, %arg6: memref<16x128xbf16, #tpu.memory_space<vmem>>, %arg7: memref<16x128xbf16, #tpu.memory_space<vmem>>) attributes {dimension_semantics = [#tpu.dimension_semantics<parallel>], iteration_bounds = array<i64: 1>, scalar_prefetch = 0 : i64, scratch_operands = 0 : i64, tpu.core_type = #tpu.core_type<tc>, window_params = [{transform_indices = @transform_0, window_bounds = array<i64: 16, 144>}, {pipeline_mode = #tpu.pipeline_mode<synchronous>, transform_indices = @transform_1, window_bounds = array<i64: 144, 128>}, {pipeline_mode = #tpu.pipeline_mode<synchronous>, transform_indices = @transform_2, window_bounds = array<i64: 1, 128>}, {pipeline_mode = #tpu.pipeline_mode<synchronous>, transform_indices = @transform_3, window_bounds = array<i64: 128, 128>}, {pipeline_mode = #tpu.pipeline_mode<synchronous>, transform_indices = @transform_4, window_bounds = array<i64: 1, 128>}, {transform_indices = @transform_5, window_bounds = array<i64: 16, 128>}, {transform_indices = @transform_6, window_bounds = array<i64: 16, 128>}]} {
    %c0 = arith.constant 0 : index
    %c0_0 = arith.constant 0 : index
    %0 = vector.load %arg1[%c0, %c0_0] : memref<16x144xbf16, #tpu.memory_space<vmem>>, vector<16x144xbf16>
    %c0_1 = arith.constant 0 : index
    %c0_2 = arith.constant 0 : index
    %1 = vector.load %arg2[%c0_1, %c0_2] : memref<144x128xbf16, #tpu.memory_space<vmem>>, vector<144x128xbf16>
    %cst = arith.constant dense<0.000000e+00> : vector<16x128xf32>
    %2 = tpu.matmul %0, %1, %cst {dimension_numbers = #tpu.dot_dimension_numbers<[1], [0], [0], [1], [0, 0, 1, 1], [], []>} : vector<16x144xbf16>, vector<144x128xbf16>, vector<16x128xf32> -> vector<16x128xf32>
    %c0_3 = arith.constant 0 : index
    %c0_4 = arith.constant 0 : index
    %3 = vector.load %arg3[%c0_3, %c0_4] : memref<1x128xf32, #tpu.memory_space<vmem>>, vector<1x128xf32>
    %4 = vector.broadcast %3 : vector<1x128xf32> to vector<16x128xf32>
    %5 = arith.addf %2, %4 : vector<16x128xf32>
    %cst_5 = arith.constant 0.000000e+00 : f32
    %6 = vector.broadcast %cst_5 : f32 to vector<16x128xf32>
    %7 = arith.maximumf %5, %6 : vector<16x128xf32>
    %8 = arith.truncf %7 : vector<16x128xf32> to vector<16x128xbf16>
    %c0_6 = arith.constant 0 : index
    %c0_7 = arith.constant 0 : index
    %9 = vector.load %arg6[%c0_6, %c0_7] : memref<16x128xbf16, #tpu.memory_space<vmem>>, vector<16x128xbf16>
    tpu.vector_store %arg6[%c0_6, %c0_7], %8 {strides = array<i32>} : memref<16x128xbf16, #tpu.memory_space<vmem>>, vector<16x128xbf16>,
    %10 = arith.truncf %7 : vector<16x128xf32> to vector<16x128xbf16>
    %c0_8 = arith.constant 0 : index
    %c0_9 = arith.constant 0 : index
    %11 = vector.load %arg4[%c0_8, %c0_9] : memref<128x128xbf16, #tpu.memory_space<vmem>>, vector<128x128xbf16>
    %cst_10 = arith.constant dense<0.000000e+00> : vector<16x128xf32>
    %12 = tpu.matmul %10, %11, %cst_10 {dimension_numbers = #tpu.dot_dimension_numbers<[1], [0], [0], [1], [0, 0, 1, 1], [], []>} : vector<16x128xbf16>, vector<128x128xbf16>, vector<16x128xf32> -> vector<16x128xf32>
    %c0_11 = arith.constant 0 : index
    %c0_12 = arith.constant 0 : index
    %13 = vector.load %arg5[%c0_11, %c0_12] : memref<1x128xf32, #tpu.memory_space<vmem>>, vector<1x128xf32>
    %14 = vector.broadcast %13 : vector<1x128xf32> to vector<16x128xf32>
    %15 = arith.addf %12, %14 : vector<16x128xf32>
    %16 = arith.truncf %15 : vector<16x128xf32> to vector<16x128xbf16>
    %c0_13 = arith.constant 0 : index
    %c0_14 = arith.constant 0 : index
    %17 = vector.load %arg7[%c0_13, %c0_14] : memref<16x128xbf16, #tpu.memory_space<vmem>>, vector<16x128xbf16>
    tpu.vector_store %arg7[%c0_13, %c0_14], %16 {strides = array<i32>} : memref<16x128xbf16, #tpu.memory_space<vmem>>, vector<16x128xbf16>,
    return
  }
  func.func @transform_0(%arg0: i32) -> (i32, i32) {
    %c0_i32 = arith.constant 0 : i32
    %c0_i32_0 = arith.constant 0 : i32
    return %arg0, %c0_i32 : i32, i32
  }
  func.func @transform_1(%arg0: i32) -> (i32, i32) {
    %c0_i32 = arith.constant 0 : i32
    %c0_i32_0 = arith.constant 0 : i32
    %c0_i32_1 = arith.constant 0 : i32
    return %c0_i32, %c0_i32_0 : i32, i32
  }
  func.func @transform_2(%arg0: i32) -> (i32, i32) {
    %c0_i32 = arith.constant 0 : i32
    %c0_i32_0 = arith.constant 0 : i32
    %c0_i32_1 = arith.constant 0 : i32
    return %c0_i32, %c0_i32_0 : i32, i32
  }
  func.func @transform_3(%arg0: i32) -> (i32, i32) {
    %c0_i32 = arith.constant 0 : i32
    %c0_i32_0 = arith.constant 0 : i32
    %c0_i32_1 = arith.constant 0 : i32
    return %c0_i32, %c0_i32_0 : i32, i32
  }
  func.func @transform_4(%arg0: i32) -> (i32, i32) {
    %c0_i32 = arith.constant 0 : i32
    %c0_i32_0 = arith.constant 0 : i32
    %c0_i32_1 = arith.constant 0 : i32
    return %c0_i32, %c0_i32_0 : i32, i32
  }
  func.func @transform_5(%arg0: i32) -> (i32, i32) {
    %c0_i32 = arith.constant 0 : i32
    %c0_i32_0 = arith.constant 0 : i32
    return %arg0, %c0_i32 : i32, i32
  }
  func.func @transform_6(%arg0: i32) -> (i32, i32) {
    %c0_i32 = arith.constant 0 : i32
    %c0_i32_0 = arith.constant 0 : i32
    return %arg0, %c0_i32 : i32, i32
  }
}

module attributes {stable_mosaic.version = 11 : i64} {
  func.func @_conv_bn_relu_fc_only_kernel(%arg0: i32, %arg1: memref<16x288xbf16, #tpu.memory_space<vmem>>, %arg2: memref<288x128xbf16, #tpu.memory_space<vmem>>, %arg3: memref<1x128xf32, #tpu.memory_space<vmem>>, %arg4: memref<128x128xbf16, #tpu.memory_space<vmem>>, %arg5: memref<1x128xf32, #tpu.memory_space<vmem>>, %arg6: memref<16x128xbf16, #tpu.memory_space<vmem>>) attributes {dimension_semantics = [#tpu.dimension_semantics<parallel>], iteration_bounds = array<i64: 1>, scalar_prefetch = 0 : i64, scratch_operands = 0 : i64, tpu.core_type = #tpu.core_type<tc>, window_params = [{transform_indices = @transform_0, window_bounds = array<i64: 16, 288>}, {pipeline_mode = #tpu.pipeline_mode<synchronous>, transform_indices = @transform_1, window_bounds = array<i64: 288, 128>}, {pipeline_mode = #tpu.pipeline_mode<synchronous>, transform_indices = @transform_2, window_bounds = array<i64: 1, 128>}, {pipeline_mode = #tpu.pipeline_mode<synchronous>, transform_indices = @transform_3, window_bounds = array<i64: 128, 128>}, {pipeline_mode = #tpu.pipeline_mode<synchronous>, transform_indices = @transform_4, window_bounds = array<i64: 1, 128>}, {transform_indices = @transform_5, window_bounds = array<i64: 16, 128>}]} {
    %c0 = arith.constant 0 : index
    %c0_0 = arith.constant 0 : index
    %0 = vector.load %arg1[%c0, %c0_0] : memref<16x288xbf16, #tpu.memory_space<vmem>>, vector<16x288xbf16>
    %c0_1 = arith.constant 0 : index
    %c0_2 = arith.constant 0 : index
    %1 = vector.load %arg2[%c0_1, %c0_2] : memref<288x128xbf16, #tpu.memory_space<vmem>>, vector<288x128xbf16>
    %cst = arith.constant dense<0.000000e+00> : vector<16x128xf32>
    %2 = tpu.matmul %0, %1, %cst {dimension_numbers = #tpu.dot_dimension_numbers<[1], [0], [0], [1], [0, 0, 1, 1], [], []>} : vector<16x288xbf16>, vector<288x128xbf16>, vector<16x128xf32> -> vector<16x128xf32>
    %c0_3 = arith.constant 0 : index
    %c0_4 = arith.constant 0 : index
    %3 = vector.load %arg3[%c0_3, %c0_4] : memref<1x128xf32, #tpu.memory_space<vmem>>, vector<1x128xf32>
    %4 = vector.broadcast %3 : vector<1x128xf32> to vector<16x128xf32>
    %5 = arith.addf %2, %4 : vector<16x128xf32>
    %cst_5 = arith.constant 0.000000e+00 : f32
    %6 = vector.broadcast %cst_5 : f32 to vector<16x128xf32>
    %7 = arith.maximumf %5, %6 : vector<16x128xf32>
    %8 = arith.truncf %7 : vector<16x128xf32> to vector<16x128xbf16>
    %c0_6 = arith.constant 0 : index
    %c0_7 = arith.constant 0 : index
    %9 = vector.load %arg4[%c0_6, %c0_7] : memref<128x128xbf16, #tpu.memory_space<vmem>>, vector<128x128xbf16>
    %cst_8 = arith.constant dense<0.000000e+00> : vector<16x128xf32>
    %10 = tpu.matmul %8, %9, %cst_8 {dimension_numbers = #tpu.dot_dimension_numbers<[1], [0], [0], [1], [0, 0, 1, 1], [], []>} : vector<16x128xbf16>, vector<128x128xbf16>, vector<16x128xf32> -> vector<16x128xf32>
    %c0_9 = arith.constant 0 : index
    %c0_10 = arith.constant 0 : index
    %11 = vector.load %arg5[%c0_9, %c0_10] : memref<1x128xf32, #tpu.memory_space<vmem>>, vector<1x128xf32>
    %12 = vector.broadcast %11 : vector<1x128xf32> to vector<16x128xf32>
    %13 = arith.addf %10, %12 : vector<16x128xf32>
    %14 = arith.truncf %13 : vector<16x128xf32> to vector<16x128xbf16>
    %c0_11 = arith.constant 0 : index
    %c0_12 = arith.constant 0 : index
    %15 = vector.load %arg6[%c0_11, %c0_12] : memref<16x128xbf16, #tpu.memory_space<vmem>>, vector<16x128xbf16>
    tpu.vector_store %arg6[%c0_11, %c0_12], %14 {strides = array<i32>} : memref<16x128xbf16, #tpu.memory_space<vmem>>, vector<16x128xbf16>,
    return
  }
  func.func @transform_0(%arg0: i32) -> (i32, i32) {
    %c0_i32 = arith.constant 0 : i32
    %c0_i32_0 = arith.constant 0 : i32
    return %arg0, %c0_i32 : i32, i32
  }
  func.func @transform_1(%arg0: i32) -> (i32, i32) {
    %c0_i32 = arith.constant 0 : i32
    %c0_i32_0 = arith.constant 0 : i32
    %c0_i32_1 = arith.constant 0 : i32
    return %c0_i32, %c0_i32_0 : i32, i32
  }
  func.func @transform_2(%arg0: i32) -> (i32, i32) {
    %c0_i32 = arith.constant 0 : i32
    %c0_i32_0 = arith.constant 0 : i32
    %c0_i32_1 = arith.constant 0 : i32
    return %c0_i32, %c0_i32_0 : i32, i32
  }
  func.func @transform_3(%arg0: i32) -> (i32, i32) {
    %c0_i32 = arith.constant 0 : i32
    %c0_i32_0 = arith.constant 0 : i32
    %c0_i32_1 = arith.constant 0 : i32
    return %c0_i32, %c0_i32_0 : i32, i32
  }
  func.func @transform_4(%arg0: i32) -> (i32, i32) {
    %c0_i32 = arith.constant 0 : i32
    %c0_i32_0 = arith.constant 0 : i32
    %c0_i32_1 = arith.constant 0 : i32
    return %c0_i32, %c0_i32_0 : i32, i32
  }
  func.func @transform_5(%arg0: i32) -> (i32, i32) {
    %c0_i32 = arith.constant 0 : i32
    %c0_i32_0 = arith.constant 0 : i32
    return %arg0, %c0_i32 : i32, i32
  }
}

</mosaic_0001>

<llo_original>
// kernel: spatial_prior_module.7
$region0: #{spatial_prior_module.7}
  #allocation0 [shape = 'u32[]', space=smem, size = 0x4, offset = 0x4, fixed_abs, tag = 'smem constant byte address 0x4 - core index']
  #allocation1 [shape = 'u32[144,128]{1,0:T(1,128)}', space=vmem, size = 0x12000, scoped, tag = 'internal scratch']
  %s0 = inlined_call_operand.vmem [shape: bf16[512,144], index: 0, kind: input, shape index: {}]
  %s1 = inlined_call_operand.vmem [shape: bf16[144,128], index: 1, kind: input, shape index: {}]
  %s2 = inlined_call_operand.vmem [shape: f32[1,128], index: 2, kind: input, shape index: {}]
  %s3 = inlined_call_operand.vmem [shape: bf16[512,128], index: 3, kind: output, shape index: {}]
  %s4 = sld [smem:[#allocation0]]
  $region45: #{spatial_prior_module.7} parent=0
    _
  %s6 = ssub.s32 1, %s4
  %s7 = scalar_select 0, %s6, %s4
  loop: start=0, step=1, limit=4
  $region2: #{spatial_prior_module.7} parent=0 // loop_pre_header
    _
  $region3: #{spatial_prior_module.7} parent=0 // loop_header
    %s9 = sphi 0, %s13
    %p10 = scmp.ge.s32.totalorder %s9, 4
    %s19 = sphi 0, %s21
    %s22 = sphi 0, %s19
    %s23 = sphi 0, %s22
    %s39 = sphi 0, %s23
    %s43 = sphi 0, %s43
    %s45 = sphi 0, %s43
    %s46 = sphi 0, %s45
    %s60 = sphi 0, %s46
    %s64 = sphi 0, %s64
    %s66 = sphi 0, %s64
    %s67 = sphi 0, %s66
    %s81 = sphi 0, %s67
    %s87 = sphi 0, %s89
    %s90 = sphi 0, %s87
    %s91 = sphi 0, %s90
    %s107 = sphi 0, %s91
  $region4: #{spatial_prior_module.7} parent=0 // loop_header_branch
    %12 = sbr.rel (%p10) target = $region8
  $region5: #{spatial_prior_module.7} parent=0 // loop_body
    %s14 = ssub.s32 %s9, 1
    %s15 = ssub.s32 %s9, 2
    %s16 = sadd.s32 %s9, 1
    %s17 = ssub.s32 %s9, %s16
    %p18 = scmp.eq.s32.totalorder %s17, 0
    %s20 = sadd.s32 %s19, 1
    %s21 = scalar_select %p18, %s19, %s20
    %p24 = pneg %p18
    %p25 = scmp.eq.s32.totalorder %s9, 1
    %p26 = por %p24, %p25
    %p27 = scmp.ne.s32.totalorder %s19, %s22
    %p28 = scmp.eq.s32.totalorder %s9, 0
    %p29 = por %p27, %p28
    %p30 = scmp.ne.s32.totalorder %s19, %s22
    %p31 = scmp.eq.s32.totalorder %s14, 1
    %p32 = por %p30, %p31
    %p33 = scmp.ne.s32.totalorder %s22, %s23
    %p34 = scmp.eq.s32.totalorder %s14, 0
    %p35 = por %p33, %p34
    %p36 = scmp.ne.s32.totalorder %s22, %s23
    %p37 = scmp.eq.s32.totalorder %s15, 1
    %p38 = por %p36, %p37
    %p40 = scmp.ne.s32.totalorder %s23, %s39
    %p41 = scmp.eq.s32.totalorder %s15, 0
    %p42 = por %p40, %p41
    %s44 = sadd.s32 %s43, 1
    %p47 = scmp.eq.s32.totalorder %s9, 1
    %p48 = scmp.ne.s32.totalorder %s43, %s45
    %p49 = scmp.eq.s32.totalorder %s9, 0
    %p50 = por %p48, %p49
    %p51 = scmp.ne.s32.totalorder %s43, %s45
    %p52 = scmp.eq.s32.totalorder %s14, 1
    %p53 = por %p51, %p52
    %p54 = scmp.ne.s32.totalorder %s45, %s46
    %p55 = scmp.eq.s32.totalorder %s14, 0
    %p56 = por %p54, %p55
    %p57 = scmp.ne.s32.totalorder %s45, %s46
    %p58 = scmp.eq.s32.totalorder %s15, 1
    %p59 = por %p57, %p58
    %p61 = scmp.ne.s32.totalorder %s46, %s60
    %p62 = scmp.eq.s32.totalorder %s15, 0
    %p63 = por %p61, %p62
    %s65 = sadd.s32 %s64, 1
    %p68 = scmp.eq.s32.totalorder %s9, 1
    %p69 = scmp.ne.s32.totalorder %s64, %s66
    %p70 = scmp.eq.s32.totalorder %s9, 0
    %p71 = por %p69, %p70
    %p72 = scmp.ne.s32.totalorder %s64, %s66
    %p73 = scmp.eq.s32.totalorder %s14, 1
    %p74 = por %p72, %p73
    %p75 = scmp.ne.s32.totalorder %s66, %s67
    %p76 = scmp.eq.s32.totalorder %s14, 0
    %p77 = por %p75, %p76
    %p78 = scmp.ne.s32.totalorder %s66, %s67
    %p79 = scmp.eq.s32.totalorder %s15, 1
    %p80 = por %p78, %p79
    %p82 = scmp.ne.s32.totalorder %s67, %s81
    %p83 = scmp.eq.s32.totalorder %s15, 0
    %p84 = por %p82, %p83
    %s85 = ssub.s32 %s9, %s16
    %p86 = scmp.eq.s32.totalorder %s85, 0
    %s88 = sadd.s32 %s87, 1
    %s89 = scalar_select %p86, %s87, %s88
    %p92 = pneg %p86
    %p93 = scmp.eq.s32.totalorder %s9, 1
    %p94 = por %p92, %p93
    %p95 = scmp.ne.s32.totalorder %s87, %s90
    %p96 = scmp.eq.s32.totalorder %s9, 0
    %p97 = por %p95, %p96
    %p98 = scmp.ne.s32.totalorder %s87, %s90
    %p99 = scmp.eq.s32.totalorder %s14, 1
    %p100 = por %p98, %p99
    %p101 = scmp.ne.s32.totalorder %s90, %s91
    %p102 = scmp.eq.s32.totalorder %s14, 0
    %p103 = por %p101, %p102
    %p104 = scmp.ne.s32.totalorder %s90, %s91
    %p105 = scmp.eq.s32.totalorder %s15, 1
    %p106 = por %p104, %p105
    %p108 = scmp.ne.s32.totalorder %s91, %s107
    %p109 = scmp.eq.s32.totalorder %s15, 0
    %p110 = por %p108, %p109
    %p111 = scmp.le.s32.totalorder 1, %s9
    %p112 = scmp.lt.s32.totalorder %s9, 3
    %p113 = pnand %p111, %p112
    %p114 = pneg %p113
    // Predicated region
    $region9: #{spatial_prior_module.7} parent=5 // pred_check
      _
    $region10: #{spatial_prior_module.7} parent=5 // pred_check_branch
      %116 = sbr.rel (%p113) target = $region12
    $region11: #{spatial_prior_module.7} parent=5 // pred_region
      %s117 = ssub.s32 %s9, 1
      // Predicated region
      $region13: #{spatial_prior_module.7} parent=11 // pred_check
        %p118 = pneg %p56
      $region14: #{spatial_prior_module.7} parent=11 // pred_check_branch
        %120 = sbr.rel (%p118) target = $region16
      $region15: #{spatial_prior_module.7} parent=11 // pred_region
        _
      $region16: #{spatial_prior_module.7} parent=11 // pred_fallthru
        _
      // Predicated region
      $region17: #{spatial_prior_module.7} parent=11 // pred_check
        %p121 = pneg %p77
      $region18: #{spatial_prior_module.7} parent=11 // pred_check_branch
        %123 = sbr.rel (%p121) target = $region20
      $region19: #{spatial_prior_module.7} parent=11 // pred_region
        _
      $region20: #{spatial_prior_module.7} parent=11 // pred_fallthru
        _
    $region12: #{spatial_prior_module.7} parent=5 // pred_fallthru
      _
    %p124 = scmp.lt.s32.totalorder %s9, 2
    // Predicated region
    $region21: #{spatial_prior_module.7} parent=5 // pred_check
      %p125 = pneg %p124
    $region22: #{spatial_prior_module.7} parent=5 // pred_check_branch
      %127 = sbr.rel (%p125) target = $region24
    $region23: #{spatial_prior_module.7} parent=5 // pred_region
      // Predicated region
      $region25: #{spatial_prior_module.7} parent=23 // pred_check
        %p128 = pneg %p29
      $region26: #{spatial_prior_module.7} parent=23 // pred_check_branch
        %130 = sbr.rel (%p128) target = $region28
      $region27: #{spatial_prior_module.7} parent=23 // pred_region
        %s131 = smul.u32 32, %s9
        %p132 = scmp.lt.s32.totalorder %s131, 63
        %s133 = scalar_select %p132, %s131, 63
        %s134 = smul.addr %s133, 2
        %s135 = smul.addr %s134, 4
        %s136 = scalar_lea.vmem %s0, %s135
        %s137 = smul.u32 32, %s9
      $region28: #{spatial_prior_module.7} parent=23 // pred_fallthru
        _
    $region24: #{spatial_prior_module.7} parent=5 // pred_fallthru
      _
    %p138 = scmp.le.s32.totalorder 1, %s9
    %p139 = scmp.lt.s32.totalorder %s9, 3
    %p140 = pnand %p138, %p139
    %p141 = pneg %p140
    // Predicated region
    $region29: #{spatial_prior_module.7} parent=5 // pred_check
      _
    $region30: #{spatial_prior_module.7} parent=5 // pred_check_branch
      %143 = sbr.rel (%p140) target = $region32
    $region31: #{spatial_prior_module.7} parent=5 // pred_region
      %s144 = ssub.s32 %s9, 1
      %s145 = smul.u32 32, %s14
      %p146 = scmp.lt.s32.totalorder %s145, 63
      %s147 = scalar_select %p146, %s145, 63
      %s148 = smul.addr %s147, 2
      %s149 = smul.addr %s148, 4
      %s150 = scalar_lea.vmem %s0, %s149
      %p151 = pneg %p35
      %p152 = pneg %p32
      %p153 = pneg %p56
      %p154 = pneg %p53
      %p155 = pneg %p77
      %p156 = pneg %p74
      %p157 = pneg %p103
      %p158 = pneg %p100
      %s159 = smul.u32 32, %s14
      %p160 = scmp.lt.s32.totalorder %s159, 63
      %s161 = scalar_select %p160, %s159, 63
      %s162 = smul.addr %s161, 4
      %s163 = scalar_lea.vmem %s3, %s162
      %s164 = smul.u32 32, %s14
      %p165 = scmp.lt.s32.totalorder %s164, 63
      %s166 = scalar_select %p165, %s164, 63
      %s167 = smul.addr %s166, 2
      %s168 = smul.addr %s167, 4
      %s169 = scalar_lea.vmem %s0, %s168
      %s170 = smul.u32 32, %s14
      %s171 = smul.u32 32, %s14
      %p172 = scmp.lt.s32.totalorder %s171, 63
      %s173 = scalar_select %p172, %s171, 63
      %s174 = smul.addr %s173, 4
      %s175 = scalar_lea.vmem %s3, %s174
      %s176 = smul.u32 32, %s14
      %v178 = vld [vmem:[%s169] sm:$0xff]
      %v179 = vld [vmem:[%s169 + $0x8] sm:$0xff]
      %v180 = vld [vmem:[%s169 + $0x10] sm:$0xff]
      %v181 = vld [vmem:[%s169 + $0x18] sm:$0xff]
      %v182 = vld [vmem:[%s169 + $0x20] sm:$0xff]
      %v183 = vld [vmem:[%s169 + $0x28] sm:$0xff]
      %v184 = vld [vmem:[%s169 + $0x30] sm:$0xff]
      %v185 = vld [vmem:[%s169 + $0x38] sm:$0xff]
      %v186 = vld [vmem:[%s169 + $0x40] sm:$0xff]
      %v187 = vld [vmem:[%s169 + $0x48] sm:$0xff]
      %v188 = vld [vmem:[%s169 + $0x50] sm:$0xff]
      %v189 = vld [vmem:[%s169 + $0x58] sm:$0xff]
      %v190 = vld [vmem:[%s169 + $0x60] sm:$0xff]
      %v191 = vld [vmem:[%s169 + $0x68] sm:$0xff]
      %v192 = vld [vmem:[%s169 + $0x70] sm:$0xff]
      %v193 = vld [vmem:[%s169 + $0x78] sm:$0xff]
      %v194 = vld [vmem:[%s169 + $0x80] sm:$0xff]
      %v195 = vld [vmem:[%s169 + $0x88] sm:$0xff]
      %v196 = vld [vmem:[%s169 + $0x90] sm:$0xff]
      %v197 = vld [vmem:[%s169 + $0x98] sm:$0xff]
      %v198 = vld [vmem:[%s169 + $0xa0] sm:$0xff]
      %v199 = vld [vmem:[%s169 + $0xa8] sm:$0xff]
      %v200 = vld [vmem:[%s169 + $0xb0] sm:$0xff]
      %v201 = vld [vmem:[%s169 + $0xb8] sm:$0xff]
      %v202 = vld [vmem:[%s169 + $0xc0] sm:$0xff]
      %v203 = vld [vmem:[%s169 + $0xc8] sm:$0xff]
      %v204 = vld [vmem:[%s169 + $0xd0] sm:$0xff]
      %v205 = vld [vmem:[%s169 + $0xd8] sm:$0xff]
      %v206 = vld [vmem:[%s169 + $0xe0] sm:$0xff]
      %v207 = vld [vmem:[%s169 + $0xe8] sm:$0xff]
      %v208 = vld [vmem:[%s169 + $0xf0] sm:$0xff]
      %v209 = vld [vmem:[%s169 + $0xf8] sm:$0xff]
      %v210 = vld [vmem:[%s1] sm:$0xf]
      %v211 = vld [vmem:[%s1 + $0x4] sm:$0xf]
      %v212 = vld [vmem:[%s1 + $0x8] sm:$0xf]
      %v213 = vld [vmem:[%s1 + $0xc] sm:$0xf]
      %v214 = vld [vmem:[%s1 + $0x10] sm:$0xf]
      %v215 = vld [vmem:[%s1 + $0x14] sm:$0xf]
      %v216 = vld [vmem:[%s1 + $0x18] sm:$0xf]
      %v217 = vld [vmem:[%s1 + $0x1c] sm:$0xf]
      %v218 = vld [vmem:[%s1 + $0x20] sm:$0xf]
      %v219 = vld [vmem:[%s1 + $0x24] sm:$0xf]
      %v220 = vld [vmem:[%s1 + $0x28] sm:$0xf]
      %v221 = vld [vmem:[%s1 + $0x2c] sm:$0xf]
      %v222 = vld [vmem:[%s1 + $0x30] sm:$0xf]
      %v223 = vld [vmem:[%s1 + $0x34] sm:$0xf]
      %v224 = vld [vmem:[%s1 + $0x38] sm:$0xf]
      %v225 = vld [vmem:[%s1 + $0x3c] sm:$0xf]
      %v226 = vld [vmem:[%s1 + $0x40] sm:$0xf]
      %v227 = vld [vmem:[%s1 + $0x44] sm:$0xf]
      %v228 = vld [vmem:[%s2] sm:$0x1]
      %v230 = vlaneseq
      %v231 = vshrl.u32 %v230, 7
      %v232 = vsub.s32 0, %v231
      %v233 = vrot.slane %v228, %v232
      %v267 = vunpack.c.l.b16 %v178
      %v268 = vunpack.c.h.b16 %v178
      %v269 = vunpack.c.l.b16 %v179
      %v270 = vunpack.c.h.b16 %v179
      %v271 = vunpack.c.l.b16 %v180
      %v272 = vunpack.c.h.b16 %v180
      %v273 = vunpack.c.l.b16 %v181
      %v274 = vunpack.c.h.b16 %v181
      %v275 = vunpack.c.l.b16 %v182
      %v276 = vunpack.c.h.b16 %v182
      %v277 = vunpack.c.l.b16 %v183
      %v278 = vunpack.c.h.b16 %v183
      %v279 = vunpack.c.l.b16 %v184
      %v280 = vunpack.c.h.b16 %v184
      %v281 = vunpack.c.l.b16 %v185
      %v282 = vunpack.c.h.b16 %v185
      %v283 = vunpack.c.l.b16 %v186
      %v284 = vunpack.c.h.b16 %v186
      %v285 = vunpack.c.l.b16 %v187
      %v286 = vunpack.c.h.b16 %v187
      %v287 = vunpack.c.l.b16 %v188
      %v288 = vunpack.c.h.b16 %v188
      %v289 = vunpack.c.l.b16 %v189
      %v290 = vunpack.c.h.b16 %v189
      %v291 = vunpack.c.l.b16 %v190
      %v292 = vunpack.c.h.b16 %v190
      %v293 = vunpack.c.l.b16 %v191
      %v294 = vunpack.c.h.b16 %v191
      %v295 = vunpack.c.l.b16 %v192
      %v296 = vunpack.c.h.b16 %v192
      %v297 = vunpack.c.l.b16 %v193
      %v298 = vunpack.c.h.b16 %v193
      %v299 = vunpack.c.l.b16 %v194
      %v300 = vunpack.c.h.b16 %v194
      %v301 = vunpack.c.l.b16 %v195
      %v302 = vunpack.c.h.b16 %v195
      %v303 = vunpack.c.l.b16 %v196
      %v304 = vunpack.c.h.b16 %v196
      %v305 = vunpack.c.l.b16 %v197
      %v306 = vunpack.c.h.b16 %v197
      %v307 = vunpack.c.l.b16 %v198
      %v308 = vunpack.c.h.b16 %v198
      %v309 = vunpack.c.l.b16 %v199
      %v310 = vunpack.c.h.b16 %v199
      %v311 = vunpack.c.l.b16 %v200
      %v312 = vunpack.c.h.b16 %v200
      %v313 = vunpack.c.l.b16 %v201
      %v314 = vunpack.c.h.b16 %v201
      %v315 = vunpack.c.l.b16 %v202
      %v316 = vunpack.c.h.b16 %v202
      %v317 = vunpack.c.l.b16 %v203
      %v318 = vunpack.c.h.b16 %v203
      %v319 = vunpack.c.l.b16 %v204
      %v320 = vunpack.c.h.b16 %v204
      %v321 = vunpack.c.l.b16 %v205
      %v322 = vunpack.c.h.b16 %v205
      %v323 = vunpack.c.l.b16 %v206
      %v324 = vunpack.c.h.b16 %v206
      %v325 = vunpack.c.l.b16 %v207
      %v326 = vunpack.c.h.b16 %v207
      %v327 = vunpack.c.l.b16 %v208
      %v328 = vunpack.c.h.b16 %v208
      %v329 = vunpack.c.l.b16 %v209
      %v330 = vunpack.c.h.b16 %v209
      %v331 = vpack.c.b16 %v269, %v267
      %v332 = vpack.c.b16 %v270, %v268
      %v333 = vpack.c.b16 %v273, %v271
      %v334 = vpack.c.b16 %v274, %v272
      %v335 = vpack.c.b16 %v277, %v275
      %v336 = vpack.c.b16 %v278, %v276
      %v337 = vpack.c.b16 %v281, %v279
      %v338 = vpack.c.b16 %v282, %v280
      %v339 = vpack.c.b16 %v285, %v283
      %v340 = vpack.c.b16 %v286, %v284
      %v341 = vpack.c.b16 %v289, %v287
      %v342 = vpack.c.b16 %v290, %v288
      %v343 = vpack.c.b16 %v293, %v291
      %v344 = vpack.c.b16 %v294, %v292
      %v345 = vpack.c.b16 %v297, %v295
      %v346 = vpack.c.b16 %v298, %v296
      %v347 = vpack.c.b16 %v301, %v299
      %v348 = vpack.c.b16 %v302, %v300
      %v349 = vpack.c.b16 %v305, %v303
      %v350 = vpack.c.b16 %v306, %v304
      %v351 = vpack.c.b16 %v309, %v307
      %v352 = vpack.c.b16 %v310, %v308
      %v353 = vpack.c.b16 %v313, %v311
      %v354 = vpack.c.b16 %v314, %v312
      %v355 = vpack.c.b16 %v317, %v315
      %v356 = vpack.c.b16 %v318, %v316
      %v357 = vpack.c.b16 %v321, %v319
      %v358 = vpack.c.b16 %v322, %v320
      %v359 = vpack.c.b16 %v325, %v323
      %v360 = vpack.c.b16 %v326, %v324
      %v361 = vpack.c.b16 %v329, %v327
      %v362 = vpack.c.b16 %v330, %v328
      %v397 = vunpack.c.l.b16 %v210
      %v398 = vunpack.c.l.b16 %v211
      %v399 = vunpack.c.l.b16 %v212
      %v400 = vunpack.c.l.b16 %v213
      %v401 = vunpack.c.l.b16 %v214
      %v402 = vunpack.c.l.b16 %v215
      %v403 = vunpack.c.l.b16 %v216
      %v404 = vunpack.c.l.b16 %v217
      %v405 = vunpack.c.l.b16 %v218
      %v406 = vunpack.c.l.b16 %v219
      %v407 = vunpack.c.l.b16 %v220
      %v408 = vunpack.c.l.b16 %v221
      %v409 = vunpack.c.l.b16 %v222
      %v410 = vunpack.c.l.b16 %v223
      %v411 = vunpack.c.l.b16 %v224
      %v412 = vunpack.c.l.b16 %v225
      %v413 = vunpack.c.l.b16 %v226
      %v414 = vunpack.c.l.b16 %v227
      %v415 = vpack.c.b16 %v398, %v397
      %v416 = vpack.c.b16 %v400, %v399
      %v417 = vpack.c.b16 %v402, %v401
      %v418 = vpack.c.b16 %v404, %v403
      %v419 = vpack.c.b16 %v406, %v405
      %v420 = vpack.c.b16 %v408, %v407
      %v421 = vpack.c.b16 %v410, %v409
      %v422 = vpack.c.b16 %v412, %v411
      %v423 = vpack.c.b16 %v414, %v413
      %vm433 = vcmask 130048
      %v435 = vsel %vm433, %v332, 0
      %v438 = vsel %vm433, %v334, 0
      %v441 = vsel %vm433, %v336, 0
      %v444 = vsel %vm433, %v338, 0
      %v447 = vsel %vm433, %v340, 0
      %v450 = vsel %vm433, %v342, 0
      %v453 = vsel %vm433, %v344, 0
      %v456 = vsel %vm433, %v346, 0
      %v459 = vsel %vm433, %v348, 0
      %v462 = vsel %vm433, %v350, 0
      %v465 = vsel %vm433, %v352, 0
      %v468 = vsel %vm433, %v354, 0
      %v471 = vsel %vm433, %v356, 0
      %v474 = vsel %vm433, %v358, 0
      %v477 = vsel %vm433, %v360, 0
      %v480 = vsel %vm433, %v362, 0
      %482 = vmatprep.subr.bf16.mxu0 0
      %483 = vmatpush1.bf16.msra.mxu0 %v415
      %484 = vmatprep.subr.bf16.mxu0 0
      %485 = vmatpush1.bf16.msra.mxu0 %v416
      %486 = vmatprep.subr.bf16.mxu0 0
      %487 = vmatpush1.bf16.msra.mxu0 %v417
      %488 = vmatprep.subr.bf16.mxu0 0
      %489 = vmatpush1.bf16.msra.mxu0 %v418
      %490 = vmatprep.subr.bf16.mxu0 0
      %491 = vmatpush1.bf16.msra.mxu0 %v419
      %492 = vmatprep.subr.bf16.mxu0 0
      %493 = vmatpush1.bf16.msra.mxu0 %v420
      %494 = vmatprep.subr.bf16.mxu0 0
      %495 = vmatpush1.bf16.msra.mxu0 %v421
      %496 = vmatprep.subr.bf16.mxu0 0
      %497 = vmatpush1.bf16.msra.mxu0 %v422
      %498 = vmatprep.subr.bf16.mxu0 0
      %499 = vmatpush1.bf16.msra.mxu0 %v423
      %500 = vmatprep.subr.bf16.mxu0 0
      %501 = vmatpush1.bf16.msra.mxu0 0
      %502 = vmatprep.subr.bf16.mxu0 0
      %503 = vmatpush1.bf16.msra.mxu0 0
      %504 = vmatprep.subr.bf16.mxu0 0
      %505 = vmatpush1.bf16.msra.mxu0 0
      %506 = vmatprep.subr.bf16.mxu0 0
      %507 = vmatpush1.bf16.msra.mxu0 0
      %508 = vmatprep.subr.bf16.mxu0 0
      %509 = vmatpush1.bf16.msra.mxu0 0
      %510 = vmatprep.subr.bf16.mxu0 0
      %511 = vmatpush1.bf16.msra.mxu0 0
      %512 = vmatprep.subr.bf16.mxu0 0
      %513 = vmatpush1.bf16.msra.mxu0 0
      %514 = vmatprep.mubr.bf16.mxu0 %v435
      %515 = vmatmul.mubr.bf16.gmra.mrb[0].mxu0 %v331
      %v516 = vpop.f32.mrb[0].mxu0
      %v517 = vadd.f32 %v233, %v516
      %v518 = vpop.f32.mrb[0].mxu0
      %v519 = vpop.f32.mrb[0].mxu0
      %v520 = vadd.f32 %v233, %v519
      %v521 = vpop.f32.mrb[0].mxu0
      %522 = vmatprep.mubr.bf16.mxu0 %v438
      %523 = vmatmul.mubr.bf16.gmra.mrb[0].mxu0 %v333
      %v524 = vpop.f32.mrb[0].mxu0
      %v525 = vadd.f32 %v233, %v524
      %v526 = vpop.f32.mrb[0].mxu0
      %v527 = vpop.f32.mrb[0].mxu0
      %v528 = vadd.f32 %v233, %v527
      %v529 = vpop.f32.mrb[0].mxu0
      %530 = vmatprep.mubr.bf16.mxu0 %v441
      %531 = vmatmul.mubr.bf16.gmra.mrb[0].mxu0 %v335
      %v532 = vpop.f32.mrb[0].mxu0
      %v533 = vadd.f32 %v233, %v532
      %v534 = vpop.f32.mrb[0].mxu0
      %v535 = vpop.f32.mrb[0].mxu0
      %v536 = vadd.f32 %v233, %v535
      %v537 = vpop.f32.mrb[0].mxu0
      %538 = vmatprep.mubr.bf16.mxu0 %v444
      %539 = vmatmul.mubr.bf16.gmra.mrb[0].mxu0 %v337
      %v540 = vpop.f32.mrb[0].mxu0
      %v541 = vadd.f32 %v233, %v540
      %v542 = vpop.f32.mrb[0].mxu0
      %v543 = vpop.f32.mrb[0].mxu0
      %v544 = vadd.f32 %v233, %v543
      %v545 = vpop.f32.mrb[0].mxu0
      %546 = vmatprep.mubr.bf16.mxu0 %v447
      %547 = vmatmul.mubr.bf16.gmra.mrb[0].mxu0 %v339
      %v548 = vpop.f32.mrb[0].mxu0
      %v549 = vadd.f32 %v233, %v548
      %v550 = vpop.f32.mrb[0].mxu0
      %v551 = vpop.f32.mrb[0].mxu0
      %v552 = vadd.f32 %v233, %v551
      %v553 = vpop.f32.mrb[0].mxu0
      %554 = vmatprep.mubr.bf16.mxu0 %v450
      %555 = vmatmul.mubr.bf16.gmra.mrb[0].mxu0 %v341
      %v556 = vpop.f32.mrb[0].mxu0
      %v557 = vadd.f32 %v233, %v556
      %v558 = vpop.f32.mrb[0].mxu0
      %v559 = vpop.f32.mrb[0].mxu0
      %v560 = vadd.f32 %v233, %v559
      %v561 = vpop.f32.mrb[0].mxu0
      %562 = vmatprep.mubr.bf16.mxu0 %v453
      %563 = vmatmul.mubr.bf16.gmra.mrb[0].mxu0 %v343
      %v564 = vpop.f32.mrb[0].mxu0
      %v565 = vadd.f32 %v233, %v564
      %v566 = vpop.f32.mrb[0].mxu0
      %v567 = vpop.f32.mrb[0].mxu0
      %v568 = vadd.f32 %v233, %v567
      %v569 = vpop.f32.mrb[0].mxu0
      %570 = vmatprep.mubr.bf16.mxu0 %v456
      %571 = vmatmul.mubr.bf16.gmra.mrb[0].mxu0 %v345
      %v572 = vpop.f32.mrb[0].mxu0
      %v573 = vadd.f32 %v233, %v572
      %v574 = vpop.f32.mrb[0].mxu0
      %v575 = vpop.f32.mrb[0].mxu0
      %v576 = vadd.f32 %v233, %v575
      %v577 = vpop.f32.mrb[0].mxu0
      %578 = vmatprep.mubr.bf16.mxu0 %v459
      %579 = vmatmul.mubr.bf16.gmra.mrb[0].mxu0 %v347
      %v580 = vpop.f32.mrb[0].mxu0
      %v581 = vadd.f32 %v233, %v580
      %v582 = vpop.f32.mrb[0].mxu0
      %v583 = vpop.f32.mrb[0].mxu0
      %v584 = vadd.f32 %v233, %v583
      %v585 = vpop.f32.mrb[0].mxu0
      %586 = vmatprep.mubr.bf16.mxu0 %v462
      %587 = vmatmul.mubr.bf16.gmra.mrb[0].mxu0 %v349
      %v588 = vpop.f32.mrb[0].mxu0
      %v589 = vadd.f32 %v233, %v588
      %v590 = vpop.f32.mrb[0].mxu0
      %v591 = vpop.f32.mrb[0].mxu0
      %v592 = vadd.f32 %v233, %v591
      %v593 = vpop.f32.mrb[0].mxu0
      %594 = vmatprep.mubr.bf16.mxu0 %v465
      %595 = vmatmul.mubr.bf16.gmra.mrb[0].mxu0 %v351
      %v596 = vpop.f32.mrb[0].mxu0
      %v597 = vadd.f32 %v233, %v596
      %v598 = vpop.f32.mrb[0].mxu0
      %v599 = vpop.f32.mrb[0].mxu0
      %v600 = vadd.f32 %v233, %v599
      %v601 = vpop.f32.mrb[0].mxu0
      %602 = vmatprep.mubr.bf16.mxu0 %v468
      %603 = vmatmul.mubr.bf16.gmra.mrb[0].mxu0 %v353
      %v604 = vpop.f32.mrb[0].mxu0
      %v605 = vadd.f32 %v233, %v604
      %v606 = vpop.f32.mrb[0].mxu0
      %v607 = vpop.f32.mrb[0].mxu0
      %v608 = vadd.f32 %v233, %v607
      %v609 = vpop.f32.mrb[0].mxu0
      %610 = vmatprep.mubr.bf16.mxu0 %v471
      %611 = vmatmul.mubr.bf16.gmra.mrb[0].mxu0 %v355
      %v612 = vpop.f32.mrb[0].mxu0
      %v613 = vadd.f32 %v233, %v612
      %v614 = vpop.f32.mrb[0].mxu0
      %v615 = vpop.f32.mrb[0].mxu0
      %v616 = vadd.f32 %v233, %v615
      %v617 = vpop.f32.mrb[0].mxu0
      %618 = vmatprep.mubr.bf16.mxu0 %v474
      %619 = vmatmul.mubr.bf16.gmra.mrb[0].mxu0 %v357
      %v620 = vpop.f32.mrb[0].mxu0
      %v621 = vadd.f32 %v233, %v620
      %v622 = vpop.f32.mrb[0].mxu0
      %v623 = vpop.f32.mrb[0].mxu0
      %v624 = vadd.f32 %v233, %v623
      %v625 = vpop.f32.mrb[0].mxu0
      %626 = vmatprep.mubr.bf16.mxu0 %v477
      %627 = vmatmul.mubr.bf16.gmra.mrb[0].mxu0 %v359
      %v628 = vpop.f32.mrb[0].mxu0
      %v629 = vadd.f32 %v233, %v628
      %v630 = vpop.f32.mrb[0].mxu0
      %v631 = vpop.f32.mrb[0].mxu0
      %v632 = vadd.f32 %v233, %v631
      %v633 = vpop.f32.mrb[0].mxu0
      %634 = vmatprep.mubr.bf16.mxu0 %v480
      %635 = vmatmul.mubr.bf16.gmra.mrb[0].mxu0 %v361
      %v636 = vpop.f32.mrb[0].mxu0
      %v637 = vadd.f32 %v233, %v636
      %v638 = vpop.f32.mrb[0].mxu0
      %v639 = vpop.f32.mrb[0].mxu0
      %v640 = vadd.f32 %v233, %v639
      %v641 = vpop.f32.mrb[0].mxu0
      %642 = vdwg.mxu0
      %v643 = vmax.f32 %v517, 0.0
      %v644 = vmax.f32 %v520, 0.0
      %v645 = vmax.f32 %v525, 0.0
      %v646 = vmax.f32 %v528, 0.0
      %v647 = vmax.f32 %v533, 0.0
      %v648 = vmax.f32 %v536, 0.0
      %v649 = vmax.f32 %v541, 0.0
      %v650 = vmax.f32 %v544, 0.0
      %v651 = vmax.f32 %v549, 0.0
      %v652 = vmax.f32 %v552, 0.0
      %v653 = vmax.f32 %v557, 0.0
      %v654 = vmax.f32 %v560, 0.0
      %v655 = vmax.f32 %v565, 0.0
      %v656 = vmax.f32 %v568, 0.0
      %v657 = vmax.f32 %v573, 0.0
      %v658 = vmax.f32 %v576, 0.0
      %v659 = vmax.f32 %v581, 0.0
      %v660 = vmax.f32 %v584, 0.0
      %v661 = vmax.f32 %v589, 0.0
      %v662 = vmax.f32 %v592, 0.0
      %v663 = vmax.f32 %v597, 0.0
      %v664 = vmax.f32 %v600, 0.0
      %v665 = vmax.f32 %v605, 0.0
      %v666 = vmax.f32 %v608, 0.0
      %v667 = vmax.f32 %v613, 0.0
      %v668 = vmax.f32 %v616, 0.0
      %v669 = vmax.f32 %v621, 0.0
      %v670 = vmax.f32 %v624, 0.0
      %v671 = vmax.f32 %v629, 0.0
      %v672 = vmax.f32 %v632, 0.0
      %v673 = vmax.f32 %v637, 0.0
      %v674 = vmax.f32 %v640, 0.0
      %v675 = vpack.c.bf16 %v644, %v643
      %v676 = vpack.c.bf16 %v646, %v645
      %v677 = vpack.c.bf16 %v648, %v647
      %v678 = vpack.c.bf16 %v650, %v649
      %v679 = vpack.c.bf16 %v652, %v651
      %v680 = vpack.c.bf16 %v654, %v653
      %v681 = vpack.c.bf16 %v656, %v655
      %v682 = vpack.c.bf16 %v658, %v657
      %v683 = vpack.c.bf16 %v660, %v659
      %v684 = vpack.c.bf16 %v662, %v661
      %v685 = vpack.c.bf16 %v664, %v663
      %v686 = vpack.c.bf16 %v666, %v665
      %v687 = vpack.c.bf16 %v668, %v667
      %v688 = vpack.c.bf16 %v670, %v669
      %v689 = vpack.c.bf16 %v672, %v671
      %v690 = vpack.c.bf16 %v674, %v673
      %v707 = vunpack.c.l.b16 %v675
      %v708 = vunpack.c.h.b16 %v675
      %v709 = vunpack.c.l.b16 %v676
      %v710 = vunpack.c.h.b16 %v676
      %v711 = vunpack.c.l.b16 %v677
      %v712 = vunpack.c.h.b16 %v677
      %v713 = vunpack.c.l.b16 %v678
      %v714 = vunpack.c.h.b16 %v678
      %v715 = vunpack.c.l.b16 %v679
      %v716 = vunpack.c.h.b16 %v679
      %v717 = vunpack.c.l.b16 %v680
      %v718 = vunpack.c.h.b16 %v680
      %v719 = vunpack.c.l.b16 %v681
      %v720 = vunpack.c.h.b16 %v681
      %v721 = vunpack.c.l.b16 %v682
      %v722 = vunpack.c.h.b16 %v682
      %v723 = vunpack.c.l.b16 %v683
      %v724 = vunpack.c.h.b16 %v683
      %v725 = vunpack.c.l.b16 %v684
      %v726 = vunpack.c.h.b16 %v684
      %v727 = vunpack.c.l.b16 %v685
      %v728 = vunpack.c.h.b16 %v685
      %v729 = vunpack.c.l.b16 %v686
      %v730 = vunpack.c.h.b16 %v686
      %v731 = vunpack.c.l.b16 %v687
      %v732 = vunpack.c.h.b16 %v687
      %v733 = vunpack.c.l.b16 %v688
      %v734 = vunpack.c.h.b16 %v688
      %v735 = vunpack.c.l.b16 %v689
      %v736 = vunpack.c.h.b16 %v689
      %v737 = vunpack.c.l.b16 %v690
      %v738 = vunpack.c.h.b16 %v690
      %v739 = vpack.c.b16 %v707, %v707
      %v740 = vpack.c.b16 %v708, %v708
      %v741 = vpack.c.b16 %v709, %v709
      %v742 = vpack.c.b16 %v710, %v710
      %v743 = vpack.c.b16 %v711, %v711
      %v744 = vpack.c.b16 %v712, %v712
      %v745 = vpack.c.b16 %v713, %v713
      %v746 = vpack.c.b16 %v714, %v714
      %v747 = vpack.c.b16 %v715, %v715
      %v748 = vpack.c.b16 %v716, %v716
      %v749 = vpack.c.b16 %v717, %v717
      %v750 = vpack.c.b16 %v718, %v718
      %v751 = vpack.c.b16 %v719, %v719
      %v752 = vpack.c.b16 %v720, %v720
      %v753 = vpack.c.b16 %v721, %v721
      %v754 = vpack.c.b16 %v722, %v722
      %v755 = vpack.c.b16 %v723, %v723
      %v756 = vpack.c.b16 %v724, %v724
      %v757 = vpack.c.b16 %v725, %v725
      %v758 = vpack.c.b16 %v726, %v726
      %v759 = vpack.c.b16 %v727, %v727
      %v760 = vpack.c.b16 %v728, %v728
      %v761 = vpack.c.b16 %v729, %v729
      %v762 = vpack.c.b16 %v730, %v730
      %v763 = vpack.c.b16 %v731, %v731
      %v764 = vpack.c.b16 %v732, %v732
      %v765 = vpack.c.b16 %v733, %v733
      %v766 = vpack.c.b16 %v734, %v734
      %v767 = vpack.c.b16 %v735, %v735
      %v768 = vpack.c.b16 %v736, %v736
      %v769 = vpack.c.b16 %v737, %v737
      %v770 = vpack.c.b16 %v738, %v738
      %803 = vst [vmem:[%s175] sm:$0xf] %v739
      %804 = vst [vmem:[%s175 + $0x4] sm:$0xf] %v740
      %805 = vst [vmem:[%s175 + $0x8] sm:$0xf] %v741
      %806 = vst [vmem:[%s175 + $0xc] sm:$0xf] %v742
      %807 = vst [vmem:[%s175 + $0x10] sm:$0xf] %v743
      %808 = vst [vmem:[%s175 + $0x14] sm:$0xf] %v744
      %809 = vst [vmem:[%s175 + $0x18] sm:$0xf] %v745
      %810 = vst [vmem:[%s175 + $0x1c] sm:$0xf] %v746
      %811 = vst [vmem:[%s175 + $0x20] sm:$0xf] %v747
      %812 = vst [vmem:[%s175 + $0x24] sm:$0xf] %v748
      %813 = vst [vmem:[%s175 + $0x28] sm:$0xf] %v749
      %814 = vst [vmem:[%s175 + $0x2c] sm:$0xf] %v750
      %815 = vst [vmem:[%s175 + $0x30] sm:$0xf] %v751
      %816 = vst [vmem:[%s175 + $0x34] sm:$0xf] %v752
      %817 = vst [vmem:[%s175 + $0x38] sm:$0xf] %v753
      %818 = vst [vmem:[%s175 + $0x3c] sm:$0xf] %v754
      %819 = vst [vmem:[%s175 + $0x40] sm:$0xf] %v755
      %820 = vst [vmem:[%s175 + $0x44] sm:$0xf] %v756
      %821 = vst [vmem:[%s175 + $0x48] sm:$0xf] %v757
      %822 = vst [vmem:[%s175 + $0x4c] sm:$0xf] %v758
      %823 = vst [vmem:[%s175 + $0x50] sm:$0xf] %v759
      %824 = vst [vmem:[%s175 + $0x54] sm:$0xf] %v760
      %825 = vst [vmem:[%s175 + $0x58] sm:$0xf] %v761
      %826 = vst [vmem:[%s175 + $0x5c] sm:$0xf] %v762
      %827 = vst [vmem:[%s175 + $0x60] sm:$0xf] %v763
      %828 = vst [vmem:[%s175 + $0x64] sm:$0xf] %v764
      %829 = vst [vmem:[%s175 + $0x68] sm:$0xf] %v765
      %830 = vst [vmem:[%s175 + $0x6c] sm:$0xf] %v766
      %831 = vst [vmem:[%s175 + $0x70] sm:$0xf] %v767
      %832 = vst [vmem:[%s175 + $0x74] sm:$0xf] %v768
      %833 = vst [vmem:[%s175 + $0x78] sm:$0xf] %v769
      %834 = vst [vmem:[%s175 + $0x7c] sm:$0xf] %v770
      %s835 = smul.u32 32, %s14
      %p836 = scmp.lt.s32.totalorder %s835, 63
      %s837 = scalar_select %p836, %s835, 63
      %s838 = smul.addr %s837, 4
      %s839 = scalar_lea.vmem %s3, %s838
      // Predicated region
      $region33: #{spatial_prior_module.7} parent=31 // pred_check
        %p840 = pneg %p100
      $region34: #{spatial_prior_module.7} parent=31 // pred_check_branch
        %842 = sbr.rel (%p840) target = $region36
      $region35: #{spatial_prior_module.7} parent=31 // pred_region
        %s843 = smul.u32 32, %s14
      $region36: #{spatial_prior_module.7} parent=31 // pred_fallthru
        _
    $region32: #{spatial_prior_module.7} parent=5 // pred_fallthru
      _
    %p844 = scmp.le.s32.totalorder 2, %s9
    // Predicated region
    $region37: #{spatial_prior_module.7} parent=5 // pred_check
      %p845 = pneg %p844
    $region38: #{spatial_prior_module.7} parent=5 // pred_check_branch
      %847 = sbr.rel (%p845) target = $region40
    $region39: #{spatial_prior_module.7} parent=5 // pred_region
      %s848 = ssub.s32 %s9, 2
      // Predicated region
      $region41: #{spatial_prior_module.7} parent=39 // pred_check
        %p849 = pneg %p106
      $region42: #{spatial_prior_module.7} parent=39 // pred_check_branch
        %851 = sbr.rel (%p849) target = $region44
      $region43: #{spatial_prior_module.7} parent=39 // pred_region
        %s852 = smul.u32 32, %s15
        %p853 = scmp.lt.s32.totalorder %s852, 63
        %s854 = scalar_select %p853, %s852, 63
        %s855 = smul.addr %s854, 4
        %s856 = scalar_lea.vmem %s3, %s855
      $region44: #{spatial_prior_module.7} parent=39 // pred_fallthru
        _
    $region40: #{spatial_prior_module.7} parent=5 // pred_fallthru
      _
  $region6: #{spatial_prior_module.7} parent=0 // loop_footer
    %s13 = sadd.s32 1, %s9
  $region7: #{spatial_prior_module.7} parent=0 // loop_footer_branch
    %8 = sbr.rel target = $region3
  $region8: #{spatial_prior_module.7} parent=0 // loop_exit
    _

// kernel: spatial_prior_module.10
$region0: #{spatial_prior_module.10}
  #allocation0 [shape = 'u32[]', space=smem, size = 0x4, offset = 0x4, fixed_abs, tag = 'smem constant byte address 0x4 - core index']
  #allocation1 [shape = 'u32[144,128]{1,0:T(1,128)}', space=vmem, size = 0x12000, scoped, tag = 'internal scratch']
  %s0 = inlined_call_operand.vmem [shape: bf16[2,9,9,128], index: 0, kind: input, shape index: {}]
  %s1 = inlined_call_operand.vmem [shape: bf16[2,9,9,128], index: 1, kind: input, shape index: {}]
  %s2 = inlined_call_operand.vmem [shape: bf16[2,9,9,128], index: 2, kind: input, shape index: {}]
  %s3 = inlined_call_operand.vmem [shape: bf16[2,9,9,128], index: 3, kind: input, shape index: {}]
  %s4 = inlined_call_operand.vmem [shape: bf16[128,128], index: 4, kind: input, shape index: {}]
  %s5 = inlined_call_operand.vmem [shape: f32[1,128], index: 5, kind: input, shape index: {}]
  %s6 = inlined_call_operand.vmem [shape: bf16[2,8,8,128], index: 6, kind: output, shape index: {0}]
  %s7 = inlined_call_operand.vmem [shape: bf16[2,64,128], index: 7, kind: output, shape index: {1}]
  %8 = xla_tuple %s6, %s7
  %s9 = sld [smem:[#allocation0]]
  $region65: #{spatial_prior_module.10} parent=0
    _
  %s11 = ssub.s32 1, %s9
  %s12 = scalar_select 0, %s11, %s9
  loop: start=0, step=1, limit=4
  $region2: #{spatial_prior_module.10} parent=0 // loop_pre_header
    _
  $region3: #{spatial_prior_module.10} parent=0 // loop_header
    %s14 = sphi 0, %s18
    %p15 = scmp.ge.s32.totalorder %s14, 4
    %s24 = sphi 0, %s26
    %s27 = sphi 0, %s24
    %s28 = sphi 0, %s27
    %s44 = sphi 0, %s28
    %s50 = sphi 0, %s52
    %s53 = sphi 0, %s50
    %s54 = sphi 0, %s53
    %s70 = sphi 0, %s54
    %s76 = sphi 0, %s78
    %s79 = sphi 0, %s76
    %s80 = sphi 0, %s79
    %s96 = sphi 0, %s80
    %s102 = sphi 0, %s104
    %s105 = sphi 0, %s102
    %s106 = sphi 0, %s105
    %s122 = sphi 0, %s106
    %s126 = sphi 0, %s126
    %s128 = sphi 0, %s126
    %s129 = sphi 0, %s128
    %s143 = sphi 0, %s129
    %s147 = sphi 0, %s147
    %s149 = sphi 0, %s147
    %s150 = sphi 0, %s149
    %s164 = sphi 0, %s150
    %s170 = sphi 0, %s172
    %s173 = sphi 0, %s170
    %s174 = sphi 0, %s173
    %s190 = sphi 0, %s174
    %s196 = sphi 0, %s198
    %s199 = sphi 0, %s196
    %s200 = sphi 0, %s199
    %s216 = sphi 0, %s200
  $region4: #{spatial_prior_module.10} parent=0 // loop_header_branch
    %17 = sbr.rel (%p15) target = $region8
  $region5: #{spatial_prior_module.10} parent=0 // loop_body
    %s19 = ssub.s32 %s14, 1
    %s20 = ssub.s32 %s14, 2
    %s21 = sadd.s32 %s14, 1
    %s22 = ssub.s32 %s14, %s21
    %p23 = scmp.eq.s32.totalorder %s22, 0
    %s25 = sadd.s32 %s24, 1
    %s26 = scalar_select %p23, %s24, %s25
    %p29 = pneg %p23
    %p30 = scmp.eq.s32.totalorder %s14, 1
    %p31 = por %p29, %p30
    %p32 = scmp.ne.s32.totalorder %s24, %s27
    %p33 = scmp.eq.s32.totalorder %s14, 0
    %p34 = por %p32, %p33
    %p35 = scmp.ne.s32.totalorder %s24, %s27
    %p36 = scmp.eq.s32.totalorder %s19, 1
    %p37 = por %p35, %p36
    %p38 = scmp.ne.s32.totalorder %s27, %s28
    %p39 = scmp.eq.s32.totalorder %s19, 0
    %p40 = por %p38, %p39
    %p41 = scmp.ne.s32.totalorder %s27, %s28
    %p42 = scmp.eq.s32.totalorder %s20, 1
    %p43 = por %p41, %p42
    %p45 = scmp.ne.s32.totalorder %s28, %s44
    %p46 = scmp.eq.s32.totalorder %s20, 0
    %p47 = por %p45, %p46
    %s48 = ssub.s32 %s14, %s21
    %p49 = scmp.eq.s32.totalorder %s48, 0
    %s51 = sadd.s32 %s50, 1
    %s52 = scalar_select %p49, %s50, %s51
    %p55 = pneg %p49
    %p56 = scmp.eq.s32.totalorder %s14, 1
    %p57 = por %p55, %p56
    %p58 = scmp.ne.s32.totalorder %s50, %s53
    %p59 = scmp.eq.s32.totalorder %s14, 0
    %p60 = por %p58, %p59
    %p61 = scmp.ne.s32.totalorder %s50, %s53
    %p62 = scmp.eq.s32.totalorder %s19, 1
    %p63 = por %p61, %p62
    %p64 = scmp.ne.s32.totalorder %s53, %s54
    %p65 = scmp.eq.s32.totalorder %s19, 0
    %p66 = por %p64, %p65
    %p67 = scmp.ne.s32.totalorder %s53, %s54
    %p68 = scmp.eq.s32.totalorder %s20, 1
    %p69 = por %p67, %p68
    %p71 = scmp.ne.s32.totalorder %s54, %s70
    %p72 = scmp.eq.s32.totalorder %s20, 0
    %p73 = por %p71, %p72
    %s74 = ssub.s32 %s14, %s21
    %p75 = scmp.eq.s32.totalorder %s74, 0
    %s77 = sadd.s32 %s76, 1
    %s78 = scalar_select %p75, %s76, %s77
    %p81 = pneg %p75
    %p82 = scmp.eq.s32.totalorder %s14, 1
    %p83 = por %p81, %p82
    %p84 = scmp.ne.s32.totalorder %s76, %s79
    %p85 = scmp.eq.s32.totalorder %s14, 0
    %p86 = por %p84, %p85
    %p87 = scmp.ne.s32.totalorder %s76, %s79
    %p88 = scmp.eq.s32.totalorder %s19, 1
    %p89 = por %p87, %p88
    %p90 = scmp.ne.s32.totalorder %s79, %s80
    %p91 = scmp.eq.s32.totalorder %s19, 0
    %p92 = por %p90, %p91
    %p93 = scmp.ne.s32.totalorder %s79, %s80
    %p94 = scmp.eq.s32.totalorder %s20, 1
    %p95 = por %p93, %p94
    %p97 = scmp.ne.s32.totalorder %s80, %s96
    %p98 = scmp.eq.s32.totalorder %s20, 0
    %p99 = por %p97, %p98
    %s100 = ssub.s32 %s14, %s21
    %p101 = scmp.eq.s32.totalorder %s100, 0
    %s103 = sadd.s32 %s102, 1
    %s104 = scalar_select %p101, %s102, %s103
    %p107 = pneg %p101
    %p108 = scmp.eq.s32.totalorder %s14, 1
    %p109 = por %p107, %p108
    %p110 = scmp.ne.s32.totalorder %s102, %s105
    %p111 = scmp.eq.s32.totalorder %s14, 0
    %p112 = por %p110, %p111
    %p113 = scmp.ne.s32.totalorder %s102, %s105
    %p114 = scmp.eq.s32.totalorder %s19, 1
    %p115 = por %p113, %p114
    %p116 = scmp.ne.s32.totalorder %s105, %s106
    %p117 = scmp.eq.s32.totalorder %s19, 0
    %p118 = por %p116, %p117
    %p119 = scmp.ne.s32.totalorder %s105, %s106
    %p120 = scmp.eq.s32.totalorder %s20, 1
    %p121 = por %p119, %p120
    %p123 = scmp.ne.s32.totalorder %s106, %s122
    %p124 = scmp.eq.s32.totalorder %s20, 0
    %p125 = por %p123, %p124
    %s127 = sadd.s32 %s126, 1
    %p130 = scmp.eq.s32.totalorder %s14, 1
    %p131 = scmp.ne.s32.totalorder %s126, %s128
    %p132 = scmp.eq.s32.totalorder %s14, 0
    %p133 = por %p131, %p132
    %p134 = scmp.ne.s32.totalorder %s126, %s128
    %p135 = scmp.eq.s32.totalorder %s19, 1
    %p136 = por %p134, %p135
    %p137 = scmp.ne.s32.totalorder %s128, %s129
    %p138 = scmp.eq.s32.totalorder %s19, 0
    %p139 = por %p137, %p138
    %p140 = scmp.ne.s32.totalorder %s128, %s129
    %p141 = scmp.eq.s32.totalorder %s20, 1
    %p142 = por %p140, %p141
    %p144 = scmp.ne.s32.totalorder %s129, %s143
    %p145 = scmp.eq.s32.totalorder %s20, 0
    %p146 = por %p144, %p145
    %s148 = sadd.s32 %s147, 1
    %p151 = scmp.eq.s32.totalorder %s14, 1
    %p152 = scmp.ne.s32.totalorder %s147, %s149
    %p153 = scmp.eq.s32.totalorder %s14, 0
    %p154 = por %p152, %p153
    %p155 = scmp.ne.s32.totalorder %s147, %s149
    %p156 = scmp.eq.s32.totalorder %s19, 1
    %p157 = por %p155, %p156
    %p158 = scmp.ne.s32.totalorder %s149, %s150
    %p159 = scmp.eq.s32.totalorder %s19, 0
    %p160 = por %p158, %p159
    %p161 = scmp.ne.s32.totalorder %s149, %s150
    %p162 = scmp.eq.s32.totalorder %s20, 1
    %p163 = por %p161, %p162
    %p165 = scmp.ne.s32.totalorder %s150, %s164
    %p166 = scmp.eq.s32.totalorder %s20, 0
    %p167 = por %p165, %p166
    %s168 = ssub.s32 %s14, %s21
    %p169 = scmp.eq.s32.totalorder %s168, 0
    %s171 = sadd.s32 %s170, 1
    %s172 = scalar_select %p169, %s170, %s171
    %p175 = pneg %p169
    %p176 = scmp.eq.s32.totalorder %s14, 1
    %p177 = por %p175, %p176
    %p178 = scmp.ne.s32.totalorder %s170, %s173
    %p179 = scmp.eq.s32.totalorder %s14, 0
    %p180 = por %p178, %p179
    %p181 = scmp.ne.s32.totalorder %s170, %s173
    %p182 = scmp.eq.s32.totalorder %s19, 1
    %p183 = por %p181, %p182
    %p184 = scmp.ne.s32.totalorder %s173, %s174
    %p185 = scmp.eq.s32.totalorder %s19, 0
    %p186 = por %p184, %p185
    %p187 = scmp.ne.s32.totalorder %s173, %s174
    %p188 = scmp.eq.s32.totalorder %s20, 1
    %p189 = por %p187, %p188
    %p191 = scmp.ne.s32.totalorder %s174, %s190
    %p192 = scmp.eq.s32.totalorder %s20, 0
    %p193 = por %p191, %p192
    %s194 = ssub.s32 %s14, %s21
    %p195 = scmp.eq.s32.totalorder %s194, 0
    %s197 = sadd.s32 %s196, 1
    %s198 = scalar_select %p195, %s196, %s197
    %p201 = pneg %p195
    %p202 = scmp.eq.s32.totalorder %s14, 1
    %p203 = por %p201, %p202
    %p204 = scmp.ne.s32.totalorder %s196, %s199
    %p205 = scmp.eq.s32.totalorder %s14, 0
    %p206 = por %p204, %p205
    %p207 = scmp.ne.s32.totalorder %s196, %s199
    %p208 = scmp.eq.s32.totalorder %s19, 1
    %p209 = por %p207, %p208
    %p210 = scmp.ne.s32.totalorder %s199, %s200
    %p211 = scmp.eq.s32.totalorder %s19, 0
    %p212 = por %p210, %p211
    %p213 = scmp.ne.s32.totalorder %s199, %s200
    %p214 = scmp.eq.s32.totalorder %s20, 1
    %p215 = por %p213, %p214
    %p217 = scmp.ne.s32.totalorder %s200, %s216
    %p218 = scmp.eq.s32.totalorder %s20, 0
    %p219 = por %p217, %p218
    %p220 = scmp.le.s32.totalorder 1, %s14
    %p221 = scmp.lt.s32.totalorder %s14, 3
    %p222 = pnand %p220, %p221
    %p223 = pneg %p222
    // Predicated region
    $region9: #{spatial_prior_module.10} parent=5 // pred_check
      _
    $region10: #{spatial_prior_module.10} parent=5 // pred_check_branch
      %225 = sbr.rel (%p222) target = $region12
    $region11: #{spatial_prior_module.10} parent=5 // pred_region
      %s226 = ssub.s32 %s14, 1
      // Predicated region
      $region13: #{spatial_prior_module.10} parent=11 // pred_check
        %p227 = pneg %p139
      $region14: #{spatial_prior_module.10} parent=11 // pred_check_branch
        %229 = sbr.rel (%p227) target = $region16
      $region15: #{spatial_prior_module.10} parent=11 // pred_region
        _
      $region16: #{spatial_prior_module.10} parent=11 // pred_fallthru
        _
      // Predicated region
      $region17: #{spatial_prior_module.10} parent=11 // pred_check
        %p230 = pneg %p160
      $region18: #{spatial_prior_module.10} parent=11 // pred_check_branch
        %232 = sbr.rel (%p230) target = $region20
      $region19: #{spatial_prior_module.10} parent=11 // pred_region
        _
      $region20: #{spatial_prior_module.10} parent=11 // pred_fallthru
        _
    $region12: #{spatial_prior_module.10} parent=5 // pred_fallthru
      _
    %p233 = scmp.lt.s32.totalorder %s14, 2
    // Predicated region
    $region21: #{spatial_prior_module.10} parent=5 // pred_check
      %p234 = pneg %p233
    $region22: #{spatial_prior_module.10} parent=5 // pred_check_branch
      %236 = sbr.rel (%p234) target = $region24
    $region23: #{spatial_prior_module.10} parent=5 // pred_region
      // Predicated region
      $region25: #{spatial_prior_module.10} parent=23 // pred_check
        %p237 = pneg %p34
      $region26: #{spatial_prior_module.10} parent=23 // pred_check_branch
        %239 = sbr.rel (%p237) target = $region28
      $region27: #{spatial_prior_module.10} parent=23 // pred_region
        %p240 = scmp.lt.s32.totalorder %s14, 1
        %s241 = scalar_select %p240, %s14, 1
        %s242 = smul.addr %s241, 18
        %s243 = smul.addr %s242, 4
        %s244 = scalar_lea.vmem %s0, %s243
      $region28: #{spatial_prior_module.10} parent=23 // pred_fallthru
        _
      // Predicated region
      $region29: #{spatial_prior_module.10} parent=23 // pred_check
        %p245 = pneg %p60
      $region30: #{spatial_prior_module.10} parent=23 // pred_check_branch
        %247 = sbr.rel (%p245) target = $region32
      $region31: #{spatial_prior_module.10} parent=23 // pred_region
        %p248 = scmp.lt.s32.totalorder %s14, 1
        %s249 = scalar_select %p248, %s14, 1
        %s250 = smul.addr %s249, 18
        %s251 = smul.addr %s250, 4
        %s252 = scalar_lea.vmem %s1, %s251
      $region32: #{spatial_prior_module.10} parent=23 // pred_fallthru
        _
      // Predicated region
      $region33: #{spatial_prior_module.10} parent=23 // pred_check
        %p253 = pneg %p86
      $region34: #{spatial_prior_module.10} parent=23 // pred_check_branch
        %255 = sbr.rel (%p253) target = $region36
      $region35: #{spatial_prior_module.10} parent=23 // pred_region
        %p256 = scmp.lt.s32.totalorder %s14, 1
        %s257 = scalar_select %p256, %s14, 1
        %s258 = smul.addr %s257, 18
        %s259 = smul.addr %s258, 4
        %s260 = scalar_lea.vmem %s2, %s259
      $region36: #{spatial_prior_module.10} parent=23 // pred_fallthru
        _
      // Predicated region
      $region37: #{spatial_prior_module.10} parent=23 // pred_check
        %p261 = pneg %p112
      $region38: #{spatial_prior_module.10} parent=23 // pred_check_branch
        %263 = sbr.rel (%p261) target = $region40
      $region39: #{spatial_prior_module.10} parent=23 // pred_region
        %p264 = scmp.lt.s32.totalorder %s14, 1
        %s265 = scalar_select %p264, %s14, 1
        %s266 = smul.addr %s265, 18
        %s267 = smul.addr %s266, 4
        %s268 = scalar_lea.vmem %s3, %s267
      $region40: #{spatial_prior_module.10} parent=23 // pred_fallthru
        _
    $region24: #{spatial_prior_module.10} parent=5 // pred_fallthru
      _
    %p269 = scmp.le.s32.totalorder 1, %s14
    %p270 = scmp.lt.s32.totalorder %s14, 3
    %p271 = pnand %p269, %p270
    %p272 = pneg %p271
    // Predicated region
    $region41: #{spatial_prior_module.10} parent=5 // pred_check
      _
    $region42: #{spatial_prior_module.10} parent=5 // pred_check_branch
      %274 = sbr.rel (%p271) target = $region44
    $region43: #{spatial_prior_module.10} parent=5 // pred_region
      %s275 = ssub.s32 %s14, 1
      %p276 = scmp.lt.s32.totalorder %s19, 1
      %s277 = scalar_select %p276, %s19, 1
      %s278 = smul.addr %s277, 18
      %s279 = smul.addr %s278, 4
      %s280 = scalar_lea.vmem %s0, %s279
      %p281 = pneg %p40
      %p282 = pneg %p37
      %p283 = scmp.lt.s32.totalorder %s19, 1
      %s284 = scalar_select %p283, %s19, 1
      %s285 = smul.addr %s284, 18
      %s286 = smul.addr %s285, 4
      %s287 = scalar_lea.vmem %s1, %s286
      %p288 = pneg %p66
      %p289 = pneg %p63
      %p290 = scmp.lt.s32.totalorder %s19, 1
      %s291 = scalar_select %p290, %s19, 1
      %s292 = smul.addr %s291, 18
      %s293 = smul.addr %s292, 4
      %s294 = scalar_lea.vmem %s2, %s293
      %p295 = pneg %p92
      %p296 = pneg %p89
      %p297 = scmp.lt.s32.totalorder %s19, 1
      %s298 = scalar_select %p297, %s19, 1
      %s299 = smul.addr %s298, 18
      %s300 = smul.addr %s299, 4
      %s301 = scalar_lea.vmem %s3, %s300
      %p302 = pneg %p118
      %p303 = pneg %p115
      %p304 = pneg %p139
      %p305 = pneg %p136
      %p306 = pneg %p160
      %p307 = pneg %p157
      %p308 = pneg %p186
      %p309 = pneg %p183
      %p310 = scmp.lt.s32.totalorder %s19, 1
      %s311 = scalar_select %p310, %s19, 1
      %s312 = smul.addr %s311, 8
      %s313 = smul.addr %s312, 4
      %s314 = scalar_lea.vmem %s6, %s313
      %p315 = pneg %p212
      %p316 = pneg %p209
      %p317 = scmp.lt.s32.totalorder %s19, 1
      %s318 = scalar_select %p317, %s19, 1
      %s319 = smul.addr %s318, 8
      %s320 = smul.addr %s319, 4
      %s321 = scalar_lea.vmem %s7, %s320
      %p322 = scmp.lt.s32.totalorder %s19, 1
      %s323 = scalar_select %p322, %s19, 1
      %s324 = smul.addr %s323, 18
      %s325 = smul.addr %s324, 4
      %s326 = scalar_lea.vmem %s0, %s325
      %p327 = scmp.lt.s32.totalorder %s19, 1
      %s328 = scalar_select %p327, %s19, 1
      %s329 = smul.addr %s328, 18
      %s330 = smul.addr %s329, 4
      %s331 = scalar_lea.vmem %s1, %s330
      %p332 = scmp.lt.s32.totalorder %s19, 1
      %s333 = scalar_select %p332, %s19, 1
      %s334 = smul.addr %s333, 18
      %s335 = smul.addr %s334, 4
      %s336 = scalar_lea.vmem %s2, %s335
      %p337 = scmp.lt.s32.totalorder %s19, 1
      %s338 = scalar_select %p337, %s19, 1
      %s339 = smul.addr %s338, 18
      %s340 = smul.addr %s339, 4
      %s341 = scalar_lea.vmem %s3, %s340
      %p342 = scmp.lt.s32.totalorder %s19, 1
      %s343 = scalar_select %p342, %s19, 1
      %s344 = smul.addr %s343, 8
      %s345 = smul.addr %s344, 4
      %s346 = scalar_lea.vmem %s6, %s345
      %p347 = scmp.lt.s32.totalorder %s19, 1
      %s348 = scalar_select %p347, %s19, 1
      %s349 = smul.addr %s348, 8
      %s350 = smul.addr %s349, 4
      %s351 = scalar_lea.vmem %s7, %s350
      %v353 = vld [vmem:[%s326] sm:$0xf]
      %v354 = vld [vmem:[%s326 + $0x8] sm:$0xf]
      %v355 = vld [vmem:[%s326 + $0x10] sm:$0xf]
      %v356 = vld [vmem:[%s326 + $0x18] sm:$0xf]
      %v357 = vld [vmem:[%s326 + $0x20] sm:$0xf]
      %v358 = vld [vmem:[%s326 + $0x28] sm:$0xf]
      %v359 = vld [vmem:[%s326 + $0x30] sm:$0xf]
      %v360 = vld [vmem:[%s326 + $0x38] sm:$0xf]
      %v361 = vld [vmem:[%s326 + $0x40] sm:$0xf]
      %v362 = vld [vmem:[%s331] sm:$0xf]
      %v363 = vld [vmem:[%s331 + $0x8] sm:$0xf]
      %v364 = vld [vmem:[%s331 + $0x10] sm:$0xf]
      %v365 = vld [vmem:[%s331 + $0x18] sm:$0xf]
      %v366 = vld [vmem:[%s331 + $0x20] sm:$0xf]
      %v367 = vld [vmem:[%s331 + $0x28] sm:$0xf]
      %v368 = vld [vmem:[%s331 + $0x30] sm:$0xf]
      %v369 = vld [vmem:[%s331 + $0x38] sm:$0xf]
      %v370 = vld [vmem:[%s331 + $0x40] sm:$0xf]
      %v371 = vmax.bf16 %v353, %v362
      %v372 = vmax.bf16 %v354, %v363
      %v373 = vmax.bf16 %v355, %v364
      %v374 = vmax.bf16 %v356, %v365
      %v375 = vmax.bf16 %v357, %v366
      %v376 = vmax.bf16 %v358, %v367
      %v377 = vmax.bf16 %v359, %v368
      %v378 = vmax.bf16 %v360, %v369
      %v379 = vmax.bf16 %v361, %v370
      %v380 = vld [vmem:[%s326 + $0x4] sm:$0x1]
      %v381 = vld [vmem:[%s326 + $0xc] sm:$0x1]
      %v382 = vld [vmem:[%s326 + $0x14] sm:$0x1]
      %v383 = vld [vmem:[%s326 + $0x1c] sm:$0x1]
      %v384 = vld [vmem:[%s326 + $0x24] sm:$0x1]
      %v385 = vld [vmem:[%s326 + $0x2c] sm:$0x1]
      %v386 = vld [vmem:[%s326 + $0x34] sm:$0x1]
      %v387 = vld [vmem:[%s326 + $0x3c] sm:$0x1]
      %v388 = vld [vmem:[%s326 + $0x44] sm:$0x1]
      %vm389 = vsmask.f32 3328
      %vm390 = vsmask.f32 7440
      %vm391 = vmor %vm389, %vm390
      %v393 = vshrl.u32 %v353, 16
      %v395 = vrot.slane %v393, 4
      %v396 = vshll.u32 %v353, 16
      %v398 = vrot.slane %v396, 5
      %v399 = vor.u32 %v395, %v398
      %v400 = vrot.slane %v399, 4
      %v402 = vshll.u32 %v380, 16
      %v404 = vrot.slane %v402, 5
      %v405 = vsel %vm391, %v400, %v404
      %v407 = vshrl.u32 %v354, 16
      %v409 = vrot.slane %v407, 4
      %v410 = vshll.u32 %v354, 16
      %v412 = vrot.slane %v410, 5
      %v413 = vor.u32 %v409, %v412
      %v414 = vrot.slane %v413, 4
      %v416 = vshll.u32 %v381, 16
      %v418 = vrot.slane %v416, 5
      %v419 = vsel %vm391, %v414, %v418
      %v421 = vshrl.u32 %v355, 16
      %v423 = vrot.slane %v421, 4
      %v424 = vshll.u32 %v355, 16
      %v426 = vrot.slane %v424, 5
      %v427 = vor.u32 %v423, %v426
      %v428 = vrot.slane %v427, 4
      %v430 = vshll.u32 %v382, 16
      %v432 = vrot.slane %v430, 5
      %v433 = vsel %vm391, %v428, %v432
      %v435 = vshrl.u32 %v356, 16
      %v437 = vrot.slane %v435, 4
      %v438 = vshll.u32 %v356, 16
      %v440 = vrot.slane %v438, 5
      %v441 = vor.u32 %v437, %v440
      %v442 = vrot.slane %v441, 4
      %v444 = vshll.u32 %v383, 16
      %v446 = vrot.slane %v444, 5
      %v447 = vsel %vm391, %v442, %v446
      %v449 = vshrl.u32 %v357, 16
      %v451 = vrot.slane %v449, 4
      %v452 = vshll.u32 %v357, 16
      %v454 = vrot.slane %v452, 5
      %v455 = vor.u32 %v451, %v454
      %v456 = vrot.slane %v455, 4
      %v458 = vshll.u32 %v384, 16
      %v460 = vrot.slane %v458, 5
      %v461 = vsel %vm391, %v456, %v460
      %v463 = vshrl.u32 %v358, 16
      %v465 = vrot.slane %v463, 4
      %v466 = vshll.u32 %v358, 16
      %v468 = vrot.slane %v466, 5
      %v469 = vor.u32 %v465, %v468
      %v470 = vrot.slane %v469, 4
      %v472 = vshll.u32 %v385, 16
      %v474 = vrot.slane %v472, 5
      %v475 = vsel %vm391, %v470, %v474
      %v477 = vshrl.u32 %v359, 16
      %v479 = vrot.slane %v477, 4
      %v480 = vshll.u32 %v359, 16
      %v482 = vrot.slane %v480, 5
      %v483 = vor.u32 %v479, %v482
      %v484 = vrot.slane %v483, 4
      %v486 = vshll.u32 %v386, 16
      %v488 = vrot.slane %v486, 5
      %v489 = vsel %vm391, %v484, %v488
      %v491 = vshrl.u32 %v360, 16
      %v493 = vrot.slane %v491, 4
      %v494 = vshll.u32 %v360, 16
      %v496 = vrot.slane %v494, 5
      %v497 = vor.u32 %v493, %v496
      %v498 = vrot.slane %v497, 4
      %v500 = vshll.u32 %v387, 16
      %v502 = vrot.slane %v500, 5
      %v503 = vsel %vm391, %v498, %v502
      %v505 = vshrl.u32 %v361, 16
      %v507 = vrot.slane %v505, 4
      %v508 = vshll.u32 %v361, 16
      %v510 = vrot.slane %v508, 5
      %v511 = vor.u32 %v507, %v510
      %v512 = vrot.slane %v511, 4
      %v514 = vshll.u32 %v388, 16
      %v516 = vrot.slane %v514, 5
      %v517 = vsel %vm391, %v512, %v516
      %v527 = vmax.bf16 %v371, %v405
      %v528 = vmax.bf16 %v372, %v419
      %v529 = vmax.bf16 %v373, %v433
      %v530 = vmax.bf16 %v374, %v447
      %v531 = vmax.bf16 %v375, %v461
      %v532 = vmax.bf16 %v376, %v475
      %v533 = vmax.bf16 %v377, %v489
      %v534 = vmax.bf16 %v378, %v503
      %v535 = vmax.bf16 %v379, %v517
      %v536 = vld [vmem:[%s336] sm:$0xf]
      %v537 = vld [vmem:[%s336 + $0x8] sm:$0xf]
      %v538 = vld [vmem:[%s336 + $0x10] sm:$0xf]
      %v539 = vld [vmem:[%s336 + $0x18] sm:$0xf]
      %v540 = vld [vmem:[%s336 + $0x20] sm:$0xf]
      %v541 = vld [vmem:[%s336 + $0x28] sm:$0xf]
      %v542 = vld [vmem:[%s336 + $0x30] sm:$0xf]
      %v543 = vld [vmem:[%s336 + $0x38] sm:$0xf]
      %v544 = vld [vmem:[%s341] sm:$0xf]
      %v545 = vld [vmem:[%s341 + $0x8] sm:$0xf]
      %v546 = vld [vmem:[%s341 + $0x10] sm:$0xf]
      %v547 = vld [vmem:[%s341 + $0x18] sm:$0xf]
      %v548 = vld [vmem:[%s341 + $0x20] sm:$0xf]
      %v549 = vld [vmem:[%s341 + $0x28] sm:$0xf]
      %v550 = vld [vmem:[%s341 + $0x30] sm:$0xf]
      %v551 = vld [vmem:[%s341 + $0x38] sm:$0xf]
      %v552 = vmax.bf16 %v536, %v544
      %v553 = vmax.bf16 %v537, %v545
      %v554 = vmax.bf16 %v538, %v546
      %v555 = vmax.bf16 %v539, %v547
      %v556 = vmax.bf16 %v540, %v548
      %v557 = vmax.bf16 %v541, %v549
      %v558 = vmax.bf16 %v542, %v550
      %v559 = vmax.bf16 %v543, %v551
      %v560 = vld [vmem:[%s336 + $0x4] sm:$0x1]
      %v561 = vld [vmem:[%s336 + $0xc] sm:$0x1]
      %v562 = vld [vmem:[%s336 + $0x14] sm:$0x1]
      %v563 = vld [vmem:[%s336 + $0x1c] sm:$0x1]
      %v564 = vld [vmem:[%s336 + $0x24] sm:$0x1]
      %v565 = vld [vmem:[%s336 + $0x2c] sm:$0x1]
      %v566 = vld [vmem:[%s336 + $0x34] sm:$0x1]
      %v567 = vld [vmem:[%s336 + $0x3c] sm:$0x1]
      %v569 = vshrl.u32 %v536, 16
      %v571 = vrot.slane %v569, 4
      %v572 = vshll.u32 %v536, 16
      %v574 = vrot.slane %v572, 5
      %v575 = vor.u32 %v571, %v574
      %v576 = vrot.slane %v575, 4
      %v578 = vshll.u32 %v560, 16
      %v580 = vrot.slane %v578, 5
      %v581 = vsel %vm391, %v576, %v580
      %v583 = vshrl.u32 %v537, 16
      %v585 = vrot.slane %v583, 4
      %v586 = vshll.u32 %v537, 16
      %v588 = vrot.slane %v586, 5
      %v589 = vor.u32 %v585, %v588
      %v590 = vrot.slane %v589, 4
      %v592 = vshll.u32 %v561, 16
      %v594 = vrot.slane %v592, 5
      %v595 = vsel %vm391, %v590, %v594
      %v597 = vshrl.u32 %v538, 16
      %v599 = vrot.slane %v597, 4
      %v600 = vshll.u32 %v538, 16
      %v602 = vrot.slane %v600, 5
      %v603 = vor.u32 %v599, %v602
      %v604 = vrot.slane %v603, 4
      %v606 = vshll.u32 %v562, 16
      %v608 = vrot.slane %v606, 5
      %v609 = vsel %vm391, %v604, %v608
      %v611 = vshrl.u32 %v539, 16
      %v613 = vrot.slane %v611, 4
      %v614 = vshll.u32 %v539, 16
      %v616 = vrot.slane %v614, 5
      %v617 = vor.u32 %v613, %v616
      %v618 = vrot.slane %v617, 4
      %v620 = vshll.u32 %v563, 16
      %v622 = vrot.slane %v620, 5
      %v623 = vsel %vm391, %v618, %v622
      %v625 = vshrl.u32 %v540, 16
      %v627 = vrot.slane %v625, 4
      %v628 = vshll.u32 %v540, 16
      %v630 = vrot.slane %v628, 5
      %v631 = vor.u32 %v627, %v630
      %v632 = vrot.slane %v631, 4
      %v634 = vshll.u32 %v564, 16
      %v636 = vrot.slane %v634, 5
      %v637 = vsel %vm391, %v632, %v636
      %v639 = vshrl.u32 %v541, 16
      %v641 = vrot.slane %v639, 4
      %v642 = vshll.u32 %v541, 16
      %v644 = vrot.slane %v642, 5
      %v645 = vor.u32 %v641, %v644
      %v646 = vrot.slane %v645, 4
      %v648 = vshll.u32 %v565, 16
      %v650 = vrot.slane %v648, 5
      %v651 = vsel %vm391, %v646, %v650
      %v653 = vshrl.u32 %v542, 16
      %v655 = vrot.slane %v653, 4
      %v656 = vshll.u32 %v542, 16
      %v658 = vrot.slane %v656, 5
      %v659 = vor.u32 %v655, %v658
      %v660 = vrot.slane %v659, 4
      %v662 = vshll.u32 %v566, 16
      %v664 = vrot.slane %v662, 5
      %v665 = vsel %vm391, %v660, %v664
      %v667 = vshrl.u32 %v543, 16
      %v669 = vrot.slane %v667, 4
      %v670 = vshll.u32 %v543, 16
      %v672 = vrot.slane %v670, 5
      %v673 = vor.u32 %v669, %v672
      %v674 = vrot.slane %v673, 4
      %v676 = vshll.u32 %v567, 16
      %v678 = vrot.slane %v676, 5
      %v679 = vsel %vm391, %v674, %v678
      %v688 = vmax.bf16 %v552, %v581
      %v689 = vmax.bf16 %v553, %v595
      %v690 = vmax.bf16 %v554, %v609
      %v691 = vmax.bf16 %v555, %v623
      %v692 = vmax.bf16 %v556, %v637
      %v693 = vmax.bf16 %v557, %v651
      %v694 = vmax.bf16 %v558, %v665
      %v695 = vmax.bf16 %v559, %v679
      %v696 = vmax.bf16 %v527, %v688
      %v697 = vmax.bf16 %v528, %v689
      %v698 = vmax.bf16 %v529, %v690
      %v699 = vmax.bf16 %v530, %v691
      %v700 = vmax.bf16 %v531, %v692
      %v701 = vmax.bf16 %v532, %v693
      %v702 = vmax.bf16 %v533, %v694
      %v703 = vmax.bf16 %v534, %v695
      %v704 = vmax.bf16 %v696, %v528
      %v705 = vmax.bf16 %v697, %v529
      %v706 = vmax.bf16 %v698, %v530
      %v707 = vmax.bf16 %v699, %v531
      %v708 = vmax.bf16 %v700, %v532
      %v709 = vmax.bf16 %v701, %v533
      %v710 = vmax.bf16 %v702, %v534
      %v711 = vmax.bf16 %v703, %v535
      %712 = vst [vmem:[%s346] sm:$0xf] %v704
      %713 = vst [vmem:[%s346 + $0x4] sm:$0xf] %v705
      %714 = vst [vmem:[%s346 + $0x8] sm:$0xf] %v706
      %715 = vst [vmem:[%s346 + $0xc] sm:$0xf] %v707
      %716 = vst [vmem:[%s346 + $0x10] sm:$0xf] %v708
      %717 = vst [vmem:[%s346 + $0x14] sm:$0xf] %v709
      %718 = vst [vmem:[%s346 + $0x18] sm:$0xf] %v710
      %719 = vst [vmem:[%s346 + $0x1c] sm:$0xf] %v711
      %v720 = vld [vmem:[%s4] sm:$0xf]
      %v721 = vld [vmem:[%s4 + $0x4] sm:$0xf]
      %v722 = vld [vmem:[%s4 + $0x8] sm:$0xf]
      %v723 = vld [vmem:[%s4 + $0xc] sm:$0xf]
      %v724 = vld [vmem:[%s4 + $0x10] sm:$0xf]
      %v725 = vld [vmem:[%s4 + $0x14] sm:$0xf]
      %v726 = vld [vmem:[%s4 + $0x18] sm:$0xf]
      %v727 = vld [vmem:[%s4 + $0x1c] sm:$0xf]
      %v728 = vld [vmem:[%s4 + $0x20] sm:$0xf]
      %v729 = vld [vmem:[%s4 + $0x24] sm:$0xf]
      %v730 = vld [vmem:[%s4 + $0x28] sm:$0xf]
      %v731 = vld [vmem:[%s4 + $0x2c] sm:$0xf]
      %v732 = vld [vmem:[%s4 + $0x30] sm:$0xf]
      %v733 = vld [vmem:[%s4 + $0x34] sm:$0xf]
      %v734 = vld [vmem:[%s4 + $0x38] sm:$0xf]
      %v735 = vld [vmem:[%s4 + $0x3c] sm:$0xf]
      %v736 = vld [vmem:[%s5] sm:$0x1]
      %v738 = vlaneseq
      %v739 = vshrl.u32 %v738, 7
      %v740 = vsub.s32 0, %v739
      %v741 = vrot.slane %v736, %v740
      %v751 = vunpack.c.l.b16 %v704
      %v752 = vunpack.c.l.b16 %v705
      %v753 = vunpack.c.l.b16 %v706
      %v754 = vunpack.c.l.b16 %v707
      %v755 = vunpack.c.l.b16 %v708
      %v756 = vunpack.c.l.b16 %v709
      %v757 = vunpack.c.l.b16 %v710
      %v758 = vunpack.c.l.b16 %v711
      %v759 = vpack.c.b16 %v752, %v751
      %v760 = vpack.c.b16 %v754, %v753
      %v761 = vpack.c.b16 %v756, %v755
      %v762 = vpack.c.b16 %v758, %v757
      %v783 = vunpack.c.l.b16 %v720
      %v784 = vunpack.c.l.b16 %v721
      %v785 = vunpack.c.l.b16 %v722
      %v786 = vunpack.c.l.b16 %v723
      %v787 = vunpack.c.l.b16 %v724
      %v788 = vunpack.c.l.b16 %v725
      %v789 = vunpack.c.l.b16 %v726
      %v790 = vunpack.c.l.b16 %v727
      %v791 = vunpack.c.l.b16 %v728
      %v792 = vunpack.c.l.b16 %v729
      %v793 = vunpack.c.l.b16 %v730
      %v794 = vunpack.c.l.b16 %v731
      %v795 = vunpack.c.l.b16 %v732
      %v796 = vunpack.c.l.b16 %v733
      %v797 = vunpack.c.l.b16 %v734
      %v798 = vunpack.c.l.b16 %v735
      %v799 = vpack.c.b16 %v784, %v783
      %v800 = vpack.c.b16 %v786, %v785
      %v801 = vpack.c.b16 %v788, %v787
      %v802 = vpack.c.b16 %v790, %v789
      %v803 = vpack.c.b16 %v792, %v791
      %v804 = vpack.c.b16 %v794, %v793
      %v805 = vpack.c.b16 %v796, %v795
      %v806 = vpack.c.b16 %v798, %v797
      %815 = vmatprep.subr.bf16.mxu0 0
      %816 = vmatpush1.bf16.msra.mxu0 %v799
      %817 = vmatprep.subr.bf16.mxu0 0
      %818 = vmatpush1.bf16.msra.mxu0 %v800
      %819 = vmatprep.subr.bf16.mxu0 0
      %820 = vmatpush1.bf16.msra.mxu0 %v801
      %821 = vmatprep.subr.bf16.mxu0 0
      %822 = vmatpush1.bf16.msra.mxu0 %v802
      %823 = vmatprep.subr.bf16.mxu0 0
      %824 = vmatpush1.bf16.msra.mxu0 %v803
      %825 = vmatprep.subr.bf16.mxu0 0
      %826 = vmatpush1.bf16.msra.mxu0 %v804
      %827 = vmatprep.subr.bf16.mxu0 0
      %828 = vmatpush1.bf16.msra.mxu0 %v805
      %829 = vmatprep.subr.bf16.mxu0 0
      %830 = vmatpush1.bf16.msra.mxu0 %v806
      %831 = vmatprep.subr.bf16.mxu0 0
      %832 = vmatpush1.bf16.msra.mxu0 0
      %833 = vmatprep.subr.bf16.mxu0 0
      %834 = vmatpush1.bf16.msra.mxu0 0
      %835 = vmatprep.subr.bf16.mxu0 0
      %836 = vmatpush1.bf16.msra.mxu0 0
      %837 = vmatprep.subr.bf16.mxu0 0
      %838 = vmatpush1.bf16.msra.mxu0 0
      %839 = vmatprep.subr.bf16.mxu0 0
      %840 = vmatpush1.bf16.msra.mxu0 0
      %841 = vmatprep.subr.bf16.mxu0 0
      %842 = vmatpush1.bf16.msra.mxu0 0
      %843 = vmatprep.subr.bf16.mxu0 0
      %844 = vmatpush1.bf16.msra.mxu0 0
      %845 = vmatprep.subr.bf16.mxu0 0
      %846 = vmatpush1.bf16.msra.mxu0 0
      %847 = vmatprep.mubr.bf16.mxu0 0
      %848 = vmatmul.mubr.bf16.gmra.mrb[0].mxu0 %v759
      %v849 = vpop.f32.mrb[0].mxu0
      %v850 = vadd.f32 %v741, %v849
      %v851 = vpop.f32.mrb[0].mxu0
      %v852 = vpop.f32.mrb[0].mxu0
      %v853 = vadd.f32 %v741, %v852
      %v854 = vpop.f32.mrb[0].mxu0
      %855 = vmatprep.mubr.bf16.mxu0 0
      %856 = vmatmul.mubr.bf16.gmra.mrb[0].mxu0 %v760
      %v857 = vpop.f32.mrb[0].mxu0
      %v858 = vadd.f32 %v741, %v857
      %v859 = vpop.f32.mrb[0].mxu0
      %v860 = vpop.f32.mrb[0].mxu0
      %v861 = vadd.f32 %v741, %v860
      %v862 = vpop.f32.mrb[0].mxu0
      %863 = vmatprep.mubr.bf16.mxu0 0
      %864 = vmatmul.mubr.bf16.gmra.mrb[0].mxu0 %v761
      %v865 = vpop.f32.mrb[0].mxu0
      %v866 = vadd.f32 %v741, %v865
      %v867 = vpop.f32.mrb[0].mxu0
      %v868 = vpop.f32.mrb[0].mxu0
      %v869 = vadd.f32 %v741, %v868
      %v870 = vpop.f32.mrb[0].mxu0
      %871 = vmatprep.mubr.bf16.mxu0 0
      %872 = vmatmul.mubr.bf16.gmra.mrb[0].mxu0 %v762
      %v873 = vpop.f32.mrb[0].mxu0
      %v874 = vadd.f32 %v741, %v873
      %v875 = vpop.f32.mrb[0].mxu0
      %v876 = vpop.f32.mrb[0].mxu0
      %v877 = vadd.f32 %v741, %v876
      %v878 = vpop.f32.mrb[0].mxu0
      %879 = vdwg.mxu0
      %v880 = vpack.c.bf16 %v853, %v850
      %v881 = vpack.c.bf16 %v861, %v858
      %v882 = vpack.c.bf16 %v869, %v866
      %v883 = vpack.c.bf16 %v877, %v874
      %v888 = vunpack.c.l.b16 %v880
      %v889 = vunpack.c.h.b16 %v880
      %v890 = vunpack.c.l.b16 %v881
      %v891 = vunpack.c.h.b16 %v881
      %v892 = vunpack.c.l.b16 %v882
      %v893 = vunpack.c.h.b16 %v882
      %v894 = vunpack.c.l.b16 %v883
      %v895 = vunpack.c.h.b16 %v883
      %v896 = vpack.c.b16 %v888, %v888
      %v897 = vpack.c.b16 %v889, %v889
      %v898 = vpack.c.b16 %v890, %v890
      %v899 = vpack.c.b16 %v891, %v891
      %v900 = vpack.c.b16 %v892, %v892
      %v901 = vpack.c.b16 %v893, %v893
      %v902 = vpack.c.b16 %v894, %v894
      %v903 = vpack.c.b16 %v895, %v895
      %912 = vst [vmem:[%s351] sm:$0xf] %v896
      %913 = vst [vmem:[%s351 + $0x4] sm:$0xf] %v897
      %914 = vst [vmem:[%s351 + $0x8] sm:$0xf] %v898
      %915 = vst [vmem:[%s351 + $0xc] sm:$0xf] %v899
      %916 = vst [vmem:[%s351 + $0x10] sm:$0xf] %v900
      %917 = vst [vmem:[%s351 + $0x14] sm:$0xf] %v901
      %918 = vst [vmem:[%s351 + $0x18] sm:$0xf] %v902
      %919 = vst [vmem:[%s351 + $0x1c] sm:$0xf] %v903
      %p920 = scmp.lt.s32.totalorder %s19, 1
      %s921 = scalar_select %p920, %s19, 1
      %s922 = smul.addr %s921, 8
      %s923 = smul.addr %s922, 4
      %s924 = scalar_lea.vmem %s6, %s923
      %p925 = scmp.lt.s32.totalorder %s19, 1
      %s926 = scalar_select %p925, %s19, 1
      %s927 = smul.addr %s926, 8
      %s928 = smul.addr %s927, 4
      %s929 = scalar_lea.vmem %s7, %s928
      // Predicated region
      $region45: #{spatial_prior_module.10} parent=43 // pred_check
        %p930 = pneg %p183
      $region46: #{spatial_prior_module.10} parent=43 // pred_check_branch
        %932 = sbr.rel (%p930) target = $region48
      $region47: #{spatial_prior_module.10} parent=43 // pred_region
        _
      $region48: #{spatial_prior_module.10} parent=43 // pred_fallthru
        _
      // Predicated region
      $region49: #{spatial_prior_module.10} parent=43 // pred_check
        %p933 = pneg %p209
      $region50: #{spatial_prior_module.10} parent=43 // pred_check_branch
        %935 = sbr.rel (%p933) target = $region52
      $region51: #{spatial_prior_module.10} parent=43 // pred_region
        _
      $region52: #{spatial_prior_module.10} parent=43 // pred_fallthru
        _
    $region44: #{spatial_prior_module.10} parent=5 // pred_fallthru
      _
    %p936 = scmp.le.s32.totalorder 2, %s14
    // Predicated region
    $region53: #{spatial_prior_module.10} parent=5 // pred_check
      %p937 = pneg %p936
    $region54: #{spatial_prior_module.10} parent=5 // pred_check_branch
      %939 = sbr.rel (%p937) target = $region56
    $region55: #{spatial_prior_module.10} parent=5 // pred_region
      %s940 = ssub.s32 %s14, 2
      // Predicated region
      $region57: #{spatial_prior_module.10} parent=55 // pred_check
        %p941 = pneg %p189
      $region58: #{spatial_prior_module.10} parent=55 // pred_check_branch
        %943 = sbr.rel (%p941) target = $region60
      $region59: #{spatial_prior_module.10} parent=55 // pred_region
        %p944 = scmp.lt.s32.totalorder %s20, 1
        %s945 = scalar_select %p944, %s20, 1
        %s946 = smul.addr %s945, 8
        %s947 = smul.addr %s946, 4
        %s948 = scalar_lea.vmem %s6, %s947
      $region60: #{spatial_prior_module.10} parent=55 // pred_fallthru
        _
      // Predicated region
      $region61: #{spatial_prior_module.10} parent=55 // pred_check
        %p949 = pneg %p215
      $region62: #{spatial_prior_module.10} parent=55 // pred_check_branch
        %951 = sbr.rel (%p949) target = $region64
      $region63: #{spatial_prior_module.10} parent=55 // pred_region
        %p952 = scmp.lt.s32.totalorder %s20, 1
        %s953 = scalar_select %p952, %s20, 1
        %s954 = smul.addr %s953, 8
        %s955 = smul.addr %s954, 4
        %s956 = scalar_lea.vmem %s7, %s955
      $region64: #{spatial_prior_module.10} parent=55 // pred_fallthru
        _
    $region56: #{spatial_prior_module.10} parent=5 // pred_fallthru
      _
  $region6: #{spatial_prior_module.10} parent=0 // loop_footer
    %s18 = sadd.s32 1, %s14
  $region7: #{spatial_prior_module.10} parent=0 // loop_footer_branch
    %13 = sbr.rel target = $region3
  $region8: #{spatial_prior_module.10} parent=0 // loop_exit
    _

// kernel: spatial_prior_module.11
$region0: #{spatial_prior_module.11}
  #allocation0 [shape = 'u32[]', space=smem, size = 0x4, offset = 0x4, fixed_abs, tag = 'smem constant byte address 0x4 - core index']
  #allocation1 [shape = 'u32[144,128]{1,0:T(1,128)}', space=vmem, size = 0x12000, scoped, tag = 'internal scratch']
  %s0 = inlined_call_operand.vmem [shape: bf16[32,144], index: 0, kind: input, shape index: {}]
  %s1 = inlined_call_operand.vmem [shape: bf16[144,128], index: 1, kind: input, shape index: {}]
  %s2 = inlined_call_operand.vmem [shape: f32[1,128], index: 2, kind: input, shape index: {}]
  %s3 = inlined_call_operand.vmem [shape: bf16[128,128], index: 3, kind: input, shape index: {}]
  %s4 = inlined_call_operand.vmem [shape: f32[1,128], index: 4, kind: input, shape index: {}]
  %s5 = inlined_call_operand.vmem [shape: bf16[32,128], index: 5, kind: output, shape index: {0}]
  %s6 = inlined_call_operand.hbm [shape: bf16[32,128], index: 6, kind: output, shape index: {1}]
  %7 = xla_tuple %s5, %s6
  %s8 = sld [smem:[#allocation0]]
  $region61: #{spatial_prior_module.11} parent=0
    _
  %s10 = ssub.s32 1, %s8
  %s11 = scalar_select 0, %s10, %s8
  $region1: #{spatial_prior_module.11} parent=0
    #allocation2 [shape = 'u8[8192]{0}', space=vmem, size = 0x2000, scoped, tag = 'output window, operand 1']
    #allocation3 [shape = 's32[2]{0}', space=sflag, size = 0x8, scoped, tag = 'scoped memory for spatial_prior_module.11']
    %12 = vsyncpa [#allocation3], 0
    %s13 = scalar_lea.sflag [#allocation3], 1
    %14 = vsyncpa %s13, 0
    loop: start=0, step=1, limit=4
    $region2: #{spatial_prior_module.11} parent=1 // loop_pre_header
      _
    $region3: #{spatial_prior_module.11} parent=1 // loop_header
      %s16 = sphi 0, %s20
      %p17 = scmp.ge.s32.totalorder %s16, 4
      %s26 = sphi 0, %s28
      %s29 = sphi 0, %s26
      %s30 = sphi 0, %s29
      %s46 = sphi 0, %s30
      %s50 = sphi 0, %s50
      %s52 = sphi 0, %s50
      %s53 = sphi 0, %s52
      %s67 = sphi 0, %s53
      %s71 = sphi 0, %s71
      %s73 = sphi 0, %s71
      %s74 = sphi 0, %s73
      %s88 = sphi 0, %s74
      %s92 = sphi 0, %s92
      %s94 = sphi 0, %s92
      %s95 = sphi 0, %s94
      %s109 = sphi 0, %s95
      %s113 = sphi 0, %s113
      %s115 = sphi 0, %s113
      %s116 = sphi 0, %s115
      %s130 = sphi 0, %s116
      %s136 = sphi 0, %s138
      %s139 = sphi 0, %s136
      %s140 = sphi 0, %s139
      %s156 = sphi 0, %s140
      %s162 = sphi 0, %s164
      %s165 = sphi 0, %s162
      %s166 = sphi 0, %s165
      %s182 = sphi 0, %s166
    $region4: #{spatial_prior_module.11} parent=1 // loop_header_branch
      %19 = sbr.rel (%p17) target = $region8
    $region5: #{spatial_prior_module.11} parent=1 // loop_body
      %s21 = ssub.s32 %s16, 1
      %s22 = ssub.s32 %s16, 2
      %s23 = sadd.s32 %s16, 1
      %s24 = ssub.s32 %s16, %s23
      %p25 = scmp.eq.s32.totalorder %s24, 0
      %s27 = sadd.s32 %s26, 1
      %s28 = scalar_select %p25, %s26, %s27
      %p31 = pneg %p25
      %p32 = scmp.eq.s32.totalorder %s16, 1
      %p33 = por %p31, %p32
      %p34 = scmp.ne.s32.totalorder %s26, %s29
      %p35 = scmp.eq.s32.totalorder %s16, 0
      %p36 = por %p34, %p35
      %p37 = scmp.ne.s32.totalorder %s26, %s29
      %p38 = scmp.eq.s32.totalorder %s21, 1
      %p39 = por %p37, %p38
      %p40 = scmp.ne.s32.totalorder %s29, %s30
      %p41 = scmp.eq.s32.totalorder %s21, 0
      %p42 = por %p40, %p41
      %p43 = scmp.ne.s32.totalorder %s29, %s30
      %p44 = scmp.eq.s32.totalorder %s22, 1
      %p45 = por %p43, %p44
      %p47 = scmp.ne.s32.totalorder %s30, %s46
      %p48 = scmp.eq.s32.totalorder %s22, 0
      %p49 = por %p47, %p48
      %s51 = sadd.s32 %s50, 1
      %p54 = scmp.eq.s32.totalorder %s16, 1
      %p55 = scmp.ne.s32.totalorder %s50, %s52
      %p56 = scmp.eq.s32.totalorder %s16, 0
      %p57 = por %p55, %p56
      %p58 = scmp.ne.s32.totalorder %s50, %s52
      %p59 = scmp.eq.s32.totalorder %s21, 1
      %p60 = por %p58, %p59
      %p61 = scmp.ne.s32.totalorder %s52, %s53
      %p62 = scmp.eq.s32.totalorder %s21, 0
      %p63 = por %p61, %p62
      %p64 = scmp.ne.s32.totalorder %s52, %s53
      %p65 = scmp.eq.s32.totalorder %s22, 1
      %p66 = por %p64, %p65
      %p68 = scmp.ne.s32.totalorder %s53, %s67
      %p69 = scmp.eq.s32.totalorder %s22, 0
      %p70 = por %p68, %p69
      %s72 = sadd.s32 %s71, 1
      %p75 = scmp.eq.s32.totalorder %s16, 1
      %p76 = scmp.ne.s32.totalorder %s71, %s73
      %p77 = scmp.eq.s32.totalorder %s16, 0
      %p78 = por %p76, %p77
      %p79 = scmp.ne.s32.totalorder %s71, %s73
      %p80 = scmp.eq.s32.totalorder %s21, 1
      %p81 = por %p79, %p80
      %p82 = scmp.ne.s32.totalorder %s73, %s74
      %p83 = scmp.eq.s32.totalorder %s21, 0
      %p84 = por %p82, %p83
      %p85 = scmp.ne.s32.totalorder %s73, %s74
      %p86 = scmp.eq.s32.totalorder %s22, 1
      %p87 = por %p85, %p86
      %p89 = scmp.ne.s32.totalorder %s74, %s88
      %p90 = scmp.eq.s32.totalorder %s22, 0
      %p91 = por %p89, %p90
      %s93 = sadd.s32 %s92, 1
      %p96 = scmp.eq.s32.totalorder %s16, 1
      %p97 = scmp.ne.s32.totalorder %s92, %s94
      %p98 = scmp.eq.s32.totalorder %s16, 0
      %p99 = por %p97, %p98
      %p100 = scmp.ne.s32.totalorder %s92, %s94
      %p101 = scmp.eq.s32.totalorder %s21, 1
      %p102 = por %p100, %p101
      %p103 = scmp.ne.s32.totalorder %s94, %s95
      %p104 = scmp.eq.s32.totalorder %s21, 0
      %p105 = por %p103, %p104
      %p106 = scmp.ne.s32.totalorder %s94, %s95
      %p107 = scmp.eq.s32.totalorder %s22, 1
      %p108 = por %p106, %p107
      %p110 = scmp.ne.s32.totalorder %s95, %s109
      %p111 = scmp.eq.s32.totalorder %s22, 0
      %p112 = por %p110, %p111
      %s114 = sadd.s32 %s113, 1
      %p117 = scmp.eq.s32.totalorder %s16, 1
      %p118 = scmp.ne.s32.totalorder %s113, %s115
      %p119 = scmp.eq.s32.totalorder %s16, 0
      %p120 = por %p118, %p119
      %p121 = scmp.ne.s32.totalorder %s113, %s115
      %p122 = scmp.eq.s32.totalorder %s21, 1
      %p123 = por %p121, %p122
      %p124 = scmp.ne.s32.totalorder %s115, %s116
      %p125 = scmp.eq.s32.totalorder %s21, 0
      %p126 = por %p124, %p125
      %p127 = scmp.ne.s32.totalorder %s115, %s116
      %p128 = scmp.eq.s32.totalorder %s22, 1
      %p129 = por %p127, %p128
      %p131 = scmp.ne.s32.totalorder %s116, %s130
      %p132 = scmp.eq.s32.totalorder %s22, 0
      %p133 = por %p131, %p132
      %s134 = ssub.s32 %s16, %s23
      %p135 = scmp.eq.s32.totalorder %s134, 0
      %s137 = sadd.s32 %s136, 1
      %s138 = scalar_select %p135, %s136, %s137
      %p141 = pneg %p135
      %p142 = scmp.eq.s32.totalorder %s16, 1
      %p143 = por %p141, %p142
      %p144 = scmp.ne.s32.totalorder %s136, %s139
      %p145 = scmp.eq.s32.totalorder %s16, 0
      %p146 = por %p144, %p145
      %p147 = scmp.ne.s32.totalorder %s136, %s139
      %p148 = scmp.eq.s32.totalorder %s21, 1
      %p149 = por %p147, %p148
      %p150 = scmp.ne.s32.totalorder %s139, %s140
      %p151 = scmp.eq.s32.totalorder %s21, 0
      %p152 = por %p150, %p151
      %p153 = scmp.ne.s32.totalorder %s139, %s140
      %p154 = scmp.eq.s32.totalorder %s22, 1
      %p155 = por %p153, %p154
      %p157 = scmp.ne.s32.totalorder %s140, %s156
      %p158 = scmp.eq.s32.totalorder %s22, 0
      %p159 = por %p157, %p158
      %s160 = ssub.s32 %s16, %s23
      %p161 = scmp.eq.s32.totalorder %s160, 0
      %s163 = sadd.s32 %s162, 1
      %s164 = scalar_select %p161, %s162, %s163
      %p167 = pneg %p161
      %p168 = scmp.eq.s32.totalorder %s16, 1
      %p169 = por %p167, %p168
      %p170 = scmp.ne.s32.totalorder %s162, %s165
      %p171 = scmp.eq.s32.totalorder %s16, 0
      %p172 = por %p170, %p171
      %p173 = scmp.ne.s32.totalorder %s162, %s165
      %p174 = scmp.eq.s32.totalorder %s21, 1
      %p175 = por %p173, %p174
      %p176 = scmp.ne.s32.totalorder %s165, %s166
      %p177 = scmp.eq.s32.totalorder %s21, 0
      %p178 = por %p176, %p177
      %p179 = scmp.ne.s32.totalorder %s165, %s166
      %p180 = scmp.eq.s32.totalorder %s22, 1
      %p181 = por %p179, %p180
      %p183 = scmp.ne.s32.totalorder %s166, %s182
      %p184 = scmp.eq.s32.totalorder %s22, 0
      %p185 = por %p183, %p184
      %p186 = scmp.le.s32.totalorder 1, %s16
      %p187 = scmp.lt.s32.totalorder %s16, 3
      %p188 = pnand %p186, %p187
      %p189 = pneg %p188
      // Predicated region
      $region9: #{spatial_prior_module.11} parent=5 // pred_check
        _
      $region10: #{spatial_prior_module.11} parent=5 // pred_check_branch
        %191 = sbr.rel (%p188) target = $region12
      $region11: #{spatial_prior_module.11} parent=5 // pred_region
        %s192 = ssub.s32 %s16, 1
        // Predicated region
        $region13: #{spatial_prior_module.11} parent=11 // pred_check
          %p193 = pneg %p63
        $region14: #{spatial_prior_module.11} parent=11 // pred_check_branch
          %195 = sbr.rel (%p193) target = $region16
        $region15: #{spatial_prior_module.11} parent=11 // pred_region
          _
        $region16: #{spatial_prior_module.11} parent=11 // pred_fallthru
          _
        // Predicated region
        $region17: #{spatial_prior_module.11} parent=11 // pred_check
          %p196 = pneg %p84
        $region18: #{spatial_prior_module.11} parent=11 // pred_check_branch
          %198 = sbr.rel (%p196) target = $region20
        $region19: #{spatial_prior_module.11} parent=11 // pred_region
          _
        $region20: #{spatial_prior_module.11} parent=11 // pred_fallthru
          _
        // Predicated region
        $region21: #{spatial_prior_module.11} parent=11 // pred_check
          %p199 = pneg %p105
        $region22: #{spatial_prior_module.11} parent=11 // pred_check_branch
          %201 = sbr.rel (%p199) target = $region24
        $region23: #{spatial_prior_module.11} parent=11 // pred_region
          _
        $region24: #{spatial_prior_module.11} parent=11 // pred_fallthru
          _
        // Predicated region
        $region25: #{spatial_prior_module.11} parent=11 // pred_check
          %p202 = pneg %p126
        $region26: #{spatial_prior_module.11} parent=11 // pred_check_branch
          %204 = sbr.rel (%p202) target = $region28
        $region27: #{spatial_prior_module.11} parent=11 // pred_region
          _
        $region28: #{spatial_prior_module.11} parent=11 // pred_fallthru
          _
      $region12: #{spatial_prior_module.11} parent=5 // pred_fallthru
        _
      %p205 = scmp.lt.s32.totalorder %s16, 2
      // Predicated region
      $region29: #{spatial_prior_module.11} parent=5 // pred_check
        %p206 = pneg %p205
      $region30: #{spatial_prior_module.11} parent=5 // pred_check_branch
        %208 = sbr.rel (%p206) target = $region32
      $region31: #{spatial_prior_module.11} parent=5 // pred_region
        // Predicated region
        $region33: #{spatial_prior_module.11} parent=31 // pred_check
          %p209 = pneg %p36
        $region34: #{spatial_prior_module.11} parent=31 // pred_check_branch
          %211 = sbr.rel (%p209) target = $region36
        $region35: #{spatial_prior_module.11} parent=31 // pred_region
          %s212 = smul.u32 2, %s16
          %p213 = scmp.lt.s32.totalorder %s212, 3
          %s214 = scalar_select %p213, %s212, 3
          %s215 = smul.addr %s214, 2
          %s216 = smul.addr %s215, 4
          %s217 = scalar_lea.vmem %s0, %s216
          %s218 = smul.u32 2, %s16
        $region36: #{spatial_prior_module.11} parent=31 // pred_fallthru
          _
      $region32: #{spatial_prior_module.11} parent=5 // pred_fallthru
        _
      %p219 = scmp.le.s32.totalorder 1, %s16
      %p220 = scmp.lt.s32.totalorder %s16, 3
      %p221 = pnand %p219, %p220
      %p222 = pneg %p221
      // Predicated region
      $region37: #{spatial_prior_module.11} parent=5 // pred_check
        _
      $region38: #{spatial_prior_module.11} parent=5 // pred_check_branch
        %224 = sbr.rel (%p221) target = $region40
      $region39: #{spatial_prior_module.11} parent=5 // pred_region
        %s225 = ssub.s32 %s16, 1
        %s226 = smul.u32 2, %s21
        %p227 = scmp.lt.s32.totalorder %s226, 3
        %s228 = scalar_select %p227, %s226, 3
        %s229 = smul.addr %s228, 2
        %s230 = smul.addr %s229, 4
        %s231 = scalar_lea.vmem %s0, %s230
        %p232 = pneg %p42
        %p233 = pneg %p39
        %p234 = pneg %p63
        %p235 = pneg %p60
        %p236 = pneg %p84
        %p237 = pneg %p81
        %p238 = pneg %p105
        %p239 = pneg %p102
        %p240 = pneg %p126
        %p241 = pneg %p123
        %p242 = pneg %p152
        %p243 = pneg %p149
        %s244 = smul.u32 2, %s21
        %p245 = scmp.lt.s32.totalorder %s244, 3
        %s246 = scalar_select %p245, %s244, 3
        %s247 = smul.addr %s246, 4
        %s248 = scalar_lea.vmem %s5, %s247
        %p249 = pneg %p178
        %p250 = pneg %p175
        %s251 = sand.u32 %s165, 1
        %s252 = scalar_lea.sflag [#allocation3], %s251
        %s253 = sand.u32 %s165, 1
        %s254 = smul.addr %s253, 8
        %s255 = scalar_lea.vmem [#allocation2], %s254
        %s256 = smul.u32 2, %s21
        %p257 = scmp.lt.s32.totalorder %s256, 3
        %s258 = scalar_select %p257, %s256, 3
        %s259 = smul.addr %s258, 2
        %s260 = smul.addr %s259, 4
        %s261 = scalar_lea.vmem %s0, %s260
        %s262 = smul.u32 2, %s21
        %s263 = smul.u32 2, %s21
        %p264 = scmp.lt.s32.totalorder %s263, 3
        %s265 = scalar_select %p264, %s263, 3
        %s266 = smul.addr %s265, 4
        %s267 = scalar_lea.vmem %s5, %s266
        %s268 = smul.u32 2, %s21
        %s269 = smul.u32 2, %s21
        %v271 = vld [vmem:[%s261] sm:$0xff]
        %v272 = vld [vmem:[%s261 + $0x8] sm:$0xff]
        %v273 = vld [vmem:[%s1] sm:$0xf]
        %v274 = vld [vmem:[%s1 + $0x4] sm:$0xf]
        %v275 = vld [vmem:[%s1 + $0x8] sm:$0xf]
        %v276 = vld [vmem:[%s1 + $0xc] sm:$0xf]
        %v277 = vld [vmem:[%s1 + $0x10] sm:$0xf]
        %v278 = vld [vmem:[%s1 + $0x14] sm:$0xf]
        %v279 = vld [vmem:[%s1 + $0x18] sm:$0xf]
        %v280 = vld [vmem:[%s1 + $0x1c] sm:$0xf]
        %v281 = vld [vmem:[%s1 + $0x20] sm:$0xf]
        %v282 = vld [vmem:[%s1 + $0x24] sm:$0xf]
        %v283 = vld [vmem:[%s1 + $0x28] sm:$0xf]
        %v284 = vld [vmem:[%s1 + $0x2c] sm:$0xf]
        %v285 = vld [vmem:[%s1 + $0x30] sm:$0xf]
        %v286 = vld [vmem:[%s1 + $0x34] sm:$0xf]
        %v287 = vld [vmem:[%s1 + $0x38] sm:$0xf]
        %v288 = vld [vmem:[%s1 + $0x3c] sm:$0xf]
        %v289 = vld [vmem:[%s1 + $0x40] sm:$0xf]
        %v290 = vld [vmem:[%s1 + $0x44] sm:$0xf]
        %v291 = vld [vmem:[%s2] sm:$0x1]
        %v293 = vlaneseq
        %v294 = vshrl.u32 %v293, 7
        %v295 = vsub.s32 0, %v294
        %v296 = vrot.slane %v291, %v295
        %v300 = vunpack.c.l.b16 %v271
        %v301 = vunpack.c.h.b16 %v271
        %v302 = vunpack.c.l.b16 %v272
        %v303 = vunpack.c.h.b16 %v272
        %v304 = vpack.c.b16 %v302, %v300
        %v305 = vpack.c.b16 %v303, %v301
        %v325 = vunpack.c.l.b16 %v273
        %v326 = vunpack.c.l.b16 %v274
        %v327 = vunpack.c.l.b16 %v275
        %v328 = vunpack.c.l.b16 %v276
        %v329 = vunpack.c.l.b16 %v277
        %v330 = vunpack.c.l.b16 %v278
        %v331 = vunpack.c.l.b16 %v279
        %v332 = vunpack.c.l.b16 %v280
        %v333 = vunpack.c.l.b16 %v281
        %v334 = vunpack.c.l.b16 %v282
        %v335 = vunpack.c.l.b16 %v283
        %v336 = vunpack.c.l.b16 %v284
        %v337 = vunpack.c.l.b16 %v285
        %v338 = vunpack.c.l.b16 %v286
        %v339 = vunpack.c.l.b16 %v287
        %v340 = vunpack.c.l.b16 %v288
        %v341 = vunpack.c.l.b16 %v289
        %v342 = vunpack.c.l.b16 %v290
        %v343 = vpack.c.b16 %v326, %v325
        %v344 = vpack.c.b16 %v328, %v327
        %v345 = vpack.c.b16 %v330, %v329
        %v346 = vpack.c.b16 %v332, %v331
        %v347 = vpack.c.b16 %v334, %v333
        %v348 = vpack.c.b16 %v336, %v335
        %v349 = vpack.c.b16 %v338, %v337
        %v350 = vpack.c.b16 %v340, %v339
        %v351 = vpack.c.b16 %v342, %v341
        %vm361 = vcmask 130048
        %v363 = vsel %vm361, %v305, 0
        %365 = vmatprep.subr.bf16.mxu0 0
        %366 = vmatpush1.bf16.msra.mxu0 %v343
        %367 = vmatprep.subr.bf16.mxu0 0
        %368 = vmatpush1.bf16.msra.mxu0 %v344
        %369 = vmatprep.subr.bf16.mxu0 0
        %370 = vmatpush1.bf16.msra.mxu0 %v345
        %371 = vmatprep.subr.bf16.mxu0 0
        %372 = vmatpush1.bf16.msra.mxu0 %v346
        %373 = vmatprep.subr.bf16.mxu0 0
        %374 = vmatpush1.bf16.msra.mxu0 %v347
        %375 = vmatprep.subr.bf16.mxu0 0
        %376 = vmatpush1.bf16.msra.mxu0 %v348
        %377 = vmatprep.subr.bf16.mxu0 0
        %378 = vmatpush1.bf16.msra.mxu0 %v349
        %379 = vmatprep.subr.bf16.mxu0 0
        %380 = vmatpush1.bf16.msra.mxu0 %v350
        %381 = vmatprep.subr.bf16.mxu0 0
        %382 = vmatpush1.bf16.msra.mxu0 %v351
        %383 = vmatprep.subr.bf16.mxu0 0
        %384 = vmatpush1.bf16.msra.mxu0 0
        %385 = vmatprep.subr.bf16.mxu0 0
        %386 = vmatpush1.bf16.msra.mxu0 0
        %387 = vmatprep.subr.bf16.mxu0 0
        %388 = vmatpush1.bf16.msra.mxu0 0
        %389 = vmatprep.subr.bf16.mxu0 0
        %390 = vmatpush1.bf16.msra.mxu0 0
        %391 = vmatprep.subr.bf16.mxu0 0
        %392 = vmatpush1.bf16.msra.mxu0 0
        %393 = vmatprep.subr.bf16.mxu0 0
        %394 = vmatpush1.bf16.msra.mxu0 0
        %395 = vmatprep.subr.bf16.mxu0 0
        %396 = vmatpush1.bf16.msra.mxu0 0
        %397 = vmatprep.mubr.bf16.mxu0 %v363
        %398 = vmatmul.mubr.bf16.gmra.mrb[0].mxu0 %v304
        %v399 = vpop.f32.mrb[0].mxu0
        %v400 = vadd.f32 %v296, %v399
        %v401 = vpop.f32.mrb[0].mxu0
        %v402 = vpop.f32.mrb[0].mxu0
        %v403 = vadd.f32 %v296, %v402
        %v404 = vpop.f32.mrb[0].mxu0
        %405 = vdwg.mxu0
        %v406 = vmax.f32 %v400, 0.0
        %v407 = vmax.f32 %v403, 0.0
        %v408 = vpack.c.bf16 %v407, %v406
        %v410 = vunpack.c.l.b16 %v408
        %v411 = vunpack.c.h.b16 %v408
        %v412 = vpack.c.b16 %v410, %v410
        %v413 = vpack.c.b16 %v411, %v411
        %416 = vst [vmem:[%s267] sm:$0xf] %v412
        %417 = vst [vmem:[%s267 + $0x4] sm:$0xf] %v413
        %v418 = vld [vmem:[%s3] sm:$0xf]
        %v419 = vld [vmem:[%s3 + $0x4] sm:$0xf]
        %v420 = vld [vmem:[%s3 + $0x8] sm:$0xf]
        %v421 = vld [vmem:[%s3 + $0xc] sm:$0xf]
        %v422 = vld [vmem:[%s3 + $0x10] sm:$0xf]
        %v423 = vld [vmem:[%s3 + $0x14] sm:$0xf]
        %v424 = vld [vmem:[%s3 + $0x18] sm:$0xf]
        %v425 = vld [vmem:[%s3 + $0x1c] sm:$0xf]
        %v426 = vld [vmem:[%s3 + $0x20] sm:$0xf]
        %v427 = vld [vmem:[%s3 + $0x24] sm:$0xf]
        %v428 = vld [vmem:[%s3 + $0x28] sm:$0xf]
        %v429 = vld [vmem:[%s3 + $0x2c] sm:$0xf]
        %v430 = vld [vmem:[%s3 + $0x30] sm:$0xf]
        %v431 = vld [vmem:[%s3 + $0x34] sm:$0xf]
        %v432 = vld [vmem:[%s3 + $0x38] sm:$0xf]
        %v433 = vld [vmem:[%s3 + $0x3c] sm:$0xf]
        %v434 = vld [vmem:[%s4] sm:$0x1]
        %v436 = vlaneseq
        %v437 = vshrl.u32 %v436, 7
        %v438 = vsub.s32 0, %v437
        %v439 = vrot.slane %v434, %v438
        %v457 = vunpack.c.l.b16 %v418
        %v458 = vunpack.c.l.b16 %v419
        %v459 = vunpack.c.l.b16 %v420
        %v460 = vunpack.c.l.b16 %v421
        %v461 = vunpack.c.l.b16 %v422
        %v462 = vunpack.c.l.b16 %v423
        %v463 = vunpack.c.l.b16 %v424
        %v464 = vunpack.c.l.b16 %v425
        %v465 = vunpack.c.l.b16 %v426
        %v466 = vunpack.c.l.b16 %v427
        %v467 = vunpack.c.l.b16 %v428
        %v468 = vunpack.c.l.b16 %v429
        %v469 = vunpack.c.l.b16 %v430
        %v470 = vunpack.c.l.b16 %v431
        %v471 = vunpack.c.l.b16 %v432
        %v472 = vunpack.c.l.b16 %v433
        %v473 = vpack.c.b16 %v458, %v457
        %v474 = vpack.c.b16 %v460, %v459
        %v475 = vpack.c.b16 %v462, %v461
        %v476 = vpack.c.b16 %v464, %v463
        %v477 = vpack.c.b16 %v466, %v465
        %v478 = vpack.c.b16 %v468, %v467
        %v479 = vpack.c.b16 %v470, %v469
        %v480 = vpack.c.b16 %v472, %v471
        %489 = vmatprep.subr.bf16.mxu0 0
        %490 = vmatpush1.bf16.msra.mxu0 %v473
        %491 = vmatprep.subr.bf16.mxu0 0
        %492 = vmatpush1.bf16.msra.mxu0 %v474
        %493 = vmatprep.subr.bf16.mxu0 0
        %494 = vmatpush1.bf16.msra.mxu0 %v475
        %495 = vmatprep.subr.bf16.mxu0 0
        %496 = vmatpush1.bf16.msra.mxu0 %v476
        %497 = vmatprep.subr.bf16.mxu0 0
        %498 = vmatpush1.bf16.msra.mxu0 %v477
        %499 = vmatprep.subr.bf16.mxu0 0
        %500 = vmatpush1.bf16.msra.mxu0 %v478
        %501 = vmatprep.subr.bf16.mxu0 0
        %502 = vmatpush1.bf16.msra.mxu0 %v479
        %503 = vmatprep.subr.bf16.mxu0 0
        %504 = vmatpush1.bf16.msra.mxu0 %v480
        %505 = vmatprep.subr.bf16.mxu0 0
        %506 = vmatpush1.bf16.msra.mxu0 0
        %507 = vmatprep.subr.bf16.mxu0 0
        %508 = vmatpush1.bf16.msra.mxu0 0
        %509 = vmatprep.subr.bf16.mxu0 0
        %510 = vmatpush1.bf16.msra.mxu0 0
        %511 = vmatprep.subr.bf16.mxu0 0
        %512 = vmatpush1.bf16.msra.mxu0 0
        %513 = vmatprep.subr.bf16.mxu0 0
        %514 = vmatpush1.bf16.msra.mxu0 0
        %515 = vmatprep.subr.bf16.mxu0 0
        %516 = vmatpush1.bf16.msra.mxu0 0
        %517 = vmatprep.subr.bf16.mxu0 0
        %518 = vmatpush1.bf16.msra.mxu0 0
        %519 = vmatprep.subr.bf16.mxu0 0
        %520 = vmatpush1.bf16.msra.mxu0 0
        %521 = vmatprep.mubr.bf16.mxu0 0
        %522 = vmatmul.mubr.bf16.gmra.mrb[0].mxu0 %v408
        %v523 = vpop.f32.mrb[0].mxu0
        %v524 = vadd.f32 %v439, %v523
        %v525 = vpop.f32.mrb[0].mxu0
        %v526 = vpop.f32.mrb[0].mxu0
        %v527 = vadd.f32 %v439, %v526
        %v528 = vpop.f32.mrb[0].mxu0
        %529 = vdwg.mxu0
        %v530 = vpack.c.bf16 %v527, %v524
        %v532 = vunpack.c.l.b16 %v530
        %v533 = vunpack.c.h.b16 %v530
        %v534 = vpack.c.b16 %v532, %v532
        %v535 = vpack.c.b16 %v533, %v533
        %538 = vst [vmem:[%s255] sm:$0xf] %v534
        %539 = vst [vmem:[%s255 + $0x4] sm:$0xf] %v535
        %s540 = smul.u32 2, %s21
        %p541 = scmp.lt.s32.totalorder %s540, 3
        %s542 = scalar_select %p541, %s540, 3
        %s543 = smul.addr %s542, 4
        %s544 = scalar_lea.vmem %s5, %s543
        %s545 = sand.u32 %s165, 1
        %s546 = scalar_lea.sflag [#allocation3], %s545
        %s547 = sand.u32 %s165, 1
        %s548 = smul.addr %s547, 8
        %s549 = scalar_lea.vmem [#allocation2], %s548
        // Predicated region
        $region41: #{spatial_prior_module.11} parent=39 // pred_check
          %p550 = pneg %p149
        $region42: #{spatial_prior_module.11} parent=39 // pred_check_branch
          %552 = sbr.rel (%p550) target = $region44
        $region43: #{spatial_prior_module.11} parent=39 // pred_region
          %s553 = smul.u32 2, %s21
        $region44: #{spatial_prior_module.11} parent=39 // pred_fallthru
          _
        // Predicated region
        $region45: #{spatial_prior_module.11} parent=39 // pred_check
          %p554 = pneg %p175
        $region46: #{spatial_prior_module.11} parent=39 // pred_check_branch
          %556 = sbr.rel (%p554) target = $region48
        $region47: #{spatial_prior_module.11} parent=39 // pred_region
          %s557 = smul.u32 2, %s21
          %s559 = ssub.s32 128, 128
          %560 = vsyncadd %s546, %s559
          %s561 = smul.addr %s557, 64
          %s562 = scalar_lea.hbm %s6, %s561
          %s563 = sshll.u32 %s549, 4
          %s564 = int_to_ptr.vmem [resolvable:$true] %s563
          %569 = dma.vmem_to_hbm [thread:$0]  %s564, 128, %s562, %s546, 64, 64, 4
        $region48: #{spatial_prior_module.11} parent=39 // pred_fallthru
          _
      $region40: #{spatial_prior_module.11} parent=5 // pred_fallthru
        _
      %p570 = scmp.le.s32.totalorder 2, %s16
      // Predicated region
      $region49: #{spatial_prior_module.11} parent=5 // pred_check
        %p571 = pneg %p570
      $region50: #{spatial_prior_module.11} parent=5 // pred_check_branch
        %573 = sbr.rel (%p571) target = $region52
      $region51: #{spatial_prior_module.11} parent=5 // pred_region
        %s574 = ssub.s32 %s16, 2
        // Predicated region
        $region53: #{spatial_prior_module.11} parent=51 // pred_check
          %p575 = pneg %p155
        $region54: #{spatial_prior_module.11} parent=51 // pred_check_branch
          %577 = sbr.rel (%p575) target = $region56
        $region55: #{spatial_prior_module.11} parent=51 // pred_region
          %s578 = smul.u32 2, %s22
          %p579 = scmp.lt.s32.totalorder %s578, 3
          %s580 = scalar_select %p579, %s578, 3
          %s581 = smul.addr %s580, 4
          %s582 = scalar_lea.vmem %s5, %s581
        $region56: #{spatial_prior_module.11} parent=51 // pred_fallthru
          _
        // Predicated region
        $region57: #{spatial_prior_module.11} parent=51 // pred_check
          %p583 = pneg %p181
        $region58: #{spatial_prior_module.11} parent=51 // pred_check_branch
          %585 = sbr.rel (%p583) target = $region60
        $region59: #{spatial_prior_module.11} parent=51 // pred_region
          %s586 = sand.u32 %s166, 1
          %s587 = scalar_lea.sflag [#allocation3], %s586
          %s588 = sand.u32 %s166, 1
          %s589 = smul.addr %s588, 8
          %s590 = scalar_lea.vmem [#allocation2], %s589
          %591 = dma.done %s587, 128
        $region60: #{spatial_prior_module.11} parent=51 // pred_fallthru
          _
      $region52: #{spatial_prior_module.11} parent=5 // pred_fallthru
        _
    $region6: #{spatial_prior_module.11} parent=1 // loop_footer
      %s20 = sadd.s32 1, %s16
    $region7: #{spatial_prior_module.11} parent=1 // loop_footer_branch
      %15 = sbr.rel target = $region3
    $region8: #{spatial_prior_module.11} parent=1 // loop_exit
      _
    %592 = vsyncpa [#allocation3], 1
    %s593 = scalar_lea.sflag [#allocation3], 1
    %594 = vsyncpa %s593, 1

// kernel: spatial_prior_module.12
$region0: #{spatial_prior_module.12}
  #allocation0 [shape = 'u32[]', space=smem, size = 0x4, offset = 0x4, fixed_abs, tag = 'smem constant byte address 0x4 - core index']
  #allocation1 [shape = 'u32[144,128]{1,0:T(1,128)}', space=vmem, size = 0x12000, scoped, tag = 'internal scratch']
  %s0 = inlined_call_operand.vmem [shape: bf16[16,144], index: 0, kind: input, shape index: {}]
  %s1 = inlined_call_operand.vmem [shape: bf16[144,128], index: 1, kind: input, shape index: {}]
  %s2 = inlined_call_operand.vmem [shape: f32[1,128], index: 2, kind: input, shape index: {}]
  %s3 = inlined_call_operand.vmem [shape: bf16[128,128], index: 3, kind: input, shape index: {}]
  %s4 = inlined_call_operand.vmem [shape: f32[1,128], index: 4, kind: input, shape index: {}]
  %s5 = inlined_call_operand.vmem [shape: bf16[16,128], index: 5, kind: output, shape index: {0}]
  %s6 = inlined_call_operand.vmem [shape: bf16[16,128], index: 6, kind: output, shape index: {1}]
  %7 = xla_tuple %s5, %s6
  %s8 = sld [smem:[#allocation0]]
  $region38: #{spatial_prior_module.12} parent=0
    _
  %s10 = ssub.s32 1, %s8
  %s11 = scalar_select 0, %s10, %s8
  // Predicated region
  $region2: #{spatial_prior_module.12} parent=0 // pred_check
    _
  $region3: #{spatial_prior_module.12} parent=0 // pred_check_branch
    %13 = sbr.rel (0) target = $region5
  $region4: #{spatial_prior_module.12} parent=0 // pred_region
    _
  $region5: #{spatial_prior_module.12} parent=0 // pred_fallthru
    _
  // Predicated region
  $region6: #{spatial_prior_module.12} parent=0 // pred_check
    _
  $region7: #{spatial_prior_module.12} parent=0 // pred_check_branch
    %15 = sbr.rel (0) target = $region9
  $region8: #{spatial_prior_module.12} parent=0 // pred_region
    _
  $region9: #{spatial_prior_module.12} parent=0 // pred_fallthru
    _
  // Predicated region
  $region10: #{spatial_prior_module.12} parent=0 // pred_check
    _
  $region11: #{spatial_prior_module.12} parent=0 // pred_check_branch
    %17 = sbr.rel (0) target = $region13
  $region12: #{spatial_prior_module.12} parent=0 // pred_region
    _
  $region13: #{spatial_prior_module.12} parent=0 // pred_fallthru
    _
  // Predicated region
  $region14: #{spatial_prior_module.12} parent=0 // pred_check
    _
  $region15: #{spatial_prior_module.12} parent=0 // pred_check_branch
    %19 = sbr.rel (0) target = $region17
  $region16: #{spatial_prior_module.12} parent=0 // pred_region
    _
  $region17: #{spatial_prior_module.12} parent=0 // pred_fallthru
    _
  // Predicated region
  $region18: #{spatial_prior_module.12} parent=0 // pred_check
    _
  $region19: #{spatial_prior_module.12} parent=0 // pred_check_branch
    %21 = sbr.rel (0) target = $region21
  $region20: #{spatial_prior_module.12} parent=0 // pred_region
    _
  $region21: #{spatial_prior_module.12} parent=0 // pred_fallthru
    _
  %v23 = vld [vmem:[%s0] sm:$0xff]
  %v24 = vld [vmem:[%s0 + $0x8] sm:$0xff]
  %v25 = vld [vmem:[%s1] sm:$0xf]
  %v26 = vld [vmem:[%s1 + $0x4] sm:$0xf]
  %v27 = vld [vmem:[%s1 + $0x8] sm:$0xf]
  %v28 = vld [vmem:[%s1 + $0xc] sm:$0xf]
  %v29 = vld [vmem:[%s1 + $0x10] sm:$0xf]
  %v30 = vld [vmem:[%s1 + $0x14] sm:$0xf]
  %v31 = vld [vmem:[%s1 + $0x18] sm:$0xf]
  %v32 = vld [vmem:[%s1 + $0x1c] sm:$0xf]
  %v33 = vld [vmem:[%s1 + $0x20] sm:$0xf]
  %v34 = vld [vmem:[%s1 + $0x24] sm:$0xf]
  %v35 = vld [vmem:[%s1 + $0x28] sm:$0xf]
  %v36 = vld [vmem:[%s1 + $0x2c] sm:$0xf]
  %v37 = vld [vmem:[%s1 + $0x30] sm:$0xf]
  %v38 = vld [vmem:[%s1 + $0x34] sm:$0xf]
  %v39 = vld [vmem:[%s1 + $0x38] sm:$0xf]
  %v40 = vld [vmem:[%s1 + $0x3c] sm:$0xf]
  %v41 = vld [vmem:[%s1 + $0x40] sm:$0xf]
  %v42 = vld [vmem:[%s1 + $0x44] sm:$0xf]
  %v43 = vld [vmem:[%s2] sm:$0x1]
  %v45 = vlaneseq
  %v46 = vshrl.u32 %v45, 7
  %v47 = vsub.s32 0, %v46
  %v48 = vrot.slane %v43, %v47
  %v52 = vunpack.c.l.b16 %v23
  %v53 = vunpack.c.h.b16 %v23
  %v54 = vunpack.c.l.b16 %v24
  %v55 = vunpack.c.h.b16 %v24
  %v56 = vpack.c.b16 %v54, %v52
  %v57 = vpack.c.b16 %v55, %v53
  %v77 = vunpack.c.l.b16 %v25
  %v78 = vunpack.c.l.b16 %v26
  %v79 = vunpack.c.l.b16 %v27
  %v80 = vunpack.c.l.b16 %v28
  %v81 = vunpack.c.l.b16 %v29
  %v82 = vunpack.c.l.b16 %v30
  %v83 = vunpack.c.l.b16 %v31
  %v84 = vunpack.c.l.b16 %v32
  %v85 = vunpack.c.l.b16 %v33
  %v86 = vunpack.c.l.b16 %v34
  %v87 = vunpack.c.l.b16 %v35
  %v88 = vunpack.c.l.b16 %v36
  %v89 = vunpack.c.l.b16 %v37
  %v90 = vunpack.c.l.b16 %v38
  %v91 = vunpack.c.l.b16 %v39
  %v92 = vunpack.c.l.b16 %v40
  %v93 = vunpack.c.l.b16 %v41
  %v94 = vunpack.c.l.b16 %v42
  %v95 = vpack.c.b16 %v78, %v77
  %v96 = vpack.c.b16 %v80, %v79
  %v97 = vpack.c.b16 %v82, %v81
  %v98 = vpack.c.b16 %v84, %v83
  %v99 = vpack.c.b16 %v86, %v85
  %v100 = vpack.c.b16 %v88, %v87
  %v101 = vpack.c.b16 %v90, %v89
  %v102 = vpack.c.b16 %v92, %v91
  %v103 = vpack.c.b16 %v94, %v93
  %vm113 = vcmask 130048
  %v115 = vsel %vm113, %v57, 0
  %117 = vmatprep.subr.bf16.mxu0 0
  %118 = vmatpush1.bf16.msra.mxu0 %v95
  %119 = vmatprep.subr.bf16.mxu0 0
  %120 = vmatpush1.bf16.msra.mxu0 %v96
  %121 = vmatprep.subr.bf16.mxu0 0
  %122 = vmatpush1.bf16.msra.mxu0 %v97
  %123 = vmatprep.subr.bf16.mxu0 0
  %124 = vmatpush1.bf16.msra.mxu0 %v98
  %125 = vmatprep.subr.bf16.mxu0 0
  %126 = vmatpush1.bf16.msra.mxu0 %v99
  %127 = vmatprep.subr.bf16.mxu0 0
  %128 = vmatpush1.bf16.msra.mxu0 %v100
  %129 = vmatprep.subr.bf16.mxu0 0
  %130 = vmatpush1.bf16.msra.mxu0 %v101
  %131 = vmatprep.subr.bf16.mxu0 0
  %132 = vmatpush1.bf16.msra.mxu0 %v102
  %133 = vmatprep.subr.bf16.mxu0 0
  %134 = vmatpush1.bf16.msra.mxu0 %v103
  %135 = vmatprep.subr.bf16.mxu0 0
  %136 = vmatpush1.bf16.msra.mxu0 0
  %137 = vmatprep.subr.bf16.mxu0 0
  %138 = vmatpush1.bf16.msra.mxu0 0
  %139 = vmatprep.subr.bf16.mxu0 0
  %140 = vmatpush1.bf16.msra.mxu0 0
  %141 = vmatprep.subr.bf16.mxu0 0
  %142 = vmatpush1.bf16.msra.mxu0 0
  %143 = vmatprep.subr.bf16.mxu0 0
  %144 = vmatpush1.bf16.msra.mxu0 0
  %145 = vmatprep.subr.bf16.mxu0 0
  %146 = vmatpush1.bf16.msra.mxu0 0
  %147 = vmatprep.subr.bf16.mxu0 0
  %148 = vmatpush1.bf16.msra.mxu0 0
  %149 = vmatprep.mubr.bf16.mxu0 %v115
  %150 = vmatmul.mubr.bf16.gmra.mrb[0].mxu0 %v56
  %v151 = vpop.f32.mrb[0].mxu0
  %v152 = vadd.f32 %v48, %v151
  %v153 = vpop.f32.mrb[0].mxu0
  %v154 = vpop.f32.mrb[0].mxu0
  %v155 = vadd.f32 %v48, %v154
  %v156 = vpop.f32.mrb[0].mxu0
  %157 = vdwg.mxu0
  %v158 = vmax.f32 %v152, 0.0
  %v159 = vmax.f32 %v155, 0.0
  %v160 = vpack.c.bf16 %v159, %v158
  %v162 = vunpack.c.l.b16 %v160
  %v163 = vunpack.c.h.b16 %v160
  %v164 = vpack.c.b16 %v162, %v162
  %v165 = vpack.c.b16 %v163, %v163
  %168 = vst [vmem:[%s5] sm:$0xf] %v164
  %169 = vst [vmem:[%s5 + $0x4] sm:$0xf] %v165
  %v170 = vld [vmem:[%s3] sm:$0xf]
  %v171 = vld [vmem:[%s3 + $0x4] sm:$0xf]
  %v172 = vld [vmem:[%s3 + $0x8] sm:$0xf]
  %v173 = vld [vmem:[%s3 + $0xc] sm:$0xf]
  %v174 = vld [vmem:[%s3 + $0x10] sm:$0xf]
  %v175 = vld [vmem:[%s3 + $0x14] sm:$0xf]
  %v176 = vld [vmem:[%s3 + $0x18] sm:$0xf]
  %v177 = vld [vmem:[%s3 + $0x1c] sm:$0xf]
  %v178 = vld [vmem:[%s3 + $0x20] sm:$0xf]
  %v179 = vld [vmem:[%s3 + $0x24] sm:$0xf]
  %v180 = vld [vmem:[%s3 + $0x28] sm:$0xf]
  %v181 = vld [vmem:[%s3 + $0x2c] sm:$0xf]
  %v182 = vld [vmem:[%s3 + $0x30] sm:$0xf]
  %v183 = vld [vmem:[%s3 + $0x34] sm:$0xf]
  %v184 = vld [vmem:[%s3 + $0x38] sm:$0xf]
  %v185 = vld [vmem:[%s3 + $0x3c] sm:$0xf]
  %v186 = vld [vmem:[%s4] sm:$0x1]
  %v188 = vlaneseq
  %v189 = vshrl.u32 %v188, 7
  %v190 = vsub.s32 0, %v189
  %v191 = vrot.slane %v186, %v190
  %v209 = vunpack.c.l.b16 %v170
  %v210 = vunpack.c.l.b16 %v171
  %v211 = vunpack.c.l.b16 %v172
  %v212 = vunpack.c.l.b16 %v173
  %v213 = vunpack.c.l.b16 %v174
  %v214 = vunpack.c.l.b16 %v175
  %v215 = vunpack.c.l.b16 %v176
  %v216 = vunpack.c.l.b16 %v177
  %v217 = vunpack.c.l.b16 %v178
  %v218 = vunpack.c.l.b16 %v179
  %v219 = vunpack.c.l.b16 %v180
  %v220 = vunpack.c.l.b16 %v181
  %v221 = vunpack.c.l.b16 %v182
  %v222 = vunpack.c.l.b16 %v183
  %v223 = vunpack.c.l.b16 %v184
  %v224 = vunpack.c.l.b16 %v185
  %v225 = vpack.c.b16 %v210, %v209
  %v226 = vpack.c.b16 %v212, %v211
  %v227 = vpack.c.b16 %v214, %v213
  %v228 = vpack.c.b16 %v216, %v215
  %v229 = vpack.c.b16 %v218, %v217
  %v230 = vpack.c.b16 %v220, %v219
  %v231 = vpack.c.b16 %v222, %v221
  %v232 = vpack.c.b16 %v224, %v223
  %241 = vmatprep.subr.bf16.mxu0 0
  %242 = vmatpush1.bf16.msra.mxu0 %v225
  %243 = vmatprep.subr.bf16.mxu0 0
  %244 = vmatpush1.bf16.msra.mxu0 %v226
  %245 = vmatprep.subr.bf16.mxu0 0
  %246 = vmatpush1.bf16.msra.mxu0 %v227
  %247 = vmatprep.subr.bf16.mxu0 0
  %248 = vmatpush1.bf16.msra.mxu0 %v228
  %249 = vmatprep.subr.bf16.mxu0 0
  %250 = vmatpush1.bf16.msra.mxu0 %v229
  %251 = vmatprep.subr.bf16.mxu0 0
  %252 = vmatpush1.bf16.msra.mxu0 %v230
  %253 = vmatprep.subr.bf16.mxu0 0
  %254 = vmatpush1.bf16.msra.mxu0 %v231
  %255 = vmatprep.subr.bf16.mxu0 0
  %256 = vmatpush1.bf16.msra.mxu0 %v232
  %257 = vmatprep.subr.bf16.mxu0 0
  %258 = vmatpush1.bf16.msra.mxu0 0
  %259 = vmatprep.subr.bf16.mxu0 0
  %260 = vmatpush1.bf16.msra.mxu0 0
  %261 = vmatprep.subr.bf16.mxu0 0
  %262 = vmatpush1.bf16.msra.mxu0 0
  %263 = vmatprep.subr.bf16.mxu0 0
  %264 = vmatpush1.bf16.msra.mxu0 0
  %265 = vmatprep.subr.bf16.mxu0 0
  %266 = vmatpush1.bf16.msra.mxu0 0
  %267 = vmatprep.subr.bf16.mxu0 0
  %268 = vmatpush1.bf16.msra.mxu0 0
  %269 = vmatprep.subr.bf16.mxu0 0
  %270 = vmatpush1.bf16.msra.mxu0 0
  %271 = vmatprep.subr.bf16.mxu0 0
  %272 = vmatpush1.bf16.msra.mxu0 0
  %273 = vmatprep.mubr.bf16.mxu0 0
  %274 = vmatmul.mubr.bf16.gmra.mrb[0].mxu0 %v160
  %v275 = vpop.f32.mrb[0].mxu0
  %v276 = vadd.f32 %v191, %v275
  %v277 = vpop.f32.mrb[0].mxu0
  %v278 = vpop.f32.mrb[0].mxu0
  %v279 = vadd.f32 %v191, %v278
  %v280 = vpop.f32.mrb[0].mxu0
  %281 = vdwg.mxu0
  %v282 = vpack.c.bf16 %v279, %v276
  %v284 = vunpack.c.l.b16 %v282
  %v285 = vunpack.c.h.b16 %v282
  %v286 = vpack.c.b16 %v284, %v284
  %v287 = vpack.c.b16 %v285, %v285
  %290 = vst [vmem:[%s6] sm:$0xf] %v286
  %291 = vst [vmem:[%s6 + $0x4] sm:$0xf] %v287
  // Predicated region
  $region22: #{spatial_prior_module.12} parent=0 // pred_check
    _
  $region23: #{spatial_prior_module.12} parent=0 // pred_check_branch
    %293 = sbr.rel (0) target = $region25
  $region24: #{spatial_prior_module.12} parent=0 // pred_region
    _
  $region25: #{spatial_prior_module.12} parent=0 // pred_fallthru
    _
  // Predicated region
  $region26: #{spatial_prior_module.12} parent=0 // pred_check
    _
  $region27: #{spatial_prior_module.12} parent=0 // pred_check_branch
    %295 = sbr.rel (0) target = $region29
  $region28: #{spatial_prior_module.12} parent=0 // pred_region
    _
  $region29: #{spatial_prior_module.12} parent=0 // pred_fallthru
    _
  // Predicated region
  $region30: #{spatial_prior_module.12} parent=0 // pred_check
    _
  $region31: #{spatial_prior_module.12} parent=0 // pred_check_branch
    %297 = sbr.rel (0) target = $region33
  $region32: #{spatial_prior_module.12} parent=0 // pred_region
    _
  $region33: #{spatial_prior_module.12} parent=0 // pred_fallthru
    _
  // Predicated region
  $region34: #{spatial_prior_module.12} parent=0 // pred_check
    _
  $region35: #{spatial_prior_module.12} parent=0 // pred_check_branch
    %299 = sbr.rel (0) target = $region37
  $region36: #{spatial_prior_module.12} parent=0 // pred_region
    _
  $region37: #{spatial_prior_module.12} parent=0 // pred_fallthru
    _

// kernel: spatial_prior_module.13
$region0: #{spatial_prior_module.13}
  #allocation0 [shape = 'u32[]', space=smem, size = 0x4, offset = 0x4, fixed_abs, tag = 'smem constant byte address 0x4 - core index']
  #allocation1 [shape = 'u32[144,128]{1,0:T(1,128)}', space=vmem, size = 0x12000, scoped, tag = 'internal scratch']
  %s0 = inlined_call_operand.vmem [shape: bf16[16,288], index: 0, kind: input, shape index: {}]
  %s1 = inlined_call_operand.vmem [shape: bf16[288,128], index: 1, kind: input, shape index: {}]
  %s2 = inlined_call_operand.vmem [shape: f32[1,128], index: 2, kind: input, shape index: {}]
  %s3 = inlined_call_operand.vmem [shape: bf16[128,128], index: 3, kind: input, shape index: {}]
  %s4 = inlined_call_operand.vmem [shape: f32[1,128], index: 4, kind: input, shape index: {}]
  %s5 = inlined_call_operand.vmem [shape: bf16[16,128], index: 5, kind: output, shape index: {}]
  %s6 = sld [smem:[#allocation0]]
  $region30: #{spatial_prior_module.13} parent=0
    _
  %s8 = ssub.s32 1, %s6
  %s9 = scalar_select 0, %s8, %s6
  // Predicated region
  $region2: #{spatial_prior_module.13} parent=0 // pred_check
    _
  $region3: #{spatial_prior_module.13} parent=0 // pred_check_branch
    %11 = sbr.rel (0) target = $region5
  $region4: #{spatial_prior_module.13} parent=0 // pred_region
    _
  $region5: #{spatial_prior_module.13} parent=0 // pred_fallthru
    _
  // Predicated region
  $region6: #{spatial_prior_module.13} parent=0 // pred_check
    _
  $region7: #{spatial_prior_module.13} parent=0 // pred_check_branch
    %13 = sbr.rel (0) target = $region9
  $region8: #{spatial_prior_module.13} parent=0 // pred_region
    _
  $region9: #{spatial_prior_module.13} parent=0 // pred_fallthru
    _
  // Predicated region
  $region10: #{spatial_prior_module.13} parent=0 // pred_check
    _
  $region11: #{spatial_prior_module.13} parent=0 // pred_check_branch
    %15 = sbr.rel (0) target = $region13
  $region12: #{spatial_prior_module.13} parent=0 // pred_region
    _
  $region13: #{spatial_prior_module.13} parent=0 // pred_fallthru
    _
  // Predicated region
  $region14: #{spatial_prior_module.13} parent=0 // pred_check
    _
  $region15: #{spatial_prior_module.13} parent=0 // pred_check_branch
    %17 = sbr.rel (0) target = $region17
  $region16: #{spatial_prior_module.13} parent=0 // pred_region
    _
  $region17: #{spatial_prior_module.13} parent=0 // pred_fallthru
    _
  // Predicated region
  $region18: #{spatial_prior_module.13} parent=0 // pred_check
    _
  $region19: #{spatial_prior_module.13} parent=0 // pred_check_branch
    %19 = sbr.rel (0) target = $region21
  $region20: #{spatial_prior_module.13} parent=0 // pred_region
    _
  $region21: #{spatial_prior_module.13} parent=0 // pred_fallthru
    _
  %v21 = vld [vmem:[%s0] sm:$0xff]
  %v22 = vld [vmem:[%s0 + $0x8] sm:$0xf]
  %v23 = vld [vmem:[%s0 + $0xc] sm:$0xff]
  %v24 = vld [vmem:[%s0 + $0x14] sm:$0xf]
  %v25 = vld [vmem:[%s1] sm:$0xf]
  %v26 = vld [vmem:[%s1 + $0x4] sm:$0xf]
  %v27 = vld [vmem:[%s1 + $0x8] sm:$0xf]
  %v28 = vld [vmem:[%s1 + $0xc] sm:$0xf]
  %v29 = vld [vmem:[%s1 + $0x10] sm:$0xf]
  %v30 = vld [vmem:[%s1 + $0x14] sm:$0xf]
  %v31 = vld [vmem:[%s1 + $0x18] sm:$0xf]
  %v32 = vld [vmem:[%s1 + $0x1c] sm:$0xf]
  %v33 = vld [vmem:[%s1 + $0x20] sm:$0xf]
  %v34 = vld [vmem:[%s1 + $0x24] sm:$0xf]
  %v35 = vld [vmem:[%s1 + $0x28] sm:$0xf]
  %v36 = vld [vmem:[%s1 + $0x2c] sm:$0xf]
  %v37 = vld [vmem:[%s1 + $0x30] sm:$0xf]
  %v38 = vld [vmem:[%s1 + $0x34] sm:$0xf]
  %v39 = vld [vmem:[%s1 + $0x38] sm:$0xf]
  %v40 = vld [vmem:[%s1 + $0x3c] sm:$0xf]
  %v41 = vld [vmem:[%s1 + $0x40] sm:$0xf]
  %v42 = vld [vmem:[%s1 + $0x44] sm:$0xf]
  %v43 = vld [vmem:[%s1 + $0x48] sm:$0xf]
  %v44 = vld [vmem:[%s1 + $0x4c] sm:$0xf]
  %v45 = vld [vmem:[%s1 + $0x50] sm:$0xf]
  %v46 = vld [vmem:[%s1 + $0x54] sm:$0xf]
  %v47 = vld [vmem:[%s1 + $0x58] sm:$0xf]
  %v48 = vld [vmem:[%s1 + $0x5c] sm:$0xf]
  %v49 = vld [vmem:[%s1 + $0x60] sm:$0xf]
  %v50 = vld [vmem:[%s1 + $0x64] sm:$0xf]
  %v51 = vld [vmem:[%s1 + $0x68] sm:$0xf]
  %v52 = vld [vmem:[%s1 + $0x6c] sm:$0xf]
  %v53 = vld [vmem:[%s1 + $0x70] sm:$0xf]
  %v54 = vld [vmem:[%s1 + $0x74] sm:$0xf]
  %v55 = vld [vmem:[%s1 + $0x78] sm:$0xf]
  %v56 = vld [vmem:[%s1 + $0x7c] sm:$0xf]
  %v57 = vld [vmem:[%s1 + $0x80] sm:$0xf]
  %v58 = vld [vmem:[%s1 + $0x84] sm:$0xf]
  %v59 = vld [vmem:[%s1 + $0x88] sm:$0xf]
  %v60 = vld [vmem:[%s1 + $0x8c] sm:$0xf]
  %v61 = vld [vmem:[%s2] sm:$0x1]
  %v63 = vlaneseq
  %v64 = vshrl.u32 %v63, 7
  %v65 = vsub.s32 0, %v64
  %v66 = vrot.slane %v61, %v65
  %v72 = vunpack.c.l.b16 %v21
  %v73 = vunpack.c.h.b16 %v21
  %v74 = vunpack.c.l.b16 %v22
  %v75 = vunpack.c.l.b16 %v23
  %v76 = vunpack.c.h.b16 %v23
  %v77 = vunpack.c.l.b16 %v24
  %v78 = vpack.c.b16 %v75, %v72
  %v79 = vpack.c.b16 %v76, %v73
  %v80 = vpack.c.b16 %v77, %v74
  %v119 = vunpack.c.l.b16 %v25
  %v120 = vunpack.c.l.b16 %v26
  %v121 = vunpack.c.l.b16 %v27
  %v122 = vunpack.c.l.b16 %v28
  %v123 = vunpack.c.l.b16 %v29
  %v124 = vunpack.c.l.b16 %v30
  %v125 = vunpack.c.l.b16 %v31
  %v126 = vunpack.c.l.b16 %v32
  %v127 = vunpack.c.l.b16 %v33
  %v128 = vunpack.c.l.b16 %v34
  %v129 = vunpack.c.l.b16 %v35
  %v130 = vunpack.c.l.b16 %v36
  %v131 = vunpack.c.l.b16 %v37
  %v132 = vunpack.c.l.b16 %v38
  %v133 = vunpack.c.l.b16 %v39
  %v134 = vunpack.c.l.b16 %v40
  %v135 = vunpack.c.l.b16 %v41
  %v136 = vunpack.c.l.b16 %v42
  %v137 = vunpack.c.l.b16 %v43
  %v138 = vunpack.c.l.b16 %v44
  %v139 = vunpack.c.l.b16 %v45
  %v140 = vunpack.c.l.b16 %v46
  %v141 = vunpack.c.l.b16 %v47
  %v142 = vunpack.c.l.b16 %v48
  %v143 = vunpack.c.l.b16 %v49
  %v144 = vunpack.c.l.b16 %v50
  %v145 = vunpack.c.l.b16 %v51
  %v146 = vunpack.c.l.b16 %v52
  %v147 = vunpack.c.l.b16 %v53
  %v148 = vunpack.c.l.b16 %v54
  %v149 = vunpack.c.l.b16 %v55
  %v150 = vunpack.c.l.b16 %v56
  %v151 = vunpack.c.l.b16 %v57
  %v152 = vunpack.c.l.b16 %v58
  %v153 = vunpack.c.l.b16 %v59
  %v154 = vunpack.c.l.b16 %v60
  %v155 = vpack.c.b16 %v120, %v119
  %v156 = vpack.c.b16 %v122, %v121
  %v157 = vpack.c.b16 %v124, %v123
  %v158 = vpack.c.b16 %v126, %v125
  %v159 = vpack.c.b16 %v128, %v127
  %v160 = vpack.c.b16 %v130, %v129
  %v161 = vpack.c.b16 %v132, %v131
  %v162 = vpack.c.b16 %v134, %v133
  %v163 = vpack.c.b16 %v136, %v135
  %v164 = vpack.c.b16 %v138, %v137
  %v165 = vpack.c.b16 %v140, %v139
  %v166 = vpack.c.b16 %v142, %v141
  %v167 = vpack.c.b16 %v144, %v143
  %v168 = vpack.c.b16 %v146, %v145
  %v169 = vpack.c.b16 %v148, %v147
  %v170 = vpack.c.b16 %v150, %v149
  %v171 = vpack.c.b16 %v152, %v151
  %v172 = vpack.c.b16 %v154, %v153
  %vm191 = vcmask 261120
  %v193 = vsel %vm191, %v80, 0
  %195 = vmatprep.subr.bf16.mxu0 0
  %196 = vmatpush1.bf16.msra.mxu0 %v155
  %197 = vmatprep.subr.bf16.mxu0 0
  %198 = vmatpush1.bf16.msra.mxu0 %v156
  %199 = vmatprep.subr.bf16.mxu0 0
  %200 = vmatpush1.bf16.msra.mxu0 %v157
  %201 = vmatprep.subr.bf16.mxu0 0
  %202 = vmatpush1.bf16.msra.mxu0 %v158
  %203 = vmatprep.subr.bf16.mxu0 0
  %204 = vmatpush1.bf16.msra.mxu0 %v159
  %205 = vmatprep.subr.bf16.mxu0 0
  %206 = vmatpush1.bf16.msra.mxu0 %v160
  %207 = vmatprep.subr.bf16.mxu0 0
  %208 = vmatpush1.bf16.msra.mxu0 %v161
  %209 = vmatprep.subr.bf16.mxu0 0
  %210 = vmatpush1.bf16.msra.mxu0 %v162
  %211 = vmatprep.subr.bf16.mxu0 0
  %212 = vmatpush1.bf16.msra.mxu0 %v163
  %213 = vmatprep.subr.bf16.mxu0 0
  %214 = vmatpush1.bf16.msra.mxu0 %v164
  %215 = vmatprep.subr.bf16.mxu0 0
  %216 = vmatpush1.bf16.msra.mxu0 %v165
  %217 = vmatprep.subr.bf16.mxu0 0
  %218 = vmatpush1.bf16.msra.mxu0 %v166
  %219 = vmatprep.subr.bf16.mxu0 0
  %220 = vmatpush1.bf16.msra.mxu0 %v167
  %221 = vmatprep.subr.bf16.mxu0 0
  %222 = vmatpush1.bf16.msra.mxu0 %v168
  %223 = vmatprep.subr.bf16.mxu0 0
  %224 = vmatpush1.bf16.msra.mxu0 %v169
  %225 = vmatprep.subr.bf16.mxu0 0
  %226 = vmatpush1.bf16.msra.mxu0 %v170
  %227 = vmatprep.mubr.bf16.mxu0 %v79
  %228 = vmatmul.mubr.bf16.gmra.mrb[0].mxu0 %v78
  %v229 = vpop.f32.mrb[0].mxu0
  %v230 = vadd.f32 %v66, %v229
  %v231 = vpop.f32.mrb[0].mxu0
  %v232 = vpop.f32.mrb[0].mxu0
  %v233 = vadd.f32 %v66, %v232
  %v234 = vpop.f32.mrb[0].mxu0
  %235 = vdwg.mxu0
  %236 = vmatprep.subr.bf16.mxu0 0
  %237 = vmatpush1.bf16.msra.mxu0 %v171
  %238 = vmatprep.subr.bf16.mxu0 0
  %239 = vmatpush1.bf16.msra.mxu0 %v172
  %240 = vmatprep.subr.bf16.mxu0 0
  %241 = vmatpush1.bf16.msra.mxu0 0
  %242 = vmatprep.subr.bf16.mxu0 0
  %243 = vmatpush1.bf16.msra.mxu0 0
  %244 = vmatprep.subr.bf16.mxu0 0
  %245 = vmatpush1.bf16.msra.mxu0 0
  %246 = vmatprep.subr.bf16.mxu0 0
  %247 = vmatpush1.bf16.msra.mxu0 0
  %248 = vmatprep.subr.bf16.mxu0 0
  %249 = vmatpush1.bf16.msra.mxu0 0
  %250 = vmatprep.subr.bf16.mxu0 0
  %251 = vmatpush1.bf16.msra.mxu0 0
  %252 = vmatprep.subr.bf16.mxu0 0
  %253 = vmatpush1.bf16.msra.mxu0 0
  %254 = vmatprep.subr.bf16.mxu0 0
  %255 = vmatpush1.bf16.msra.mxu0 0
  %256 = vmatprep.subr.bf16.mxu0 0
  %257 = vmatpush1.bf16.msra.mxu0 0
  %258 = vmatprep.subr.bf16.mxu0 0
  %259 = vmatpush1.bf16.msra.mxu0 0
  %260 = vmatprep.subr.bf16.mxu0 0
  %261 = vmatpush1.bf16.msra.mxu0 0
  %262 = vmatprep.subr.bf16.mxu0 0
  %263 = vmatpush1.bf16.msra.mxu0 0
  %264 = vmatprep.subr.bf16.mxu0 0
  %265 = vmatpush1.bf16.msra.mxu0 0
  %266 = vmatprep.subr.bf16.mxu0 0
  %267 = vmatpush1.bf16.msra.mxu0 0
  %268 = vmatprep.mubr.bf16.mxu0 0
  %269 = vmatmul.mubr.bf16.gmra.mrb[0].mxu0 %v193
  %v270 = vpop.f32.mrb[0].mxu0
  %v271 = vadd.f32 %v230, %v270
  %v272 = vpop.f32.mrb[0].mxu0
  %v273 = vpop.f32.mrb[0].mxu0
  %v274 = vadd.f32 %v233, %v273
  %v275 = vpop.f32.mrb[0].mxu0
  %276 = vdwg.mxu0
  %v277 = vmax.f32 %v271, 0.0
  %v278 = vmax.f32 %v274, 0.0
  %v279 = vpack.c.bf16 %v278, %v277
  %v280 = vld [vmem:[%s3] sm:$0xf]
  %v281 = vld [vmem:[%s3 + $0x4] sm:$0xf]
  %v282 = vld [vmem:[%s3 + $0x8] sm:$0xf]
  %v283 = vld [vmem:[%s3 + $0xc] sm:$0xf]
  %v284 = vld [vmem:[%s3 + $0x10] sm:$0xf]
  %v285 = vld [vmem:[%s3 + $0x14] sm:$0xf]
  %v286 = vld [vmem:[%s3 + $0x18] sm:$0xf]
  %v287 = vld [vmem:[%s3 + $0x1c] sm:$0xf]
  %v288 = vld [vmem:[%s3 + $0x20] sm:$0xf]
  %v289 = vld [vmem:[%s3 + $0x24] sm:$0xf]
  %v290 = vld [vmem:[%s3 + $0x28] sm:$0xf]
  %v291 = vld [vmem:[%s3 + $0x2c] sm:$0xf]
  %v292 = vld [vmem:[%s3 + $0x30] sm:$0xf]
  %v293 = vld [vmem:[%s3 + $0x34] sm:$0xf]
  %v294 = vld [vmem:[%s3 + $0x38] sm:$0xf]
  %v295 = vld [vmem:[%s3 + $0x3c] sm:$0xf]
  %v296 = vld [vmem:[%s4] sm:$0x1]
  %v298 = vlaneseq
  %v299 = vshrl.u32 %v298, 7
  %v300 = vsub.s32 0, %v299
  %v301 = vrot.slane %v296, %v300
  %v319 = vunpack.c.l.b16 %v280
  %v320 = vunpack.c.l.b16 %v281
  %v321 = vunpack.c.l.b16 %v282
  %v322 = vunpack.c.l.b16 %v283
  %v323 = vunpack.c.l.b16 %v284
  %v324 = vunpack.c.l.b16 %v285
  %v325 = vunpack.c.l.b16 %v286
  %v326 = vunpack.c.l.b16 %v287
  %v327 = vunpack.c.l.b16 %v288
  %v328 = vunpack.c.l.b16 %v289
  %v329 = vunpack.c.l.b16 %v290
  %v330 = vunpack.c.l.b16 %v291
  %v331 = vunpack.c.l.b16 %v292
  %v332 = vunpack.c.l.b16 %v293
  %v333 = vunpack.c.l.b16 %v294
  %v334 = vunpack.c.l.b16 %v295
  %v335 = vpack.c.b16 %v320, %v319
  %v336 = vpack.c.b16 %v322, %v321
  %v337 = vpack.c.b16 %v324, %v323
  %v338 = vpack.c.b16 %v326, %v325
  %v339 = vpack.c.b16 %v328, %v327
  %v340 = vpack.c.b16 %v330, %v329
  %v341 = vpack.c.b16 %v332, %v331
  %v342 = vpack.c.b16 %v334, %v333
  %351 = vmatprep.subr.bf16.mxu0 0
  %352 = vmatpush1.bf16.msra.mxu0 %v335
  %353 = vmatprep.subr.bf16.mxu0 0
  %354 = vmatpush1.bf16.msra.mxu0 %v336
  %355 = vmatprep.subr.bf16.mxu0 0
  %356 = vmatpush1.bf16.msra.mxu0 %v337
  %357 = vmatprep.subr.bf16.mxu0 0
  %358 = vmatpush1.bf16.msra.mxu0 %v338
  %359 = vmatprep.subr.bf16.mxu0 0
  %360 = vmatpush1.bf16.msra.mxu0 %v339
  %361 = vmatprep.subr.bf16.mxu0 0
  %362 = vmatpush1.bf16.msra.mxu0 %v340
  %363 = vmatprep.subr.bf16.mxu0 0
  %364 = vmatpush1.bf16.msra.mxu0 %v341
  %365 = vmatprep.subr.bf16.mxu0 0
  %366 = vmatpush1.bf16.msra.mxu0 %v342
  %367 = vmatprep.subr.bf16.mxu0 0
  %368 = vmatpush1.bf16.msra.mxu0 0
  %369 = vmatprep.subr.bf16.mxu0 0
  %370 = vmatpush1.bf16.msra.mxu0 0
  %371 = vmatprep.subr.bf16.mxu0 0
  %372 = vmatpush1.bf16.msra.mxu0 0
  %373 = vmatprep.subr.bf16.mxu0 0
  %374 = vmatpush1.bf16.msra.mxu0 0
  %375 = vmatprep.subr.bf16.mxu0 0
  %376 = vmatpush1.bf16.msra.mxu0 0
  %377 = vmatprep.subr.bf16.mxu0 0
  %378 = vmatpush1.bf16.msra.mxu0 0
  %379 = vmatprep.subr.bf16.mxu0 0
  %380 = vmatpush1.bf16.msra.mxu0 0
  %381 = vmatprep.subr.bf16.mxu0 0
  %382 = vmatpush1.bf16.msra.mxu0 0
  %383 = vmatprep.mubr.bf16.mxu0 0
  %384 = vmatmul.mubr.bf16.gmra.mrb[0].mxu0 %v279
  %v385 = vpop.f32.mrb[0].mxu0
  %v386 = vadd.f32 %v301, %v385
  %v387 = vpop.f32.mrb[0].mxu0
  %v388 = vpop.f32.mrb[0].mxu0
  %v389 = vadd.f32 %v301, %v388
  %v390 = vpop.f32.mrb[0].mxu0
  %391 = vdwg.mxu0
  %v392 = vpack.c.bf16 %v389, %v386
  %v394 = vunpack.c.l.b16 %v392
  %v395 = vunpack.c.h.b16 %v392
  %v396 = vpack.c.b16 %v394, %v394
  %v397 = vpack.c.b16 %v395, %v395
  %400 = vst [vmem:[%s5] sm:$0xf] %v396
  %401 = vst [vmem:[%s5 + $0x4] sm:$0xf] %v397
  // Predicated region
  $region22: #{spatial_prior_module.13} parent=0 // pred_check
    _
  $region23: #{spatial_prior_module.13} parent=0 // pred_check_branch
    %403 = sbr.rel (0) target = $region25
  $region24: #{spatial_prior_module.13} parent=0 // pred_region
    _
  $region25: #{spatial_prior_module.13} parent=0 // pred_fallthru
    _
  // Predicated region
  $region26: #{spatial_prior_module.13} parent=0 // pred_check
    _
  $region27: #{spatial_prior_module.13} parent=0 // pred_check_branch
    %405 = sbr.rel (0) target = $region29
  $region28: #{spatial_prior_module.13} parent=0 // pred_region
    _
  $region29: #{spatial_prior_module.13} parent=0 // pred_fallthru
    _

</llo_original>
